<compile_context>
chip_gen: v7x
topology: tpu7x:2x2x1
jax: 0.10.0
libtpu: 0.0.40
codegen_flags: <defaults>
</compile_context>

<pallas_src>
import functools

import jax
import jax.numpy as jnp
from jax.experimental import pallas as pl
from jax.experimental.pallas import tpu as pltpu

KERNEL_SIZE = 5
STRIDE = 2
BN_EPS = 1e-5
NEG_SLOPE = 0.1
NUM_LAYERS = 4
C_PAD = 128            # lane-dense channel padding (one full vreg lane row)


def _layer_lengths(l_in0):
    """[(l_in, l_out)] for the 4 stride-2, k=5, no-padding conv layers."""
    dims = []
    l = l_in0
    for _ in range(NUM_LAYERS):
        l_out = (l - KERNEL_SIZE) // STRIDE + 1
        assert l_out >= 1, "input too short for 4 stride-2 k=5 convs"
        dims.append((l, l_out))
        l = l_out
    return tuple(dims)


# ---------------------------------------------------------------------------
# Fused Pallas kernel: 4 x (conv1d -> batch-stat BN -> LeakyReLU)
# ---------------------------------------------------------------------------
def _build_encoder_kernel(n_batch, dims):
    """Returns the kernel closed over static config (batch size, layer lengths)."""

    def kernel(x_ref, w_ref, p_ref, out_ref, *act_refs):
        # x_ref   : (n_batch*L0, C_PAD)          channels-last input, lane padded
        # w_ref   : (NUM_LAYERS*K*C_PAD, C_PAD)  per-layer, per-tap (C_in, C_out) weights
        # p_ref   : (NUM_LAYERS*2, C_PAD)        rows per layer: [gamma, beta]
        # out_ref : (n_batch*L_out_last, C_PAD)  last-layer output
        # act_refs: VMEM scratch for the 3 intermediate activations
        srcs = (x_ref,) + act_refs
        dsts = act_refs + (out_ref,)

        for li, (l_in, l_out) in enumerate(dims):
            src, dst = srcs[li], dsts[li]

            # --- Conv1d as K strided-slice matmuls (im2col stays in VMEM). ---
            # Output row t of tap k reads input row STRIDE*t + k, so each tap is
            # a static stride-2 slice feeding one MXU matmul.  Tap weights are
            # hoisted out of the batch loop (read once per layer per tap).
            zs = [None] * n_batch
            for k in range(KERNEL_SIZE):
                w0 = (li * KERNEL_SIZE + k) * C_PAD
                w_k = w_ref[w0:w0 + C_PAD, :]                        # (C_PAD, C_PAD)
                for n in range(n_batch):
                    a_k = src[pl.ds(n * l_in + k, l_out, stride=STRIDE), :]  # (l_out, C_PAD)
                    t = jnp.dot(a_k, w_k, preferred_element_type=jnp.float32)
                    zs[n] = t if zs[n] is None else zs[n] + t

            # --- BatchNorm (training-mode batch stats) folded to scale/shift. ---
            # One-pass statistics over all n_batch*l_out rows (global stats,
            # matching PyTorch): mean = E[z], var = E[z^2] - E[z]^2 (biased).
            # The conv bias cancels exactly against the batch mean, so it is
            # omitted from the kernel math.
            inv_cnt = 1.0 / float(n_batch * l_out)
            s1 = zs[0].sum(axis=0, keepdims=True)
            s2 = (zs[0] * zs[0]).sum(axis=0, keepdims=True)
            for z in zs[1:]:
                s1 = s1 + z.sum(axis=0, keepdims=True)
                s2 = s2 + (z * z).sum(axis=0, keepdims=True)
            mean = s1 * inv_cnt                                      # (1, C_PAD)
            var = s2 * inv_cnt - mean * mean                         # biased variance

            gamma = p_ref[2 * li + 0:2 * li + 1, :]                  # (1, C_PAD)
            beta = p_ref[2 * li + 1:2 * li + 2, :]
            scale = gamma * jax.lax.rsqrt(var + BN_EPS)
            shift = beta - mean * scale                              # y = z*scale + shift

            # --- normalize + LeakyReLU in one pass, store for next layer. ---
            for n in range(n_batch):
                y = zs[n] * scale + shift
                y = jnp.where(y >= 0.0, y, NEG_SLOPE * y)
                dst[n * l_out:(n + 1) * l_out, :] = y

    return kernel


# ---------------------------------------------------------------------------
# Parameter construction / packing (PyTorch-shaped params -> kernel layout)
# ---------------------------------------------------------------------------
def init_encoder_params(key, base_channel, in_channel=1):
    """Deterministic synthetic parameters with nn.Conv1d / nn.BatchNorm1d shapes."""
    chans = [in_channel, base_channel, base_channel * 2,
             base_channel * 4, base_channel * 8]
    params = []
    for i in range(NUM_LAYERS):
        c_in, c_out = chans[i], chans[i + 1]
        key, kw, kb = jax.random.split(key, 3)
        fan_in = c_in * KERNEL_SIZE
        bound = 1.0 / float(fan_in) ** 0.5
        w = jax.random.uniform(kw, (c_out, c_in, KERNEL_SIZE), jnp.float32,
                               -bound, bound)             # PyTorch (C_out, C_in, K)
        b = jax.random.uniform(kb, (c_out,), jnp.float32, -bound, bound)
        params.append({"w": w, "b": b,
                       "gamma": jnp.ones((c_out,), jnp.float32),   # BN default init
                       "beta": jnp.zeros((c_out,), jnp.float32)})
    return params


def pack_encoder_params(params):
    """Pack all layers' conv/BN params into the kernel's lane-dense layout.

    The conv bias is intentionally NOT packed: under training-mode BatchNorm it
    cancels against the batch mean and has zero effect on the forward output.
    """
    assert len(params) == NUM_LAYERS
    w_blocks, p_rows = [], []
    for p in params:
        w = p["w"]                                        # (C_out, C_in, K)
        c_out, c_in, k = w.shape
        assert k == KERNEL_SIZE and c_in <= C_PAD and c_out <= C_PAD
        for kk in range(KERNEL_SIZE):
            wk = jnp.zeros((C_PAD, C_PAD), jnp.float32)
            wk = wk.at[:c_in, :c_out].set(jnp.transpose(w[:, :, kk]))  # (C_in, C_out)
            w_blocks.append(wk)
        for name in ("gamma", "beta"):                    # zero-padded -> padded lanes
            p_rows.append(jnp.zeros((C_PAD,), jnp.float32).at[:c_out].set(p[name]))
    w_packed = jnp.concatenate(w_blocks, axis=0)          # (NUM_LAYERS*K*C_PAD, C_PAD)
    p_packed = jnp.stack(p_rows, axis=0)                  # (NUM_LAYERS*2, C_PAD)
    return w_packed, p_packed


# ---------------------------------------------------------------------------
# Public forward: (N, C_in, L) NCL -> (N, C_out_last, L_out_last)
# ---------------------------------------------------------------------------
@functools.partial(jax.jit, static_argnames=("c_out_last",))
def encoder_forward(x_ncl, w_packed, p_packed, *, c_out_last):
    n, c_in, l0 = x_ncl.shape
    dims = _layer_lengths(l0)
    l_last = dims[-1][1]

    # channels-last, lane-padded to 128, flattened over (N, L)
    x = jnp.transpose(x_ncl, (0, 2, 1)).astype(jnp.float32)      # (N, L, C_in)
    x = jnp.pad(x, ((0, 0), (0, 0), (0, C_PAD - c_in)))
    x2d = x.reshape(n * l0, C_PAD)

    kernel = _build_encoder_kernel(n, dims)
    out2d = pl.pallas_call(
        kernel,
        out_shape=jax.ShapeDtypeStruct((n * l_last, C_PAD), jnp.float32),
        in_specs=[pl.BlockSpec(memory_space=pltpu.MemorySpace.VMEM)] * 3,
        out_specs=pl.BlockSpec(memory_space=pltpu.MemorySpace.VMEM),
        scratch_shapes=[pltpu.VMEM((n * lo, C_PAD), jnp.float32)
                        for (_, lo) in dims[:-1]],
        compiler_params=pltpu.CompilerParams(vmem_limit_bytes=32 * 1024 * 1024),
    )(x2d, w_packed, p_packed)

    out = out2d.reshape(n, l_last, C_PAD)[:, :, :c_out_last]     # drop lane padding
    return jnp.transpose(out, (0, 2, 1))                          # back to NCL


# ---------------------------------------------------------------------------
# Pure-JAX reference (training-mode BN, conv bias included), used for a
# correctness sanity check of the fused kernel (and of the bias cancellation).
# ---------------------------------------------------------------------------
def _reference_forward(x_ncl, params):
    x = x_ncl.astype(jnp.float32)
    for p in params:
        y = jax.lax.conv_general_dilated(
            x, p["w"], window_strides=(STRIDE,), padding="VALID",
            dimension_numbers=("NCH", "OIH", "NCH"),
            precision=jax.lax.Precision.HIGHEST)
        y = y + p["b"][None, :, None]
        mean = jnp.mean(y, axis=(0, 2), keepdims=True)
        var = jnp.mean(jnp.square(y - mean), axis=(0, 2), keepdims=True)
        y = (y - mean) * jax.lax.rsqrt(var + BN_EPS)
        y = y * p["gamma"][None, :, None] + p["beta"][None, :, None]
        x = jnp.where(y >= 0.0, y, NEG_SLOPE * y)
    return x


if __name__ == "__main__":
    key = jax.random.PRNGKey(0)
    k_params, k_x = jax.random.split(key)

    base_channel = 4
    in_channel = 1
    N, L = 2, 100                                                 # 100 -> 48 -> 22 -> 9 -> 3

    params = init_encoder_params(k_params, base_channel, in_channel)
    w_packed, p_packed = pack_encoder_params(params)
    x = jax.random.normal(k_x, (N, in_channel, L), jnp.float32)

    out = encoder_forward(x, w_packed, p_packed, c_out_last=base_channel * 8)
    out = jax.block_until_ready(out)

    expected_shape = (N, base_channel * 8, 3)
    assert out.shape == expected_shape, (out.shape, expected_shape)
    assert bool(jnp.all(jnp.isfinite(out)))

    ref = _reference_forward(x, params)
    assert bool(jnp.allclose(out, ref, rtol=5e-2, atol=2e-2)), \
        float(jnp.max(jnp.abs(out - ref)))

    print("KERNEL_OK")
</pallas_src>

<mosaic_0001>
module attributes {stable_mosaic.version = 11 : i64} {
  func.func @kernel(%arg0: memref<200x128xf32, #tpu.memory_space<vmem>>, %arg1: memref<2560x128xf32, #tpu.memory_space<vmem>>, %arg2: memref<8x128xf32, #tpu.memory_space<vmem>>, %arg3: memref<6x128xf32, #tpu.memory_space<vmem>>, %arg4: memref<96x128xf32, #tpu.memory_space<vmem>>, %arg5: memref<44x128xf32, #tpu.memory_space<vmem>>, %arg6: memref<18x128xf32, #tpu.memory_space<vmem>>) attributes {dimension_semantics = [], scalar_prefetch = 0 : i64, scratch_operands = 3 : i64, tpu.core_type = #tpu.core_type<tc>} {
    %c0 = arith.constant 0 : index
    %c0_0 = arith.constant 0 : index
    %0 = vector.load %arg1[%c0, %c0_0] : memref<2560x128xf32, #tpu.memory_space<vmem>>, vector<128x128xf32>
    %c0_1 = arith.constant 0 : index
    %c0_2 = arith.constant 0 : index
    %1 = tpu.strided_load %arg0[%c0_1, %c0_2] {strides = array<i32: 2, 1>} : memref<200x128xf32, #tpu.memory_space<vmem>>, vector<48x128xf32>
    %cst = arith.constant dense<0.000000e+00> : vector<48x128xf32>
    %2 = tpu.matmul %1, %0, %cst {dimension_numbers = #tpu.dot_dimension_numbers<[1], [0], [0], [1], [0, 0, 1, 1], [], []>} : vector<48x128xf32>, vector<128x128xf32>, vector<48x128xf32> -> vector<48x128xf32>
    %c100 = arith.constant 100 : index
    %c0_3 = arith.constant 0 : index
    %3 = tpu.strided_load %arg0[%c100, %c0_3] {strides = array<i32: 2, 1>} : memref<200x128xf32, #tpu.memory_space<vmem>>, vector<48x128xf32>
    %cst_4 = arith.constant dense<0.000000e+00> : vector<48x128xf32>
    %4 = tpu.matmul %3, %0, %cst_4 {dimension_numbers = #tpu.dot_dimension_numbers<[1], [0], [0], [1], [0, 0, 1, 1], [], []>} : vector<48x128xf32>, vector<128x128xf32>, vector<48x128xf32> -> vector<48x128xf32>
    %c128 = arith.constant 128 : index
    %c0_5 = arith.constant 0 : index
    %5 = vector.load %arg1[%c128, %c0_5] : memref<2560x128xf32, #tpu.memory_space<vmem>>, vector<128x128xf32>
    %c1 = arith.constant 1 : index
    %c0_6 = arith.constant 0 : index
    %6 = tpu.strided_load %arg0[%c1, %c0_6] {strides = array<i32: 2, 1>} : memref<200x128xf32, #tpu.memory_space<vmem>>, vector<48x128xf32>
    %cst_7 = arith.constant dense<0.000000e+00> : vector<48x128xf32>
    %7 = tpu.matmul %6, %5, %cst_7 {dimension_numbers = #tpu.dot_dimension_numbers<[1], [0], [0], [1], [0, 0, 1, 1], [], []>} : vector<48x128xf32>, vector<128x128xf32>, vector<48x128xf32> -> vector<48x128xf32>
    %8 = arith.addf %2, %7 : vector<48x128xf32>
    %c101 = arith.constant 101 : index
    %c0_8 = arith.constant 0 : index
    %9 = tpu.strided_load %arg0[%c101, %c0_8] {strides = array<i32: 2, 1>} : memref<200x128xf32, #tpu.memory_space<vmem>>, vector<48x128xf32>
    %cst_9 = arith.constant dense<0.000000e+00> : vector<48x128xf32>
    %10 = tpu.matmul %9, %5, %cst_9 {dimension_numbers = #tpu.dot_dimension_numbers<[1], [0], [0], [1], [0, 0, 1, 1], [], []>} : vector<48x128xf32>, vector<128x128xf32>, vector<48x128xf32> -> vector<48x128xf32>
    %11 = arith.addf %4, %10 : vector<48x128xf32>
    %c256 = arith.constant 256 : index
    %c0_10 = arith.constant 0 : index
    %12 = vector.load %arg1[%c256, %c0_10] : memref<2560x128xf32, #tpu.memory_space<vmem>>, vector<128x128xf32>
    %c2 = arith.constant 2 : index
    %c0_11 = arith.constant 0 : index
    %13 = tpu.strided_load %arg0[%c2, %c0_11] {strides = array<i32: 2, 1>} : memref<200x128xf32, #tpu.memory_space<vmem>>, vector<48x128xf32>
    %cst_12 = arith.constant dense<0.000000e+00> : vector<48x128xf32>
    %14 = tpu.matmul %13, %12, %cst_12 {dimension_numbers = #tpu.dot_dimension_numbers<[1], [0], [0], [1], [0, 0, 1, 1], [], []>} : vector<48x128xf32>, vector<128x128xf32>, vector<48x128xf32> -> vector<48x128xf32>
    %15 = arith.addf %8, %14 : vector<48x128xf32>
    %c102 = arith.constant 102 : index
    %c0_13 = arith.constant 0 : index
    %16 = tpu.strided_load %arg0[%c102, %c0_13] {strides = array<i32: 2, 1>} : memref<200x128xf32, #tpu.memory_space<vmem>>, vector<48x128xf32>
    %cst_14 = arith.constant dense<0.000000e+00> : vector<48x128xf32>
    %17 = tpu.matmul %16, %12, %cst_14 {dimension_numbers = #tpu.dot_dimension_numbers<[1], [0], [0], [1], [0, 0, 1, 1], [], []>} : vector<48x128xf32>, vector<128x128xf32>, vector<48x128xf32> -> vector<48x128xf32>
    %18 = arith.addf %11, %17 : vector<48x128xf32>
    %c384 = arith.constant 384 : index
    %c0_15 = arith.constant 0 : index
    %19 = vector.load %arg1[%c384, %c0_15] : memref<2560x128xf32, #tpu.memory_space<vmem>>, vector<128x128xf32>
    %c3 = arith.constant 3 : index
    %c0_16 = arith.constant 0 : index
    %20 = tpu.strided_load %arg0[%c3, %c0_16] {strides = array<i32: 2, 1>} : memref<200x128xf32, #tpu.memory_space<vmem>>, vector<48x128xf32>
    %cst_17 = arith.constant dense<0.000000e+00> : vector<48x128xf32>
    %21 = tpu.matmul %20, %19, %cst_17 {dimension_numbers = #tpu.dot_dimension_numbers<[1], [0], [0], [1], [0, 0, 1, 1], [], []>} : vector<48x128xf32>, vector<128x128xf32>, vector<48x128xf32> -> vector<48x128xf32>
    %22 = arith.addf %15, %21 : vector<48x128xf32>
    %c103 = arith.constant 103 : index
    %c0_18 = arith.constant 0 : index
    %23 = tpu.strided_load %arg0[%c103, %c0_18] {strides = array<i32: 2, 1>} : memref<200x128xf32, #tpu.memory_space<vmem>>, vector<48x128xf32>
    %cst_19 = arith.constant dense<0.000000e+00> : vector<48x128xf32>
    %24 = tpu.matmul %23, %19, %cst_19 {dimension_numbers = #tpu.dot_dimension_numbers<[1], [0], [0], [1], [0, 0, 1, 1], [], []>} : vector<48x128xf32>, vector<128x128xf32>, vector<48x128xf32> -> vector<48x128xf32>
    %25 = arith.addf %18, %24 : vector<48x128xf32>
    %c512 = arith.constant 512 : index
    %c0_20 = arith.constant 0 : index
    %26 = vector.load %arg1[%c512, %c0_20] : memref<2560x128xf32, #tpu.memory_space<vmem>>, vector<128x128xf32>
    %c4 = arith.constant 4 : index
    %c0_21 = arith.constant 0 : index
    %27 = tpu.strided_load %arg0[%c4, %c0_21] {strides = array<i32: 2, 1>} : memref<200x128xf32, #tpu.memory_space<vmem>>, vector<48x128xf32>
    %cst_22 = arith.constant dense<0.000000e+00> : vector<48x128xf32>
    %28 = tpu.matmul %27, %26, %cst_22 {dimension_numbers = #tpu.dot_dimension_numbers<[1], [0], [0], [1], [0, 0, 1, 1], [], []>} : vector<48x128xf32>, vector<128x128xf32>, vector<48x128xf32> -> vector<48x128xf32>
    %29 = arith.addf %22, %28 : vector<48x128xf32>
    %c104 = arith.constant 104 : index
    %c0_23 = arith.constant 0 : index
    %30 = tpu.strided_load %arg0[%c104, %c0_23] {strides = array<i32: 2, 1>} : memref<200x128xf32, #tpu.memory_space<vmem>>, vector<48x128xf32>
    %cst_24 = arith.constant dense<0.000000e+00> : vector<48x128xf32>
    %31 = tpu.matmul %30, %26, %cst_24 {dimension_numbers = #tpu.dot_dimension_numbers<[1], [0], [0], [1], [0, 0, 1, 1], [], []>} : vector<48x128xf32>, vector<128x128xf32>, vector<48x128xf32> -> vector<48x128xf32>
    %32 = arith.addf %25, %31 : vector<48x128xf32>
    %cst_25 = arith.constant dense<0.000000e+00> : vector<128xf32>
    %33 = vector.multi_reduction <add>, %29, %cst_25 [0] : vector<48x128xf32> to vector<128xf32>
    %34 = vector.shape_cast %33 : vector<128xf32> to vector<1x128xf32>
    %35 = arith.mulf %29, %29 : vector<48x128xf32>
    %cst_26 = arith.constant dense<0.000000e+00> : vector<128xf32>
    %36 = vector.multi_reduction <add>, %35, %cst_26 [0] : vector<48x128xf32> to vector<128xf32>
    %37 = vector.shape_cast %36 : vector<128xf32> to vector<1x128xf32>
    %cst_27 = arith.constant dense<0.000000e+00> : vector<128xf32>
    %38 = vector.multi_reduction <add>, %32, %cst_27 [0] : vector<48x128xf32> to vector<128xf32>
    %39 = vector.shape_cast %38 : vector<128xf32> to vector<1x128xf32>
    %40 = arith.addf %34, %39 : vector<1x128xf32>
    %41 = arith.mulf %32, %32 : vector<48x128xf32>
    %cst_28 = arith.constant dense<0.000000e+00> : vector<128xf32>
    %42 = vector.multi_reduction <add>, %41, %cst_28 [0] : vector<48x128xf32> to vector<128xf32>
    %43 = vector.shape_cast %42 : vector<128xf32> to vector<1x128xf32>
    %44 = arith.addf %37, %43 : vector<1x128xf32>
    %cst_29 = arith.constant 0.010416667 : f32
    %45 = vector.broadcast %cst_29 : f32 to vector<1x128xf32>
    %46 = arith.mulf %40, %45 : vector<1x128xf32>
    %cst_30 = arith.constant 0.010416667 : f32
    %47 = vector.broadcast %cst_30 : f32 to vector<1x128xf32>
    %48 = arith.mulf %44, %47 : vector<1x128xf32>
    %49 = arith.mulf %46, %46 : vector<1x128xf32>
    %50 = arith.subf %48, %49 : vector<1x128xf32>
    %c0_31 = arith.constant 0 : index
    %c0_32 = arith.constant 0 : index
    %51 = vector.load %arg2[%c0_31, %c0_32] : memref<8x128xf32, #tpu.memory_space<vmem>>, vector<1x128xf32>
    %c1_33 = arith.constant 1 : index
    %c0_34 = arith.constant 0 : index
    %52 = vector.load %arg2[%c1_33, %c0_34] : memref<8x128xf32, #tpu.memory_space<vmem>>, vector<1x128xf32>
    %cst_35 = arith.constant 9.99999974E-6 : f32
    %53 = vector.broadcast %cst_35 : f32 to vector<1x128xf32>
    %54 = arith.addf %50, %53 : vector<1x128xf32>
    %55 = math.rsqrt %54 : vector<1x128xf32>
    %56 = arith.mulf %51, %55 : vector<1x128xf32>
    %57 = arith.mulf %46, %56 : vector<1x128xf32>
    %58 = arith.subf %52, %57 : vector<1x128xf32>
    %59 = vector.broadcast %56 : vector<1x128xf32> to vector<48x128xf32>
    %60 = arith.mulf %29, %59 : vector<48x128xf32>
    %61 = vector.broadcast %58 : vector<1x128xf32> to vector<48x128xf32>
    %62 = arith.addf %60, %61 : vector<48x128xf32>
    %cst_36 = arith.constant 0.000000e+00 : f32
    %63 = vector.broadcast %cst_36 : f32 to vector<48x128xf32>
    %64 = arith.cmpf oge, %62, %63 : vector<48x128xf32>
    %cst_37 = arith.constant 1.000000e-01 : f32
    %65 = vector.broadcast %cst_37 : f32 to vector<48x128xf32>
    %66 = arith.mulf %65, %62 : vector<48x128xf32>
    %67 = arith.select %64, %62, %66 : vector<48x128xi1>, vector<48x128xf32>
    %c0_38 = arith.constant 0 : index
    %c0_39 = arith.constant 0 : index
    %68 = vector.load %arg4[%c0_38, %c0_39] : memref<96x128xf32, #tpu.memory_space<vmem>>, vector<48x128xf32>
    tpu.vector_store %arg4[%c0_38, %c0_39], %67 {strides = array<i32>} : memref<96x128xf32, #tpu.memory_space<vmem>>, vector<48x128xf32>,
    %69 = vector.broadcast %56 : vector<1x128xf32> to vector<48x128xf32>
    %70 = arith.mulf %32, %69 : vector<48x128xf32>
    %71 = vector.broadcast %58 : vector<1x128xf32> to vector<48x128xf32>
    %72 = arith.addf %70, %71 : vector<48x128xf32>
    %cst_40 = arith.constant 0.000000e+00 : f32
    %73 = vector.broadcast %cst_40 : f32 to vector<48x128xf32>
    %74 = arith.cmpf oge, %72, %73 : vector<48x128xf32>
    %cst_41 = arith.constant 1.000000e-01 : f32
    %75 = vector.broadcast %cst_41 : f32 to vector<48x128xf32>
    %76 = arith.mulf %75, %72 : vector<48x128xf32>
    %77 = arith.select %74, %72, %76 : vector<48x128xi1>, vector<48x128xf32>
    %c48 = arith.constant 48 : index
    %c0_42 = arith.constant 0 : index
    %78 = vector.load %arg4[%c48, %c0_42] : memref<96x128xf32, #tpu.memory_space<vmem>>, vector<48x128xf32>
    tpu.vector_store %arg4[%c48, %c0_42], %77 {strides = array<i32>} : memref<96x128xf32, #tpu.memory_space<vmem>>, vector<48x128xf32>,
    %c640 = arith.constant 640 : index
    %c0_43 = arith.constant 0 : index
    %79 = vector.load %arg1[%c640, %c0_43] : memref<2560x128xf32, #tpu.memory_space<vmem>>, vector<128x128xf32>
    %c0_44 = arith.constant 0 : index
    %c0_45 = arith.constant 0 : index
    %80 = tpu.strided_load %arg4[%c0_44, %c0_45] {strides = array<i32: 2, 1>} : memref<96x128xf32, #tpu.memory_space<vmem>>, vector<22x128xf32>
    %cst_46 = arith.constant dense<0.000000e+00> : vector<22x128xf32>
    %81 = tpu.matmul %80, %79, %cst_46 {dimension_numbers = #tpu.dot_dimension_numbers<[1], [0], [0], [1], [0, 0, 1, 1], [], []>} : vector<22x128xf32>, vector<128x128xf32>, vector<22x128xf32> -> vector<22x128xf32>
    %c48_47 = arith.constant 48 : index
    %c0_48 = arith.constant 0 : index
    %82 = tpu.strided_load %arg4[%c48_47, %c0_48] {strides = array<i32: 2, 1>} : memref<96x128xf32, #tpu.memory_space<vmem>>, vector<22x128xf32>
    %cst_49 = arith.constant dense<0.000000e+00> : vector<22x128xf32>
    %83 = tpu.matmul %82, %79, %cst_49 {dimension_numbers = #tpu.dot_dimension_numbers<[1], [0], [0], [1], [0, 0, 1, 1], [], []>} : vector<22x128xf32>, vector<128x128xf32>, vector<22x128xf32> -> vector<22x128xf32>
    %c768 = arith.constant 768 : index
    %c0_50 = arith.constant 0 : index
    %84 = vector.load %arg1[%c768, %c0_50] : memref<2560x128xf32, #tpu.memory_space<vmem>>, vector<128x128xf32>
    %c1_51 = arith.constant 1 : index
    %c0_52 = arith.constant 0 : index
    %85 = tpu.strided_load %arg4[%c1_51, %c0_52] {strides = array<i32: 2, 1>} : memref<96x128xf32, #tpu.memory_space<vmem>>, vector<22x128xf32>
    %cst_53 = arith.constant dense<0.000000e+00> : vector<22x128xf32>
    %86 = tpu.matmul %85, %84, %cst_53 {dimension_numbers = #tpu.dot_dimension_numbers<[1], [0], [0], [1], [0, 0, 1, 1], [], []>} : vector<22x128xf32>, vector<128x128xf32>, vector<22x128xf32> -> vector<22x128xf32>
    %87 = arith.addf %81, %86 : vector<22x128xf32>
    %c49 = arith.constant 49 : index
    %c0_54 = arith.constant 0 : index
    %88 = tpu.strided_load %arg4[%c49, %c0_54] {strides = array<i32: 2, 1>} : memref<96x128xf32, #tpu.memory_space<vmem>>, vector<22x128xf32>
    %cst_55 = arith.constant dense<0.000000e+00> : vector<22x128xf32>
    %89 = tpu.matmul %88, %84, %cst_55 {dimension_numbers = #tpu.dot_dimension_numbers<[1], [0], [0], [1], [0, 0, 1, 1], [], []>} : vector<22x128xf32>, vector<128x128xf32>, vector<22x128xf32> -> vector<22x128xf32>
    %90 = arith.addf %83, %89 : vector<22x128xf32>
    %c896 = arith.constant 896 : index
    %c0_56 = arith.constant 0 : index
    %91 = vector.load %arg1[%c896, %c0_56] : memref<2560x128xf32, #tpu.memory_space<vmem>>, vector<128x128xf32>
    %c2_57 = arith.constant 2 : index
    %c0_58 = arith.constant 0 : index
    %92 = tpu.strided_load %arg4[%c2_57, %c0_58] {strides = array<i32: 2, 1>} : memref<96x128xf32, #tpu.memory_space<vmem>>, vector<22x128xf32>
    %cst_59 = arith.constant dense<0.000000e+00> : vector<22x128xf32>
    %93 = tpu.matmul %92, %91, %cst_59 {dimension_numbers = #tpu.dot_dimension_numbers<[1], [0], [0], [1], [0, 0, 1, 1], [], []>} : vector<22x128xf32>, vector<128x128xf32>, vector<22x128xf32> -> vector<22x128xf32>
    %94 = arith.addf %87, %93 : vector<22x128xf32>
    %c50 = arith.constant 50 : index
    %c0_60 = arith.constant 0 : index
    %95 = tpu.strided_load %arg4[%c50, %c0_60] {strides = array<i32: 2, 1>} : memref<96x128xf32, #tpu.memory_space<vmem>>, vector<22x128xf32>
    %cst_61 = arith.constant dense<0.000000e+00> : vector<22x128xf32>
    %96 = tpu.matmul %95, %91, %cst_61 {dimension_numbers = #tpu.dot_dimension_numbers<[1], [0], [0], [1], [0, 0, 1, 1], [], []>} : vector<22x128xf32>, vector<128x128xf32>, vector<22x128xf32> -> vector<22x128xf32>
    %97 = arith.addf %90, %96 : vector<22x128xf32>
    %c1024 = arith.constant 1024 : index
    %c0_62 = arith.constant 0 : index
    %98 = vector.load %arg1[%c1024, %c0_62] : memref<2560x128xf32, #tpu.memory_space<vmem>>, vector<128x128xf32>
    %c3_63 = arith.constant 3 : index
    %c0_64 = arith.constant 0 : index
    %99 = tpu.strided_load %arg4[%c3_63, %c0_64] {strides = array<i32: 2, 1>} : memref<96x128xf32, #tpu.memory_space<vmem>>, vector<22x128xf32>
    %cst_65 = arith.constant dense<0.000000e+00> : vector<22x128xf32>
    %100 = tpu.matmul %99, %98, %cst_65 {dimension_numbers = #tpu.dot_dimension_numbers<[1], [0], [0], [1], [0, 0, 1, 1], [], []>} : vector<22x128xf32>, vector<128x128xf32>, vector<22x128xf32> -> vector<22x128xf32>
    %101 = arith.addf %94, %100 : vector<22x128xf32>
    %c51 = arith.constant 51 : index
    %c0_66 = arith.constant 0 : index
    %102 = tpu.strided_load %arg4[%c51, %c0_66] {strides = array<i32: 2, 1>} : memref<96x128xf32, #tpu.memory_space<vmem>>, vector<22x128xf32>
    %cst_67 = arith.constant dense<0.000000e+00> : vector<22x128xf32>
    %103 = tpu.matmul %102, %98, %cst_67 {dimension_numbers = #tpu.dot_dimension_numbers<[1], [0], [0], [1], [0, 0, 1, 1], [], []>} : vector<22x128xf32>, vector<128x128xf32>, vector<22x128xf32> -> vector<22x128xf32>
    %104 = arith.addf %97, %103 : vector<22x128xf32>
    %c1152 = arith.constant 1152 : index
    %c0_68 = arith.constant 0 : index
    %105 = vector.load %arg1[%c1152, %c0_68] : memref<2560x128xf32, #tpu.memory_space<vmem>>, vector<128x128xf32>
    %c4_69 = arith.constant 4 : index
    %c0_70 = arith.constant 0 : index
    %106 = tpu.strided_load %arg4[%c4_69, %c0_70] {strides = array<i32: 2, 1>} : memref<96x128xf32, #tpu.memory_space<vmem>>, vector<22x128xf32>
    %cst_71 = arith.constant dense<0.000000e+00> : vector<22x128xf32>
    %107 = tpu.matmul %106, %105, %cst_71 {dimension_numbers = #tpu.dot_dimension_numbers<[1], [0], [0], [1], [0, 0, 1, 1], [], []>} : vector<22x128xf32>, vector<128x128xf32>, vector<22x128xf32> -> vector<22x128xf32>
    %108 = arith.addf %101, %107 : vector<22x128xf32>
    %c52 = arith.constant 52 : index
    %c0_72 = arith.constant 0 : index
    %109 = tpu.strided_load %arg4[%c52, %c0_72] {strides = array<i32: 2, 1>} : memref<96x128xf32, #tpu.memory_space<vmem>>, vector<22x128xf32>
    %cst_73 = arith.constant dense<0.000000e+00> : vector<22x128xf32>
    %110 = tpu.matmul %109, %105, %cst_73 {dimension_numbers = #tpu.dot_dimension_numbers<[1], [0], [0], [1], [0, 0, 1, 1], [], []>} : vector<22x128xf32>, vector<128x128xf32>, vector<22x128xf32> -> vector<22x128xf32>
    %111 = arith.addf %104, %110 : vector<22x128xf32>
    %cst_74 = arith.constant dense<0.000000e+00> : vector<128xf32>
    %112 = vector.multi_reduction <add>, %108, %cst_74 [0] : vector<22x128xf32> to vector<128xf32>
    %113 = vector.shape_cast %112 : vector<128xf32> to vector<1x128xf32>
    %114 = arith.mulf %108, %108 : vector<22x128xf32>
    %cst_75 = arith.constant dense<0.000000e+00> : vector<128xf32>
    %115 = vector.multi_reduction <add>, %114, %cst_75 [0] : vector<22x128xf32> to vector<128xf32>
    %116 = vector.shape_cast %115 : vector<128xf32> to vector<1x128xf32>
    %cst_76 = arith.constant dense<0.000000e+00> : vector<128xf32>
    %117 = vector.multi_reduction <add>, %111, %cst_76 [0] : vector<22x128xf32> to vector<128xf32>
    %118 = vector.shape_cast %117 : vector<128xf32> to vector<1x128xf32>
    %119 = arith.addf %113, %118 : vector<1x128xf32>
    %120 = arith.mulf %111, %111 : vector<22x128xf32>
    %cst_77 = arith.constant dense<0.000000e+00> : vector<128xf32>
    %121 = vector.multi_reduction <add>, %120, %cst_77 [0] : vector<22x128xf32> to vector<128xf32>
    %122 = vector.shape_cast %121 : vector<128xf32> to vector<1x128xf32>
    %123 = arith.addf %116, %122 : vector<1x128xf32>
    %cst_78 = arith.constant 0.0227272734 : f32
    %124 = vector.broadcast %cst_78 : f32 to vector<1x128xf32>
    %125 = arith.mulf %119, %124 : vector<1x128xf32>
    %cst_79 = arith.constant 0.0227272734 : f32
    %126 = vector.broadcast %cst_79 : f32 to vector<1x128xf32>
    %127 = arith.mulf %123, %126 : vector<1x128xf32>
    %128 = arith.mulf %125, %125 : vector<1x128xf32>
    %129 = arith.subf %127, %128 : vector<1x128xf32>
    %c2_80 = arith.constant 2 : index
    %c0_81 = arith.constant 0 : index
    %130 = vector.load %arg2[%c2_80, %c0_81] : memref<8x128xf32, #tpu.memory_space<vmem>>, vector<1x128xf32>
    %c3_82 = arith.constant 3 : index
    %c0_83 = arith.constant 0 : index
    %131 = vector.load %arg2[%c3_82, %c0_83] : memref<8x128xf32, #tpu.memory_space<vmem>>, vector<1x128xf32>
    %cst_84 = arith.constant 9.99999974E-6 : f32
    %132 = vector.broadcast %cst_84 : f32 to vector<1x128xf32>
    %133 = arith.addf %129, %132 : vector<1x128xf32>
    %134 = math.rsqrt %133 : vector<1x128xf32>
    %135 = arith.mulf %130, %134 : vector<1x128xf32>
    %136 = arith.mulf %125, %135 : vector<1x128xf32>
    %137 = arith.subf %131, %136 : vector<1x128xf32>
    %138 = vector.broadcast %135 : vector<1x128xf32> to vector<22x128xf32>
    %139 = arith.mulf %108, %138 : vector<22x128xf32>
    %140 = vector.broadcast %137 : vector<1x128xf32> to vector<22x128xf32>
    %141 = arith.addf %139, %140 : vector<22x128xf32>
    %cst_85 = arith.constant 0.000000e+00 : f32
    %142 = vector.broadcast %cst_85 : f32 to vector<22x128xf32>
    %143 = arith.cmpf oge, %141, %142 : vector<22x128xf32>
    %cst_86 = arith.constant 1.000000e-01 : f32
    %144 = vector.broadcast %cst_86 : f32 to vector<22x128xf32>
    %145 = arith.mulf %144, %141 : vector<22x128xf32>
    %146 = arith.select %143, %141, %145 : vector<22x128xi1>, vector<22x128xf32>
    %c0_87 = arith.constant 0 : index
    %c0_88 = arith.constant 0 : index
    %147 = vector.load %arg5[%c0_87, %c0_88] : memref<44x128xf32, #tpu.memory_space<vmem>>, vector<22x128xf32>
    tpu.vector_store %arg5[%c0_87, %c0_88], %146 {strides = array<i32>} : memref<44x128xf32, #tpu.memory_space<vmem>>, vector<22x128xf32>,
    %148 = vector.broadcast %135 : vector<1x128xf32> to vector<22x128xf32>
    %149 = arith.mulf %111, %148 : vector<22x128xf32>
    %150 = vector.broadcast %137 : vector<1x128xf32> to vector<22x128xf32>
    %151 = arith.addf %149, %150 : vector<22x128xf32>
    %cst_89 = arith.constant 0.000000e+00 : f32
    %152 = vector.broadcast %cst_89 : f32 to vector<22x128xf32>
    %153 = arith.cmpf oge, %151, %152 : vector<22x128xf32>
    %cst_90 = arith.constant 1.000000e-01 : f32
    %154 = vector.broadcast %cst_90 : f32 to vector<22x128xf32>
    %155 = arith.mulf %154, %151 : vector<22x128xf32>
    %156 = arith.select %153, %151, %155 : vector<22x128xi1>, vector<22x128xf32>
    %c22 = arith.constant 22 : index
    %c0_91 = arith.constant 0 : index
    %157 = vector.load %arg5[%c22, %c0_91] : memref<44x128xf32, #tpu.memory_space<vmem>>, vector<22x128xf32>
    tpu.vector_store %arg5[%c22, %c0_91], %156 {strides = array<i32>} : memref<44x128xf32, #tpu.memory_space<vmem>>, vector<22x128xf32>,
    %c1280 = arith.constant 1280 : index
    %c0_92 = arith.constant 0 : index
    %158 = vector.load %arg1[%c1280, %c0_92] : memref<2560x128xf32, #tpu.memory_space<vmem>>, vector<128x128xf32>
    %c0_93 = arith.constant 0 : index
    %c0_94 = arith.constant 0 : index
    %159 = tpu.strided_load %arg5[%c0_93, %c0_94] {strides = array<i32: 2, 1>} : memref<44x128xf32, #tpu.memory_space<vmem>>, vector<9x128xf32>
    %cst_95 = arith.constant dense<0.000000e+00> : vector<9x128xf32>
    %160 = tpu.matmul %159, %158, %cst_95 {dimension_numbers = #tpu.dot_dimension_numbers<[1], [0], [0], [1], [0, 0, 1, 1], [], []>} : vector<9x128xf32>, vector<128x128xf32>, vector<9x128xf32> -> vector<9x128xf32>
    %c22_96 = arith.constant 22 : index
    %c0_97 = arith.constant 0 : index
    %161 = tpu.strided_load %arg5[%c22_96, %c0_97] {strides = array<i32: 2, 1>} : memref<44x128xf32, #tpu.memory_space<vmem>>, vector<9x128xf32>
    %cst_98 = arith.constant dense<0.000000e+00> : vector<9x128xf32>
    %162 = tpu.matmul %161, %158, %cst_98 {dimension_numbers = #tpu.dot_dimension_numbers<[1], [0], [0], [1], [0, 0, 1, 1], [], []>} : vector<9x128xf32>, vector<128x128xf32>, vector<9x128xf32> -> vector<9x128xf32>
    %c1408 = arith.constant 1408 : index
    %c0_99 = arith.constant 0 : index
    %163 = vector.load %arg1[%c1408, %c0_99] : memref<2560x128xf32, #tpu.memory_space<vmem>>, vector<128x128xf32>
    %c1_100 = arith.constant 1 : index
    %c0_101 = arith.constant 0 : index
    %164 = tpu.strided_load %arg5[%c1_100, %c0_101] {strides = array<i32: 2, 1>} : memref<44x128xf32, #tpu.memory_space<vmem>>, vector<9x128xf32>
    %cst_102 = arith.constant dense<0.000000e+00> : vector<9x128xf32>
    %165 = tpu.matmul %164, %163, %cst_102 {dimension_numbers = #tpu.dot_dimension_numbers<[1], [0], [0], [1], [0, 0, 1, 1], [], []>} : vector<9x128xf32>, vector<128x128xf32>, vector<9x128xf32> -> vector<9x128xf32>
    %166 = arith.addf %160, %165 : vector<9x128xf32>
    %c23 = arith.constant 23 : index
    %c0_103 = arith.constant 0 : index
    %167 = tpu.strided_load %arg5[%c23, %c0_103] {strides = array<i32: 2, 1>} : memref<44x128xf32, #tpu.memory_space<vmem>>, vector<9x128xf32>
    %cst_104 = arith.constant dense<0.000000e+00> : vector<9x128xf32>
    %168 = tpu.matmul %167, %163, %cst_104 {dimension_numbers = #tpu.dot_dimension_numbers<[1], [0], [0], [1], [0, 0, 1, 1], [], []>} : vector<9x128xf32>, vector<128x128xf32>, vector<9x128xf32> -> vector<9x128xf32>
    %169 = arith.addf %162, %168 : vector<9x128xf32>
    %c1536 = arith.constant 1536 : index
    %c0_105 = arith.constant 0 : index
    %170 = vector.load %arg1[%c1536, %c0_105] : memref<2560x128xf32, #tpu.memory_space<vmem>>, vector<128x128xf32>
    %c2_106 = arith.constant 2 : index
    %c0_107 = arith.constant 0 : index
    %171 = tpu.strided_load %arg5[%c2_106, %c0_107] {strides = array<i32: 2, 1>} : memref<44x128xf32, #tpu.memory_space<vmem>>, vector<9x128xf32>
    %cst_108 = arith.constant dense<0.000000e+00> : vector<9x128xf32>
    %172 = tpu.matmul %171, %170, %cst_108 {dimension_numbers = #tpu.dot_dimension_numbers<[1], [0], [0], [1], [0, 0, 1, 1], [], []>} : vector<9x128xf32>, vector<128x128xf32>, vector<9x128xf32> -> vector<9x128xf32>
    %173 = arith.addf %166, %172 : vector<9x128xf32>
    %c24 = arith.constant 24 : index
    %c0_109 = arith.constant 0 : index
    %174 = tpu.strided_load %arg5[%c24, %c0_109] {strides = array<i32: 2, 1>} : memref<44x128xf32, #tpu.memory_space<vmem>>, vector<9x128xf32>
    %cst_110 = arith.constant dense<0.000000e+00> : vector<9x128xf32>
    %175 = tpu.matmul %174, %170, %cst_110 {dimension_numbers = #tpu.dot_dimension_numbers<[1], [0], [0], [1], [0, 0, 1, 1], [], []>} : vector<9x128xf32>, vector<128x128xf32>, vector<9x128xf32> -> vector<9x128xf32>
    %176 = arith.addf %169, %175 : vector<9x128xf32>
    %c1664 = arith.constant 1664 : index
    %c0_111 = arith.constant 0 : index
    %177 = vector.load %arg1[%c1664, %c0_111] : memref<2560x128xf32, #tpu.memory_space<vmem>>, vector<128x128xf32>
    %c3_112 = arith.constant 3 : index
    %c0_113 = arith.constant 0 : index
    %178 = tpu.strided_load %arg5[%c3_112, %c0_113] {strides = array<i32: 2, 1>} : memref<44x128xf32, #tpu.memory_space<vmem>>, vector<9x128xf32>
    %cst_114 = arith.constant dense<0.000000e+00> : vector<9x128xf32>
    %179 = tpu.matmul %178, %177, %cst_114 {dimension_numbers = #tpu.dot_dimension_numbers<[1], [0], [0], [1], [0, 0, 1, 1], [], []>} : vector<9x128xf32>, vector<128x128xf32>, vector<9x128xf32> -> vector<9x128xf32>
    %180 = arith.addf %173, %179 : vector<9x128xf32>
    %c25 = arith.constant 25 : index
    %c0_115 = arith.constant 0 : index
    %181 = tpu.strided_load %arg5[%c25, %c0_115] {strides = array<i32: 2, 1>} : memref<44x128xf32, #tpu.memory_space<vmem>>, vector<9x128xf32>
    %cst_116 = arith.constant dense<0.000000e+00> : vector<9x128xf32>
    %182 = tpu.matmul %181, %177, %cst_116 {dimension_numbers = #tpu.dot_dimension_numbers<[1], [0], [0], [1], [0, 0, 1, 1], [], []>} : vector<9x128xf32>, vector<128x128xf32>, vector<9x128xf32> -> vector<9x128xf32>
    %183 = arith.addf %176, %182 : vector<9x128xf32>
    %c1792 = arith.constant 1792 : index
    %c0_117 = arith.constant 0 : index
    %184 = vector.load %arg1[%c1792, %c0_117] : memref<2560x128xf32, #tpu.memory_space<vmem>>, vector<128x128xf32>
    %c4_118 = arith.constant 4 : index
    %c0_119 = arith.constant 0 : index
    %185 = tpu.strided_load %arg5[%c4_118, %c0_119] {strides = array<i32: 2, 1>} : memref<44x128xf32, #tpu.memory_space<vmem>>, vector<9x128xf32>
    %cst_120 = arith.constant dense<0.000000e+00> : vector<9x128xf32>
    %186 = tpu.matmul %185, %184, %cst_120 {dimension_numbers = #tpu.dot_dimension_numbers<[1], [0], [0], [1], [0, 0, 1, 1], [], []>} : vector<9x128xf32>, vector<128x128xf32>, vector<9x128xf32> -> vector<9x128xf32>
    %187 = arith.addf %180, %186 : vector<9x128xf32>
    %c26 = arith.constant 26 : index
    %c0_121 = arith.constant 0 : index
    %188 = tpu.strided_load %arg5[%c26, %c0_121] {strides = array<i32: 2, 1>} : memref<44x128xf32, #tpu.memory_space<vmem>>, vector<9x128xf32>
    %cst_122 = arith.constant dense<0.000000e+00> : vector<9x128xf32>
    %189 = tpu.matmul %188, %184, %cst_122 {dimension_numbers = #tpu.dot_dimension_numbers<[1], [0], [0], [1], [0, 0, 1, 1], [], []>} : vector<9x128xf32>, vector<128x128xf32>, vector<9x128xf32> -> vector<9x128xf32>
    %190 = arith.addf %183, %189 : vector<9x128xf32>
    %cst_123 = arith.constant dense<0.000000e+00> : vector<128xf32>
    %191 = vector.multi_reduction <add>, %187, %cst_123 [0] : vector<9x128xf32> to vector<128xf32>
    %192 = vector.shape_cast %191 : vector<128xf32> to vector<1x128xf32>
    %193 = arith.mulf %187, %187 : vector<9x128xf32>
    %cst_124 = arith.constant dense<0.000000e+00> : vector<128xf32>
    %194 = vector.multi_reduction <add>, %193, %cst_124 [0] : vector<9x128xf32> to vector<128xf32>
    %195 = vector.shape_cast %194 : vector<128xf32> to vector<1x128xf32>
    %cst_125 = arith.constant dense<0.000000e+00> : vector<128xf32>
    %196 = vector.multi_reduction <add>, %190, %cst_125 [0] : vector<9x128xf32> to vector<128xf32>
    %197 = vector.shape_cast %196 : vector<128xf32> to vector<1x128xf32>
    %198 = arith.addf %192, %197 : vector<1x128xf32>
    %199 = arith.mulf %190, %190 : vector<9x128xf32>
    %cst_126 = arith.constant dense<0.000000e+00> : vector<128xf32>
    %200 = vector.multi_reduction <add>, %199, %cst_126 [0] : vector<9x128xf32> to vector<128xf32>
    %201 = vector.shape_cast %200 : vector<128xf32> to vector<1x128xf32>
    %202 = arith.addf %195, %201 : vector<1x128xf32>
    %cst_127 = arith.constant 0.055555556 : f32
    %203 = vector.broadcast %cst_127 : f32 to vector<1x128xf32>
    %204 = arith.mulf %198, %203 : vector<1x128xf32>
    %cst_128 = arith.constant 0.055555556 : f32
    %205 = vector.broadcast %cst_128 : f32 to vector<1x128xf32>
    %206 = arith.mulf %202, %205 : vector<1x128xf32>
    %207 = arith.mulf %204, %204 : vector<1x128xf32>
    %208 = arith.subf %206, %207 : vector<1x128xf32>
    %c4_129 = arith.constant 4 : index
    %c0_130 = arith.constant 0 : index
    %209 = vector.load %arg2[%c4_129, %c0_130] : memref<8x128xf32, #tpu.memory_space<vmem>>, vector<1x128xf32>
    %c5 = arith.constant 5 : index
    %c0_131 = arith.constant 0 : index
    %210 = vector.load %arg2[%c5, %c0_131] : memref<8x128xf32, #tpu.memory_space<vmem>>, vector<1x128xf32>
    %cst_132 = arith.constant 9.99999974E-6 : f32
    %211 = vector.broadcast %cst_132 : f32 to vector<1x128xf32>
    %212 = arith.addf %208, %211 : vector<1x128xf32>
    %213 = math.rsqrt %212 : vector<1x128xf32>
    %214 = arith.mulf %209, %213 : vector<1x128xf32>
    %215 = arith.mulf %204, %214 : vector<1x128xf32>
    %216 = arith.subf %210, %215 : vector<1x128xf32>
    %217 = vector.broadcast %214 : vector<1x128xf32> to vector<9x128xf32>
    %218 = arith.mulf %187, %217 : vector<9x128xf32>
    %219 = vector.broadcast %216 : vector<1x128xf32> to vector<9x128xf32>
    %220 = arith.addf %218, %219 : vector<9x128xf32>
    %cst_133 = arith.constant 0.000000e+00 : f32
    %221 = vector.broadcast %cst_133 : f32 to vector<9x128xf32>
    %222 = arith.cmpf oge, %220, %221 : vector<9x128xf32>
    %cst_134 = arith.constant 1.000000e-01 : f32
    %223 = vector.broadcast %cst_134 : f32 to vector<9x128xf32>
    %224 = arith.mulf %223, %220 : vector<9x128xf32>
    %225 = arith.select %222, %220, %224 : vector<9x128xi1>, vector<9x128xf32>
    %c0_135 = arith.constant 0 : index
    %c0_136 = arith.constant 0 : index
    %226 = vector.load %arg6[%c0_135, %c0_136] : memref<18x128xf32, #tpu.memory_space<vmem>>, vector<9x128xf32>
    tpu.vector_store %arg6[%c0_135, %c0_136], %225 {strides = array<i32>} : memref<18x128xf32, #tpu.memory_space<vmem>>, vector<9x128xf32>,
    %227 = vector.broadcast %214 : vector<1x128xf32> to vector<9x128xf32>
    %228 = arith.mulf %190, %227 : vector<9x128xf32>
    %229 = vector.broadcast %216 : vector<1x128xf32> to vector<9x128xf32>
    %230 = arith.addf %228, %229 : vector<9x128xf32>
    %cst_137 = arith.constant 0.000000e+00 : f32
    %231 = vector.broadcast %cst_137 : f32 to vector<9x128xf32>
    %232 = arith.cmpf oge, %230, %231 : vector<9x128xf32>
    %cst_138 = arith.constant 1.000000e-01 : f32
    %233 = vector.broadcast %cst_138 : f32 to vector<9x128xf32>
    %234 = arith.mulf %233, %230 : vector<9x128xf32>
    %235 = arith.select %232, %230, %234 : vector<9x128xi1>, vector<9x128xf32>
    %c9 = arith.constant 9 : index
    %c0_139 = arith.constant 0 : index
    %236 = vector.load %arg6[%c9, %c0_139] : memref<18x128xf32, #tpu.memory_space<vmem>>, vector<9x128xf32>
    tpu.vector_store %arg6[%c9, %c0_139], %235 {strides = array<i32>} : memref<18x128xf32, #tpu.memory_space<vmem>>, vector<9x128xf32>,
    %c1920 = arith.constant 1920 : index
    %c0_140 = arith.constant 0 : index
    %237 = vector.load %arg1[%c1920, %c0_140] : memref<2560x128xf32, #tpu.memory_space<vmem>>, vector<128x128xf32>
    %c0_141 = arith.constant 0 : index
    %c0_142 = arith.constant 0 : index
    %238 = tpu.strided_load %arg6[%c0_141, %c0_142] {strides = array<i32: 2, 1>} : memref<18x128xf32, #tpu.memory_space<vmem>>, vector<3x128xf32>
    %cst_143 = arith.constant dense<0.000000e+00> : vector<3x128xf32>
    %239 = tpu.matmul %238, %237, %cst_143 {dimension_numbers = #tpu.dot_dimension_numbers<[1], [0], [0], [1], [0, 0, 1, 1], [], []>} : vector<3x128xf32>, vector<128x128xf32>, vector<3x128xf32> -> vector<3x128xf32>
    %c9_144 = arith.constant 9 : index
    %c0_145 = arith.constant 0 : index
    %240 = tpu.strided_load %arg6[%c9_144, %c0_145] {strides = array<i32: 2, 1>} : memref<18x128xf32, #tpu.memory_space<vmem>>, vector<3x128xf32>
    %cst_146 = arith.constant dense<0.000000e+00> : vector<3x128xf32>
    %241 = tpu.matmul %240, %237, %cst_146 {dimension_numbers = #tpu.dot_dimension_numbers<[1], [0], [0], [1], [0, 0, 1, 1], [], []>} : vector<3x128xf32>, vector<128x128xf32>, vector<3x128xf32> -> vector<3x128xf32>
    %c2048 = arith.constant 2048 : index
    %c0_147 = arith.constant 0 : index
    %242 = vector.load %arg1[%c2048, %c0_147] : memref<2560x128xf32, #tpu.memory_space<vmem>>, vector<128x128xf32>
    %c1_148 = arith.constant 1 : index
    %c0_149 = arith.constant 0 : index
    %243 = tpu.strided_load %arg6[%c1_148, %c0_149] {strides = array<i32: 2, 1>} : memref<18x128xf32, #tpu.memory_space<vmem>>, vector<3x128xf32>
    %cst_150 = arith.constant dense<0.000000e+00> : vector<3x128xf32>
    %244 = tpu.matmul %243, %242, %cst_150 {dimension_numbers = #tpu.dot_dimension_numbers<[1], [0], [0], [1], [0, 0, 1, 1], [], []>} : vector<3x128xf32>, vector<128x128xf32>, vector<3x128xf32> -> vector<3x128xf32>
    %245 = arith.addf %239, %244 : vector<3x128xf32>
    %c10 = arith.constant 10 : index
    %c0_151 = arith.constant 0 : index
    %246 = tpu.strided_load %arg6[%c10, %c0_151] {strides = array<i32: 2, 1>} : memref<18x128xf32, #tpu.memory_space<vmem>>, vector<3x128xf32>
    %cst_152 = arith.constant dense<0.000000e+00> : vector<3x128xf32>
    %247 = tpu.matmul %246, %242, %cst_152 {dimension_numbers = #tpu.dot_dimension_numbers<[1], [0], [0], [1], [0, 0, 1, 1], [], []>} : vector<3x128xf32>, vector<128x128xf32>, vector<3x128xf32> -> vector<3x128xf32>
    %248 = arith.addf %241, %247 : vector<3x128xf32>
    %c2176 = arith.constant 2176 : index
    %c0_153 = arith.constant 0 : index
    %249 = vector.load %arg1[%c2176, %c0_153] : memref<2560x128xf32, #tpu.memory_space<vmem>>, vector<128x128xf32>
    %c2_154 = arith.constant 2 : index
    %c0_155 = arith.constant 0 : index
    %250 = tpu.strided_load %arg6[%c2_154, %c0_155] {strides = array<i32: 2, 1>} : memref<18x128xf32, #tpu.memory_space<vmem>>, vector<3x128xf32>
    %cst_156 = arith.constant dense<0.000000e+00> : vector<3x128xf32>
    %251 = tpu.matmul %250, %249, %cst_156 {dimension_numbers = #tpu.dot_dimension_numbers<[1], [0], [0], [1], [0, 0, 1, 1], [], []>} : vector<3x128xf32>, vector<128x128xf32>, vector<3x128xf32> -> vector<3x128xf32>
    %252 = arith.addf %245, %251 : vector<3x128xf32>
    %c11 = arith.constant 11 : index
    %c0_157 = arith.constant 0 : index
    %253 = tpu.strided_load %arg6[%c11, %c0_157] {strides = array<i32: 2, 1>} : memref<18x128xf32, #tpu.memory_space<vmem>>, vector<3x128xf32>
    %cst_158 = arith.constant dense<0.000000e+00> : vector<3x128xf32>
    %254 = tpu.matmul %253, %249, %cst_158 {dimension_numbers = #tpu.dot_dimension_numbers<[1], [0], [0], [1], [0, 0, 1, 1], [], []>} : vector<3x128xf32>, vector<128x128xf32>, vector<3x128xf32> -> vector<3x128xf32>
    %255 = arith.addf %248, %254 : vector<3x128xf32>
    %c2304 = arith.constant 2304 : index
    %c0_159 = arith.constant 0 : index
    %256 = vector.load %arg1[%c2304, %c0_159] : memref<2560x128xf32, #tpu.memory_space<vmem>>, vector<128x128xf32>
    %c3_160 = arith.constant 3 : index
    %c0_161 = arith.constant 0 : index
    %257 = tpu.strided_load %arg6[%c3_160, %c0_161] {strides = array<i32: 2, 1>} : memref<18x128xf32, #tpu.memory_space<vmem>>, vector<3x128xf32>
    %cst_162 = arith.constant dense<0.000000e+00> : vector<3x128xf32>
    %258 = tpu.matmul %257, %256, %cst_162 {dimension_numbers = #tpu.dot_dimension_numbers<[1], [0], [0], [1], [0, 0, 1, 1], [], []>} : vector<3x128xf32>, vector<128x128xf32>, vector<3x128xf32> -> vector<3x128xf32>
    %259 = arith.addf %252, %258 : vector<3x128xf32>
    %c12 = arith.constant 12 : index
    %c0_163 = arith.constant 0 : index
    %260 = tpu.strided_load %arg6[%c12, %c0_163] {strides = array<i32: 2, 1>} : memref<18x128xf32, #tpu.memory_space<vmem>>, vector<3x128xf32>
    %cst_164 = arith.constant dense<0.000000e+00> : vector<3x128xf32>
    %261 = tpu.matmul %260, %256, %cst_164 {dimension_numbers = #tpu.dot_dimension_numbers<[1], [0], [0], [1], [0, 0, 1, 1], [], []>} : vector<3x128xf32>, vector<128x128xf32>, vector<3x128xf32> -> vector<3x128xf32>
    %262 = arith.addf %255, %261 : vector<3x128xf32>
    %c2432 = arith.constant 2432 : index
    %c0_165 = arith.constant 0 : index
    %263 = vector.load %arg1[%c2432, %c0_165] : memref<2560x128xf32, #tpu.memory_space<vmem>>, vector<128x128xf32>
    %c4_166 = arith.constant 4 : index
    %c0_167 = arith.constant 0 : index
    %264 = tpu.strided_load %arg6[%c4_166, %c0_167] {strides = array<i32: 2, 1>} : memref<18x128xf32, #tpu.memory_space<vmem>>, vector<3x128xf32>
    %cst_168 = arith.constant dense<0.000000e+00> : vector<3x128xf32>
    %265 = tpu.matmul %264, %263, %cst_168 {dimension_numbers = #tpu.dot_dimension_numbers<[1], [0], [0], [1], [0, 0, 1, 1], [], []>} : vector<3x128xf32>, vector<128x128xf32>, vector<3x128xf32> -> vector<3x128xf32>
    %266 = arith.addf %259, %265 : vector<3x128xf32>
    %c13 = arith.constant 13 : index
    %c0_169 = arith.constant 0 : index
    %267 = tpu.strided_load %arg6[%c13, %c0_169] {strides = array<i32: 2, 1>} : memref<18x128xf32, #tpu.memory_space<vmem>>, vector<3x128xf32>
    %cst_170 = arith.constant dense<0.000000e+00> : vector<3x128xf32>
    %268 = tpu.matmul %267, %263, %cst_170 {dimension_numbers = #tpu.dot_dimension_numbers<[1], [0], [0], [1], [0, 0, 1, 1], [], []>} : vector<3x128xf32>, vector<128x128xf32>, vector<3x128xf32> -> vector<3x128xf32>
    %269 = arith.addf %262, %268 : vector<3x128xf32>
    %cst_171 = arith.constant dense<0.000000e+00> : vector<128xf32>
    %270 = vector.multi_reduction <add>, %266, %cst_171 [0] : vector<3x128xf32> to vector<128xf32>
    %271 = vector.shape_cast %270 : vector<128xf32> to vector<1x128xf32>
    %272 = arith.mulf %266, %266 : vector<3x128xf32>
    %cst_172 = arith.constant dense<0.000000e+00> : vector<128xf32>
    %273 = vector.multi_reduction <add>, %272, %cst_172 [0] : vector<3x128xf32> to vector<128xf32>
    %274 = vector.shape_cast %273 : vector<128xf32> to vector<1x128xf32>
    %cst_173 = arith.constant dense<0.000000e+00> : vector<128xf32>
    %275 = vector.multi_reduction <add>, %269, %cst_173 [0] : vector<3x128xf32> to vector<128xf32>
    %276 = vector.shape_cast %275 : vector<128xf32> to vector<1x128xf32>
    %277 = arith.addf %271, %276 : vector<1x128xf32>
    %278 = arith.mulf %269, %269 : vector<3x128xf32>
    %cst_174 = arith.constant dense<0.000000e+00> : vector<128xf32>
    %279 = vector.multi_reduction <add>, %278, %cst_174 [0] : vector<3x128xf32> to vector<128xf32>
    %280 = vector.shape_cast %279 : vector<128xf32> to vector<1x128xf32>
    %281 = arith.addf %274, %280 : vector<1x128xf32>
    %cst_175 = arith.constant 0.166666672 : f32
    %282 = vector.broadcast %cst_175 : f32 to vector<1x128xf32>
    %283 = arith.mulf %277, %282 : vector<1x128xf32>
    %cst_176 = arith.constant 0.166666672 : f32
    %284 = vector.broadcast %cst_176 : f32 to vector<1x128xf32>
    %285 = arith.mulf %281, %284 : vector<1x128xf32>
    %286 = arith.mulf %283, %283 : vector<1x128xf32>
    %287 = arith.subf %285, %286 : vector<1x128xf32>
    %c6 = arith.constant 6 : index
    %c0_177 = arith.constant 0 : index
    %288 = vector.load %arg2[%c6, %c0_177] : memref<8x128xf32, #tpu.memory_space<vmem>>, vector<1x128xf32>
    %c7 = arith.constant 7 : index
    %c0_178 = arith.constant 0 : index
    %289 = vector.load %arg2[%c7, %c0_178] : memref<8x128xf32, #tpu.memory_space<vmem>>, vector<1x128xf32>
    %cst_179 = arith.constant 9.99999974E-6 : f32
    %290 = vector.broadcast %cst_179 : f32 to vector<1x128xf32>
    %291 = arith.addf %287, %290 : vector<1x128xf32>
    %292 = math.rsqrt %291 : vector<1x128xf32>
    %293 = arith.mulf %288, %292 : vector<1x128xf32>
    %294 = arith.mulf %283, %293 : vector<1x128xf32>
    %295 = arith.subf %289, %294 : vector<1x128xf32>
    %296 = vector.broadcast %293 : vector<1x128xf32> to vector<3x128xf32>
    %297 = arith.mulf %266, %296 : vector<3x128xf32>
    %298 = vector.broadcast %295 : vector<1x128xf32> to vector<3x128xf32>
    %299 = arith.addf %297, %298 : vector<3x128xf32>
    %cst_180 = arith.constant 0.000000e+00 : f32
    %300 = vector.broadcast %cst_180 : f32 to vector<3x128xf32>
    %301 = arith.cmpf oge, %299, %300 : vector<3x128xf32>
    %cst_181 = arith.constant 1.000000e-01 : f32
    %302 = vector.broadcast %cst_181 : f32 to vector<3x128xf32>
    %303 = arith.mulf %302, %299 : vector<3x128xf32>
    %304 = arith.select %301, %299, %303 : vector<3x128xi1>, vector<3x128xf32>
    %c0_182 = arith.constant 0 : index
    %c0_183 = arith.constant 0 : index
    %305 = vector.load %arg3[%c0_182, %c0_183] : memref<6x128xf32, #tpu.memory_space<vmem>>, vector<3x128xf32>
    tpu.vector_store %arg3[%c0_182, %c0_183], %304 {strides = array<i32>} : memref<6x128xf32, #tpu.memory_space<vmem>>, vector<3x128xf32>,
    %306 = vector.broadcast %293 : vector<1x128xf32> to vector<3x128xf32>
    %307 = arith.mulf %269, %306 : vector<3x128xf32>
    %308 = vector.broadcast %295 : vector<1x128xf32> to vector<3x128xf32>
    %309 = arith.addf %307, %308 : vector<3x128xf32>
    %cst_184 = arith.constant 0.000000e+00 : f32
    %310 = vector.broadcast %cst_184 : f32 to vector<3x128xf32>
    %311 = arith.cmpf oge, %309, %310 : vector<3x128xf32>
    %cst_185 = arith.constant 1.000000e-01 : f32
    %312 = vector.broadcast %cst_185 : f32 to vector<3x128xf32>
    %313 = arith.mulf %312, %309 : vector<3x128xf32>
    %314 = arith.select %311, %309, %313 : vector<3x128xi1>, vector<3x128xf32>
    %c3_186 = arith.constant 3 : index
    %c0_187 = arith.constant 0 : index
    %315 = vector.load %arg3[%c3_186, %c0_187] : memref<6x128xf32, #tpu.memory_space<vmem>>, vector<3x128xf32>
    tpu.vector_store %arg3[%c3_186, %c0_187], %314 {strides = array<i32>} : memref<6x128xf32, #tpu.memory_space<vmem>>, vector<3x128xf32>,
    return
  }
}

</mosaic_0001>

<llo_original>
// kernel: encoder_forward.1
$region0: #{encoder_forward.1}
  #allocation0 [shape = 'u32[]', space=smem, size = 0x4, offset = 0x4, fixed_abs, tag = 'smem constant byte address 0x4 - core index']
  #allocation1 [shape = 'u32[144,128]{1,0:T(1,128)}', space=vmem, size = 0x12000, scoped, tag = 'internal scratch']
  #allocation2 [shape = 'f32[96,128]{1,0:T(8,128)}', space=vmem, size = 0xc000, scoped, tag = 'scratch operand']
  #allocation3 [shape = 'f32[44,128]{1,0:T(8,128)}', space=vmem, size = 0x6000, scoped, tag = 'scratch operand']
  #allocation4 [shape = 'f32[18,128]{1,0:T(8,128)}', space=vmem, size = 0x3000, scoped, tag = 'scratch operand']
  %s0 = inlined_call_operand.vmem [shape: f32[200,128], index: 0, kind: input, shape index: {}]
  %s1 = inlined_call_operand.hbm [shape: f32[2560,128], index: 1, kind: input, shape index: {}]
  %s2 = inlined_call_operand.hbm [shape: f32[8,128], index: 2, kind: input, shape index: {}]
  %s3 = inlined_call_operand.vmem [shape: f32[6,128], index: 3, kind: output, shape index: {}]
  %s4 = sld [smem:[#allocation0]]
  $region30: #{encoder_forward.1} parent=0
    _
  %s6 = ssub.s32 1, %s4
  %s7 = scalar_select 0, %s6, %s4
  $region1: #{encoder_forward.1} parent=0
    #allocation5 [shape = 'u8[1310720]{0}', space=vmem, size = 0x140000, scoped, tag = 'input window, operand 1, single buffered']
    #allocation6 [shape = 's32[1]{0}', space=sflag, size = 0x4, scoped, tag = 'scoped memory for encoder_forward.1']
    #allocation7 [shape = 'u8[4096]{0}', space=vmem, size = 0x1000, scoped, tag = 'input window, operand 2, single buffered']
    #allocation8 [shape = 's32[1]{0}', space=sflag, size = 0x4, scoped, tag = 'scoped memory for encoder_forward.1']
    %8 = vsyncpa [#allocation6], 0
    %9 = vsyncpa [#allocation8], 0
    // Predicated region
    $region2: #{encoder_forward.1} parent=1 // pred_check
      _
    $region3: #{encoder_forward.1} parent=1 // pred_check_branch
      %11 = sbr.rel (0) target = $region5
    $region4: #{encoder_forward.1} parent=1 // pred_region
      _
    $region5: #{encoder_forward.1} parent=1 // pred_fallthru
      _
    // Predicated region
    $region6: #{encoder_forward.1} parent=1 // pred_check
      _
    $region7: #{encoder_forward.1} parent=1 // pred_check_branch
      %13 = sbr.rel (0) target = $region9
    $region8: #{encoder_forward.1} parent=1 // pred_region
      %s15 = ssub.s32 40960, 40960
      %16 = vsyncadd [#allocation6], %s15
      %s17 = sshll.u32 [#allocation5], 4
      %s18 = int_to_ptr.vmem [resolvable:$true] %s17
      %23 = dma.hbm_to_vmem [thread:$0]  %s1, 40960, %s18, [#allocation6], 128, 128, 8
    $region9: #{encoder_forward.1} parent=1 // pred_fallthru
      _
    // Predicated region
    $region10: #{encoder_forward.1} parent=1 // pred_check
      _
    $region11: #{encoder_forward.1} parent=1 // pred_check_branch
      %25 = sbr.rel (0) target = $region13
    $region12: #{encoder_forward.1} parent=1 // pred_region
      %s27 = ssub.s32 128, 128
      %28 = vsyncadd [#allocation8], %s27
      %s30 = sshll.u32 [#allocation7], 4
      %s31 = int_to_ptr.vmem [resolvable:$true] %s30
      %33 = dma.hbm_to_vmem [thread:$0]  %s2, 128, %s31, [#allocation8]
    $region13: #{encoder_forward.1} parent=1 // pred_fallthru
      _
    // Predicated region
    $region14: #{encoder_forward.1} parent=1 // pred_check
      _
    $region15: #{encoder_forward.1} parent=1 // pred_check_branch
      %35 = sbr.rel (0) target = $region17
    $region16: #{encoder_forward.1} parent=1 // pred_region
      %36 = dma.done [#allocation6], 40960
    $region17: #{encoder_forward.1} parent=1 // pred_fallthru
      _
    // Predicated region
    $region18: #{encoder_forward.1} parent=1 // pred_check
      _
    $region19: #{encoder_forward.1} parent=1 // pred_check_branch
      %38 = sbr.rel (0) target = $region21
    $region20: #{encoder_forward.1} parent=1 // pred_region
      %39 = dma.done [#allocation8], 128
    $region21: #{encoder_forward.1} parent=1 // pred_fallthru
      _
    %v40 = vld [vmem:[#allocation5] sm:$0xff]
    %v41 = vld [vmem:[#allocation5 + $0x8] sm:$0xff]
    %v42 = vld [vmem:[#allocation5 + $0x10] sm:$0xff]
    %v43 = vld [vmem:[#allocation5 + $0x18] sm:$0xff]
    %v44 = vld [vmem:[#allocation5 + $0x20] sm:$0xff]
    %v45 = vld [vmem:[#allocation5 + $0x28] sm:$0xff]
    %v46 = vld [vmem:[#allocation5 + $0x30] sm:$0xff]
    %v47 = vld [vmem:[#allocation5 + $0x38] sm:$0xff]
    %v48 = vld [vmem:[#allocation5 + $0x40] sm:$0xff]
    %v49 = vld [vmem:[#allocation5 + $0x48] sm:$0xff]
    %v50 = vld [vmem:[#allocation5 + $0x50] sm:$0xff]
    %v51 = vld [vmem:[#allocation5 + $0x58] sm:$0xff]
    %v52 = vld [vmem:[#allocation5 + $0x60] sm:$0xff]
    %v53 = vld [vmem:[#allocation5 + $0x68] sm:$0xff]
    %v54 = vld [vmem:[#allocation5 + $0x70] sm:$0xff]
    %v55 = vld [vmem:[#allocation5 + $0x78] sm:$0xff]
    %v56 = vld [vmem:[%s0] ss:$2 sm:$0xff]
    %s57 = scalar_lea.vmem %s0, 16
    %v58 = vld [vmem:[%s57] ss:$2 sm:$0xff]
    %s59 = scalar_lea.vmem %s0, 32
    %v60 = vld [vmem:[%s59] ss:$2 sm:$0xff]
    %s61 = scalar_lea.vmem %s0, 48
    %v62 = vld [vmem:[%s61] ss:$2 sm:$0xff]
    %s63 = scalar_lea.vmem %s0, 64
    %v64 = vld [vmem:[%s63] ss:$2 sm:$0xff]
    %s65 = scalar_lea.vmem %s0, 80
    %v66 = vld [vmem:[%s65] ss:$2 sm:$0xff]
    %s67 = scalar_lea.vmem %s0, 100
    %v68 = vld [vmem:[%s67] ss:$2 sm:$0xff]
    %s69 = scalar_lea.vmem %s0, 116
    %v70 = vld [vmem:[%s69] ss:$2 sm:$0xff]
    %s71 = scalar_lea.vmem %s0, 132
    %v72 = vld [vmem:[%s71] ss:$2 sm:$0xff]
    %s73 = scalar_lea.vmem %s0, 148
    %v74 = vld [vmem:[%s73] ss:$2 sm:$0xff]
    %s75 = scalar_lea.vmem %s0, 164
    %v76 = vld [vmem:[%s75] ss:$2 sm:$0xff]
    %s77 = scalar_lea.vmem %s0, 180
    %v78 = vld [vmem:[%s77] ss:$2 sm:$0xff]
    %v79 = vld [vmem:[#allocation5 + $0x80] sm:$0xff]
    %v80 = vld [vmem:[#allocation5 + $0x88] sm:$0xff]
    %v81 = vld [vmem:[#allocation5 + $0x90] sm:$0xff]
    %v82 = vld [vmem:[#allocation5 + $0x98] sm:$0xff]
    %v83 = vld [vmem:[#allocation5 + $0xa0] sm:$0xff]
    %v84 = vld [vmem:[#allocation5 + $0xa8] sm:$0xff]
    %v85 = vld [vmem:[#allocation5 + $0xb0] sm:$0xff]
    %v86 = vld [vmem:[#allocation5 + $0xb8] sm:$0xff]
    %v87 = vld [vmem:[#allocation5 + $0xc0] sm:$0xff]
    %v88 = vld [vmem:[#allocation5 + $0xc8] sm:$0xff]
    %v89 = vld [vmem:[#allocation5 + $0xd0] sm:$0xff]
    %v90 = vld [vmem:[#allocation5 + $0xd8] sm:$0xff]
    %v91 = vld [vmem:[#allocation5 + $0xe0] sm:$0xff]
    %v92 = vld [vmem:[#allocation5 + $0xe8] sm:$0xff]
    %v93 = vld [vmem:[#allocation5 + $0xf0] sm:$0xff]
    %v94 = vld [vmem:[#allocation5 + $0xf8] sm:$0xff]
    %s95 = scalar_lea.vmem %s0, 1
    %v96 = vld [vmem:[%s95] ss:$2 sm:$0xff]
    %s97 = scalar_lea.vmem %s0, 17
    %v98 = vld [vmem:[%s97] ss:$2 sm:$0xff]
    %s99 = scalar_lea.vmem %s0, 33
    %v100 = vld [vmem:[%s99] ss:$2 sm:$0xff]
    %s101 = scalar_lea.vmem %s0, 49
    %v102 = vld [vmem:[%s101] ss:$2 sm:$0xff]
    %s103 = scalar_lea.vmem %s0, 65
    %v104 = vld [vmem:[%s103] ss:$2 sm:$0xff]
    %s105 = scalar_lea.vmem %s0, 81
    %v106 = vld [vmem:[%s105] ss:$2 sm:$0xff]
    %107 = vmatprep.subr.mxu0 0.0
    %108 = vmatpush1.msra.mxu0 %v79
    %109 = vmatprep.subr.mxu0 0.0
    %110 = vmatpush1.msra.mxu0 %v80
    %111 = vmatprep.subr.mxu0 0.0
    %112 = vmatpush1.msra.mxu0 %v81
    %113 = vmatprep.subr.mxu0 0.0
    %114 = vmatpush1.msra.mxu0 %v82
    %115 = vmatprep.subr.mxu0 0.0
    %116 = vmatpush1.msra.mxu0 %v83
    %117 = vmatprep.subr.mxu0 0.0
    %118 = vmatpush1.msra.mxu0 %v84
    %119 = vmatprep.subr.mxu0 0.0
    %120 = vmatpush1.msra.mxu0 %v85
    %121 = vmatprep.subr.mxu0 0.0
    %122 = vmatpush1.msra.mxu0 %v86
    %123 = vmatprep.subr.mxu0 0.0
    %124 = vmatpush1.msra.mxu0 %v87
    %125 = vmatprep.subr.mxu0 0.0
    %126 = vmatpush1.msra.mxu0 %v88
    %127 = vmatprep.subr.mxu0 0.0
    %128 = vmatpush1.msra.mxu0 %v89
    %129 = vmatprep.subr.mxu0 0.0
    %130 = vmatpush1.msra.mxu0 %v90
    %131 = vmatprep.subr.mxu0 0.0
    %132 = vmatpush1.msra.mxu0 %v91
    %133 = vmatprep.subr.mxu0 0.0
    %134 = vmatpush1.msra.mxu0 %v92
    %135 = vmatprep.subr.mxu0 0.0
    %136 = vmatpush1.msra.mxu0 %v93
    %137 = vmatprep.subr.mxu0 0.0
    %138 = vmatpush1.msra.mxu0 %v94
    %139 = vmatprep.subr.mxu0 0.0
    %140 = vmatpush1.msra.mxu0 0.0
    %141 = vmatprep.subr.mxu0 0.0
    %142 = vmatpush1.msra.mxu0 0.0
    %143 = vmatprep.subr.mxu0 0.0
    %144 = vmatpush1.msra.mxu0 0.0
    %145 = vmatprep.subr.mxu0 0.0
    %146 = vmatpush1.msra.mxu0 0.0
    %147 = vmatprep.subr.mxu0 0.0
    %148 = vmatpush1.msra.mxu0 0.0
    %149 = vmatprep.subr.mxu0 0.0
    %150 = vmatpush1.msra.mxu0 0.0
    %151 = vmatprep.subr.mxu0 0.0
    %152 = vmatpush1.msra.mxu0 0.0
    %153 = vmatprep.subr.mxu0 0.0
    %154 = vmatpush1.msra.mxu0 0.0
    %155 = vmatprep.subr.mxu0 0.0
    %156 = vmatpush1.msra.mxu0 0.0
    %157 = vmatprep.subr.mxu0 0.0
    %158 = vmatpush1.msra.mxu0 0.0
    %159 = vmatprep.subr.mxu0 0.0
    %160 = vmatpush1.msra.mxu0 0.0
    %161 = vmatprep.subr.mxu0 0.0
    %162 = vmatpush1.msra.mxu0 0.0
    %163 = vmatprep.subr.mxu0 0.0
    %164 = vmatpush1.msra.mxu0 0.0
    %165 = vmatprep.subr.mxu0 0.0
    %166 = vmatpush1.msra.mxu0 0.0
    %167 = vmatprep.subr.mxu0 0.0
    %168 = vmatpush1.msra.mxu0 0.0
    %169 = vmatprep.subr.mxu0 0.0
    %170 = vmatpush1.msra.mxu0 0.0
    %171 = vmatprep.mubr.f32.mxu0 0.0
    %172 = vmatmul.mubr.f32.gmra.mrb[0].mxu0 %v96
    %v173 = vpop.f32.mrb[0].mxu0
    %v174 = vadd.f32 0.0, %v173
    %v175 = vpop.f32.mrb[0].mxu0
    %176 = vmatprep.mubr.f32.mxu0 0.0
    %177 = vmatmul.mubr.f32.gmra.mrb[0].mxu0 %v98
    %v178 = vpop.f32.mrb[0].mxu0
    %v179 = vadd.f32 0.0, %v178
    %v180 = vpop.f32.mrb[0].mxu0
    %181 = vmatprep.mubr.f32.mxu0 0.0
    %182 = vmatmul.mubr.f32.gmra.mrb[0].mxu0 %v100
    %v183 = vpop.f32.mrb[0].mxu0
    %v184 = vadd.f32 0.0, %v183
    %v185 = vpop.f32.mrb[0].mxu0
    %186 = vmatprep.mubr.f32.mxu0 0.0
    %187 = vmatmul.mubr.f32.gmra.mrb[0].mxu0 %v102
    %v188 = vpop.f32.mrb[0].mxu0
    %v189 = vadd.f32 0.0, %v188
    %v190 = vpop.f32.mrb[0].mxu0
    %191 = vmatprep.mubr.f32.mxu0 0.0
    %192 = vmatmul.mubr.f32.gmra.mrb[0].mxu0 %v104
    %v193 = vpop.f32.mrb[0].mxu0
    %v194 = vadd.f32 0.0, %v193
    %v195 = vpop.f32.mrb[0].mxu0
    %196 = vmatprep.mubr.f32.mxu0 0.0
    %197 = vmatmul.mubr.f32.gmra.mrb[0].mxu0 %v106
    %v198 = vpop.f32.mrb[0].mxu0
    %v199 = vadd.f32 0.0, %v198
    %v200 = vpop.f32.mrb[0].mxu0
    %201 = vdwg.mxu0
    %202 = vmatprep.subr.mxu0 0.0
    %203 = vmatpush1.msra.mxu0 %v40
    %204 = vmatprep.subr.mxu0 0.0
    %205 = vmatpush1.msra.mxu0 %v41
    %206 = vmatprep.subr.mxu0 0.0
    %207 = vmatpush1.msra.mxu0 %v42
    %208 = vmatprep.subr.mxu0 0.0
    %209 = vmatpush1.msra.mxu0 %v43
    %210 = vmatprep.subr.mxu0 0.0
    %211 = vmatpush1.msra.mxu0 %v44
    %212 = vmatprep.subr.mxu0 0.0
    %213 = vmatpush1.msra.mxu0 %v45
    %214 = vmatprep.subr.mxu0 0.0
    %215 = vmatpush1.msra.mxu0 %v46
    %216 = vmatprep.subr.mxu0 0.0
    %217 = vmatpush1.msra.mxu0 %v47
    %218 = vmatprep.subr.mxu0 0.0
    %219 = vmatpush1.msra.mxu0 %v48
    %220 = vmatprep.subr.mxu0 0.0
    %221 = vmatpush1.msra.mxu0 %v49
    %222 = vmatprep.subr.mxu0 0.0
    %223 = vmatpush1.msra.mxu0 %v50
    %224 = vmatprep.subr.mxu0 0.0
    %225 = vmatpush1.msra.mxu0 %v51
    %226 = vmatprep.subr.mxu0 0.0
    %227 = vmatpush1.msra.mxu0 %v52
    %228 = vmatprep.subr.mxu0 0.0
    %229 = vmatpush1.msra.mxu0 %v53
    %230 = vmatprep.subr.mxu0 0.0
    %231 = vmatpush1.msra.mxu0 %v54
    %232 = vmatprep.subr.mxu0 0.0
    %233 = vmatpush1.msra.mxu0 %v55
    %234 = vmatprep.subr.mxu0 0.0
    %235 = vmatpush1.msra.mxu0 0.0
    %236 = vmatprep.subr.mxu0 0.0
    %237 = vmatpush1.msra.mxu0 0.0
    %238 = vmatprep.subr.mxu0 0.0
    %239 = vmatpush1.msra.mxu0 0.0
    %240 = vmatprep.subr.mxu0 0.0
    %241 = vmatpush1.msra.mxu0 0.0
    %242 = vmatprep.subr.mxu0 0.0
    %243 = vmatpush1.msra.mxu0 0.0
    %244 = vmatprep.subr.mxu0 0.0
    %245 = vmatpush1.msra.mxu0 0.0
    %246 = vmatprep.subr.mxu0 0.0
    %247 = vmatpush1.msra.mxu0 0.0
    %248 = vmatprep.subr.mxu0 0.0
    %249 = vmatpush1.msra.mxu0 0.0
    %250 = vmatprep.subr.mxu0 0.0
    %251 = vmatpush1.msra.mxu0 0.0
    %252 = vmatprep.subr.mxu0 0.0
    %253 = vmatpush1.msra.mxu0 0.0
    %254 = vmatprep.subr.mxu0 0.0
    %255 = vmatpush1.msra.mxu0 0.0
    %256 = vmatprep.subr.mxu0 0.0
    %257 = vmatpush1.msra.mxu0 0.0
    %258 = vmatprep.subr.mxu0 0.0
    %259 = vmatpush1.msra.mxu0 0.0
    %260 = vmatprep.subr.mxu0 0.0
    %261 = vmatpush1.msra.mxu0 0.0
    %262 = vmatprep.subr.mxu0 0.0
    %263 = vmatpush1.msra.mxu0 0.0
    %264 = vmatprep.subr.mxu0 0.0
    %265 = vmatpush1.msra.mxu0 0.0
    %266 = vmatprep.mubr.f32.mxu0 0.0
    %267 = vmatmul.mubr.f32.gmra.mrb[0].mxu0 %v56
    %v268 = vpop.f32.mrb[0].mxu0
    %v269 = vadd.f32 %v174, %v268
    %v270 = vpop.f32.mrb[0].mxu0
    %271 = vmatprep.mubr.f32.mxu0 0.0
    %272 = vmatmul.mubr.f32.gmra.mrb[0].mxu0 %v58
    %v273 = vpop.f32.mrb[0].mxu0
    %v274 = vadd.f32 %v179, %v273
    %v275 = vpop.f32.mrb[0].mxu0
    %276 = vmatprep.mubr.f32.mxu0 0.0
    %277 = vmatmul.mubr.f32.gmra.mrb[0].mxu0 %v60
    %v278 = vpop.f32.mrb[0].mxu0
    %v279 = vadd.f32 %v184, %v278
    %v280 = vpop.f32.mrb[0].mxu0
    %281 = vmatprep.mubr.f32.mxu0 0.0
    %282 = vmatmul.mubr.f32.gmra.mrb[0].mxu0 %v62
    %v283 = vpop.f32.mrb[0].mxu0
    %v284 = vadd.f32 %v189, %v283
    %v285 = vpop.f32.mrb[0].mxu0
    %286 = vmatprep.mubr.f32.mxu0 0.0
    %287 = vmatmul.mubr.f32.gmra.mrb[0].mxu0 %v64
    %v288 = vpop.f32.mrb[0].mxu0
    %v289 = vadd.f32 %v194, %v288
    %v290 = vpop.f32.mrb[0].mxu0
    %291 = vmatprep.mubr.f32.mxu0 0.0
    %292 = vmatmul.mubr.f32.gmra.mrb[0].mxu0 %v66
    %v293 = vpop.f32.mrb[0].mxu0
    %v294 = vadd.f32 %v199, %v293
    %v295 = vpop.f32.mrb[0].mxu0
    %296 = vdwg.mxu0
    %s297 = scalar_lea.vmem %s0, 101
    %v298 = vld [vmem:[%s297] ss:$2 sm:$0xff]
    %s299 = scalar_lea.vmem %s0, 117
    %v300 = vld [vmem:[%s299] ss:$2 sm:$0xff]
    %s301 = scalar_lea.vmem %s0, 133
    %v302 = vld [vmem:[%s301] ss:$2 sm:$0xff]
    %s303 = scalar_lea.vmem %s0, 149
    %v304 = vld [vmem:[%s303] ss:$2 sm:$0xff]
    %s305 = scalar_lea.vmem %s0, 165
    %v306 = vld [vmem:[%s305] ss:$2 sm:$0xff]
    %s307 = scalar_lea.vmem %s0, 181
    %v308 = vld [vmem:[%s307] ss:$2 sm:$0xff]
    %309 = vmatprep.subr.mxu0 0.0
    %310 = vmatpush1.msra.mxu0 %v79
    %311 = vmatprep.subr.mxu0 0.0
    %312 = vmatpush1.msra.mxu0 %v80
    %313 = vmatprep.subr.mxu0 0.0
    %314 = vmatpush1.msra.mxu0 %v81
    %315 = vmatprep.subr.mxu0 0.0
    %316 = vmatpush1.msra.mxu0 %v82
    %317 = vmatprep.subr.mxu0 0.0
    %318 = vmatpush1.msra.mxu0 %v83
    %319 = vmatprep.subr.mxu0 0.0
    %320 = vmatpush1.msra.mxu0 %v84
    %321 = vmatprep.subr.mxu0 0.0
    %322 = vmatpush1.msra.mxu0 %v85
    %323 = vmatprep.subr.mxu0 0.0
    %324 = vmatpush1.msra.mxu0 %v86
    %325 = vmatprep.subr.mxu0 0.0
    %326 = vmatpush1.msra.mxu0 %v87
    %327 = vmatprep.subr.mxu0 0.0
    %328 = vmatpush1.msra.mxu0 %v88
    %329 = vmatprep.subr.mxu0 0.0
    %330 = vmatpush1.msra.mxu0 %v89
    %331 = vmatprep.subr.mxu0 0.0
    %332 = vmatpush1.msra.mxu0 %v90
    %333 = vmatprep.subr.mxu0 0.0
    %334 = vmatpush1.msra.mxu0 %v91
    %335 = vmatprep.subr.mxu0 0.0
    %336 = vmatpush1.msra.mxu0 %v92
    %337 = vmatprep.subr.mxu0 0.0
    %338 = vmatpush1.msra.mxu0 %v93
    %339 = vmatprep.subr.mxu0 0.0
    %340 = vmatpush1.msra.mxu0 %v94
    %341 = vmatprep.subr.mxu0 0.0
    %342 = vmatpush1.msra.mxu0 0.0
    %343 = vmatprep.subr.mxu0 0.0
    %344 = vmatpush1.msra.mxu0 0.0
    %345 = vmatprep.subr.mxu0 0.0
    %346 = vmatpush1.msra.mxu0 0.0
    %347 = vmatprep.subr.mxu0 0.0
    %348 = vmatpush1.msra.mxu0 0.0
    %349 = vmatprep.subr.mxu0 0.0
    %350 = vmatpush1.msra.mxu0 0.0
    %351 = vmatprep.subr.mxu0 0.0
    %352 = vmatpush1.msra.mxu0 0.0
    %353 = vmatprep.subr.mxu0 0.0
    %354 = vmatpush1.msra.mxu0 0.0
    %355 = vmatprep.subr.mxu0 0.0
    %356 = vmatpush1.msra.mxu0 0.0
    %357 = vmatprep.subr.mxu0 0.0
    %358 = vmatpush1.msra.mxu0 0.0
    %359 = vmatprep.subr.mxu0 0.0
    %360 = vmatpush1.msra.mxu0 0.0
    %361 = vmatprep.subr.mxu0 0.0
    %362 = vmatpush1.msra.mxu0 0.0
    %363 = vmatprep.subr.mxu0 0.0
    %364 = vmatpush1.msra.mxu0 0.0
    %365 = vmatprep.subr.mxu0 0.0
    %366 = vmatpush1.msra.mxu0 0.0
    %367 = vmatprep.subr.mxu0 0.0
    %368 = vmatpush1.msra.mxu0 0.0
    %369 = vmatprep.subr.mxu0 0.0
    %370 = vmatpush1.msra.mxu0 0.0
    %371 = vmatprep.subr.mxu0 0.0
    %372 = vmatpush1.msra.mxu0 0.0
    %373 = vmatprep.mubr.f32.mxu0 0.0
    %374 = vmatmul.mubr.f32.gmra.mrb[0].mxu0 %v298
    %v375 = vpop.f32.mrb[0].mxu0
    %v376 = vadd.f32 0.0, %v375
    %v377 = vpop.f32.mrb[0].mxu0
    %378 = vmatprep.mubr.f32.mxu0 0.0
    %379 = vmatmul.mubr.f32.gmra.mrb[0].mxu0 %v300
    %v380 = vpop.f32.mrb[0].mxu0
    %v381 = vadd.f32 0.0, %v380
    %v382 = vpop.f32.mrb[0].mxu0
    %383 = vmatprep.mubr.f32.mxu0 0.0
    %384 = vmatmul.mubr.f32.gmra.mrb[0].mxu0 %v302
    %v385 = vpop.f32.mrb[0].mxu0
    %v386 = vadd.f32 0.0, %v385
    %v387 = vpop.f32.mrb[0].mxu0
    %388 = vmatprep.mubr.f32.mxu0 0.0
    %389 = vmatmul.mubr.f32.gmra.mrb[0].mxu0 %v304
    %v390 = vpop.f32.mrb[0].mxu0
    %v391 = vadd.f32 0.0, %v390
    %v392 = vpop.f32.mrb[0].mxu0
    %393 = vmatprep.mubr.f32.mxu0 0.0
    %394 = vmatmul.mubr.f32.gmra.mrb[0].mxu0 %v306
    %v395 = vpop.f32.mrb[0].mxu0
    %v396 = vadd.f32 0.0, %v395
    %v397 = vpop.f32.mrb[0].mxu0
    %398 = vmatprep.mubr.f32.mxu0 0.0
    %399 = vmatmul.mubr.f32.gmra.mrb[0].mxu0 %v308
    %v400 = vpop.f32.mrb[0].mxu0
    %v401 = vadd.f32 0.0, %v400
    %v402 = vpop.f32.mrb[0].mxu0
    %403 = vdwg.mxu0
    %404 = vmatprep.subr.mxu0 0.0
    %405 = vmatpush1.msra.mxu0 %v40
    %406 = vmatprep.subr.mxu0 0.0
    %407 = vmatpush1.msra.mxu0 %v41
    %408 = vmatprep.subr.mxu0 0.0
    %409 = vmatpush1.msra.mxu0 %v42
    %410 = vmatprep.subr.mxu0 0.0
    %411 = vmatpush1.msra.mxu0 %v43
    %412 = vmatprep.subr.mxu0 0.0
    %413 = vmatpush1.msra.mxu0 %v44
    %414 = vmatprep.subr.mxu0 0.0
    %415 = vmatpush1.msra.mxu0 %v45
    %416 = vmatprep.subr.mxu0 0.0
    %417 = vmatpush1.msra.mxu0 %v46
    %418 = vmatprep.subr.mxu0 0.0
    %419 = vmatpush1.msra.mxu0 %v47
    %420 = vmatprep.subr.mxu0 0.0
    %421 = vmatpush1.msra.mxu0 %v48
    %422 = vmatprep.subr.mxu0 0.0
    %423 = vmatpush1.msra.mxu0 %v49
    %424 = vmatprep.subr.mxu0 0.0
    %425 = vmatpush1.msra.mxu0 %v50
    %426 = vmatprep.subr.mxu0 0.0
    %427 = vmatpush1.msra.mxu0 %v51
    %428 = vmatprep.subr.mxu0 0.0
    %429 = vmatpush1.msra.mxu0 %v52
    %430 = vmatprep.subr.mxu0 0.0
    %431 = vmatpush1.msra.mxu0 %v53
    %432 = vmatprep.subr.mxu0 0.0
    %433 = vmatpush1.msra.mxu0 %v54
    %434 = vmatprep.subr.mxu0 0.0
    %435 = vmatpush1.msra.mxu0 %v55
    %436 = vmatprep.subr.mxu0 0.0
    %437 = vmatpush1.msra.mxu0 0.0
    %438 = vmatprep.subr.mxu0 0.0
    %439 = vmatpush1.msra.mxu0 0.0
    %440 = vmatprep.subr.mxu0 0.0
    %441 = vmatpush1.msra.mxu0 0.0
    %442 = vmatprep.subr.mxu0 0.0
    %443 = vmatpush1.msra.mxu0 0.0
    %444 = vmatprep.subr.mxu0 0.0
    %445 = vmatpush1.msra.mxu0 0.0
    %446 = vmatprep.subr.mxu0 0.0
    %447 = vmatpush1.msra.mxu0 0.0
    %448 = vmatprep.subr.mxu0 0.0
    %449 = vmatpush1.msra.mxu0 0.0
    %450 = vmatprep.subr.mxu0 0.0
    %451 = vmatpush1.msra.mxu0 0.0
    %452 = vmatprep.subr.mxu0 0.0
    %453 = vmatpush1.msra.mxu0 0.0
    %454 = vmatprep.subr.mxu0 0.0
    %455 = vmatpush1.msra.mxu0 0.0
    %456 = vmatprep.subr.mxu0 0.0
    %457 = vmatpush1.msra.mxu0 0.0
    %458 = vmatprep.subr.mxu0 0.0
    %459 = vmatpush1.msra.mxu0 0.0
    %460 = vmatprep.subr.mxu0 0.0
    %461 = vmatpush1.msra.mxu0 0.0
    %462 = vmatprep.subr.mxu0 0.0
    %463 = vmatpush1.msra.mxu0 0.0
    %464 = vmatprep.subr.mxu0 0.0
    %465 = vmatpush1.msra.mxu0 0.0
    %466 = vmatprep.subr.mxu0 0.0
    %467 = vmatpush1.msra.mxu0 0.0
    %468 = vmatprep.mubr.f32.mxu0 0.0
    %469 = vmatmul.mubr.f32.gmra.mrb[0].mxu0 %v68
    %v470 = vpop.f32.mrb[0].mxu0
    %v471 = vadd.f32 %v376, %v470
    %v472 = vpop.f32.mrb[0].mxu0
    %473 = vmatprep.mubr.f32.mxu0 0.0
    %474 = vmatmul.mubr.f32.gmra.mrb[0].mxu0 %v70
    %v475 = vpop.f32.mrb[0].mxu0
    %v476 = vadd.f32 %v381, %v475
    %v477 = vpop.f32.mrb[0].mxu0
    %478 = vmatprep.mubr.f32.mxu0 0.0
    %479 = vmatmul.mubr.f32.gmra.mrb[0].mxu0 %v72
    %v480 = vpop.f32.mrb[0].mxu0
    %v481 = vadd.f32 %v386, %v480
    %v482 = vpop.f32.mrb[0].mxu0
    %483 = vmatprep.mubr.f32.mxu0 0.0
    %484 = vmatmul.mubr.f32.gmra.mrb[0].mxu0 %v74
    %v485 = vpop.f32.mrb[0].mxu0
    %v486 = vadd.f32 %v391, %v485
    %v487 = vpop.f32.mrb[0].mxu0
    %488 = vmatprep.mubr.f32.mxu0 0.0
    %489 = vmatmul.mubr.f32.gmra.mrb[0].mxu0 %v76
    %v490 = vpop.f32.mrb[0].mxu0
    %v491 = vadd.f32 %v396, %v490
    %v492 = vpop.f32.mrb[0].mxu0
    %493 = vmatprep.mubr.f32.mxu0 0.0
    %494 = vmatmul.mubr.f32.gmra.mrb[0].mxu0 %v78
    %v495 = vpop.f32.mrb[0].mxu0
    %v496 = vadd.f32 %v401, %v495
    %v497 = vpop.f32.mrb[0].mxu0
    %498 = vdwg.mxu0
    %v499 = vld [vmem:[#allocation5 + $0x100] sm:$0xff]
    %v500 = vld [vmem:[#allocation5 + $0x108] sm:$0xff]
    %v501 = vld [vmem:[#allocation5 + $0x110] sm:$0xff]
    %v502 = vld [vmem:[#allocation5 + $0x118] sm:$0xff]
    %v503 = vld [vmem:[#allocation5 + $0x120] sm:$0xff]
    %v504 = vld [vmem:[#allocation5 + $0x128] sm:$0xff]
    %v505 = vld [vmem:[#allocation5 + $0x130] sm:$0xff]
    %v506 = vld [vmem:[#allocation5 + $0x138] sm:$0xff]
    %v507 = vld [vmem:[#allocation5 + $0x140] sm:$0xff]
    %v508 = vld [vmem:[#allocation5 + $0x148] sm:$0xff]
    %v509 = vld [vmem:[#allocation5 + $0x150] sm:$0xff]
    %v510 = vld [vmem:[#allocation5 + $0x158] sm:$0xff]
    %v511 = vld [vmem:[#allocation5 + $0x160] sm:$0xff]
    %v512 = vld [vmem:[#allocation5 + $0x168] sm:$0xff]
    %v513 = vld [vmem:[#allocation5 + $0x170] sm:$0xff]
    %v514 = vld [vmem:[#allocation5 + $0x178] sm:$0xff]
    %s515 = scalar_lea.vmem %s0, 2
    %v516 = vld [vmem:[%s515] ss:$2 sm:$0xff]
    %s517 = scalar_lea.vmem %s0, 18
    %v518 = vld [vmem:[%s517] ss:$2 sm:$0xff]
    %s519 = scalar_lea.vmem %s0, 34
    %v520 = vld [vmem:[%s519] ss:$2 sm:$0xff]
    %s521 = scalar_lea.vmem %s0, 50
    %v522 = vld [vmem:[%s521] ss:$2 sm:$0xff]
    %s523 = scalar_lea.vmem %s0, 66
    %v524 = vld [vmem:[%s523] ss:$2 sm:$0xff]
    %s525 = scalar_lea.vmem %s0, 82
    %v526 = vld [vmem:[%s525] ss:$2 sm:$0xff]
    %527 = vmatprep.subr.mxu0 0.0
    %528 = vmatpush1.msra.mxu0 %v499
    %529 = vmatprep.subr.mxu0 0.0
    %530 = vmatpush1.msra.mxu0 %v500
    %531 = vmatprep.subr.mxu0 0.0
    %532 = vmatpush1.msra.mxu0 %v501
    %533 = vmatprep.subr.mxu0 0.0
    %534 = vmatpush1.msra.mxu0 %v502
    %535 = vmatprep.subr.mxu0 0.0
    %536 = vmatpush1.msra.mxu0 %v503
    %537 = vmatprep.subr.mxu0 0.0
    %538 = vmatpush1.msra.mxu0 %v504
    %539 = vmatprep.subr.mxu0 0.0
    %540 = vmatpush1.msra.mxu0 %v505
    %541 = vmatprep.subr.mxu0 0.0
    %542 = vmatpush1.msra.mxu0 %v506
    %543 = vmatprep.subr.mxu0 0.0
    %544 = vmatpush1.msra.mxu0 %v507
    %545 = vmatprep.subr.mxu0 0.0
    %546 = vmatpush1.msra.mxu0 %v508
    %547 = vmatprep.subr.mxu0 0.0
    %548 = vmatpush1.msra.mxu0 %v509
    %549 = vmatprep.subr.mxu0 0.0
    %550 = vmatpush1.msra.mxu0 %v510
    %551 = vmatprep.subr.mxu0 0.0
    %552 = vmatpush1.msra.mxu0 %v511
    %553 = vmatprep.subr.mxu0 0.0
    %554 = vmatpush1.msra.mxu0 %v512
    %555 = vmatprep.subr.mxu0 0.0
    %556 = vmatpush1.msra.mxu0 %v513
    %557 = vmatprep.subr.mxu0 0.0
    %558 = vmatpush1.msra.mxu0 %v514
    %559 = vmatprep.subr.mxu0 0.0
    %560 = vmatpush1.msra.mxu0 0.0
    %561 = vmatprep.subr.mxu0 0.0
    %562 = vmatpush1.msra.mxu0 0.0
    %563 = vmatprep.subr.mxu0 0.0
    %564 = vmatpush1.msra.mxu0 0.0
    %565 = vmatprep.subr.mxu0 0.0
    %566 = vmatpush1.msra.mxu0 0.0
    %567 = vmatprep.subr.mxu0 0.0
    %568 = vmatpush1.msra.mxu0 0.0
    %569 = vmatprep.subr.mxu0 0.0
    %570 = vmatpush1.msra.mxu0 0.0
    %571 = vmatprep.subr.mxu0 0.0
    %572 = vmatpush1.msra.mxu0 0.0
    %573 = vmatprep.subr.mxu0 0.0
    %574 = vmatpush1.msra.mxu0 0.0
    %575 = vmatprep.subr.mxu0 0.0
    %576 = vmatpush1.msra.mxu0 0.0
    %577 = vmatprep.subr.mxu0 0.0
    %578 = vmatpush1.msra.mxu0 0.0
    %579 = vmatprep.subr.mxu0 0.0
    %580 = vmatpush1.msra.mxu0 0.0
    %581 = vmatprep.subr.mxu0 0.0
    %582 = vmatpush1.msra.mxu0 0.0
    %583 = vmatprep.subr.mxu0 0.0
    %584 = vmatpush1.msra.mxu0 0.0
    %585 = vmatprep.subr.mxu0 0.0
    %586 = vmatpush1.msra.mxu0 0.0
    %587 = vmatprep.subr.mxu0 0.0
    %588 = vmatpush1.msra.mxu0 0.0
    %589 = vmatprep.subr.mxu0 0.0
    %590 = vmatpush1.msra.mxu0 0.0
    %591 = vmatprep.mubr.f32.mxu0 0.0
    %592 = vmatmul.mubr.f32.gmra.mrb[0].mxu0 %v516
    %v593 = vpop.f32.mrb[0].mxu0
    %v594 = vadd.f32 0.0, %v593
    %v595 = vpop.f32.mrb[0].mxu0
    %596 = vmatprep.mubr.f32.mxu0 0.0
    %597 = vmatmul.mubr.f32.gmra.mrb[0].mxu0 %v518
    %v598 = vpop.f32.mrb[0].mxu0
    %v599 = vadd.f32 0.0, %v598
    %v600 = vpop.f32.mrb[0].mxu0
    %601 = vmatprep.mubr.f32.mxu0 0.0
    %602 = vmatmul.mubr.f32.gmra.mrb[0].mxu0 %v520
    %v603 = vpop.f32.mrb[0].mxu0
    %v604 = vadd.f32 0.0, %v603
    %v605 = vpop.f32.mrb[0].mxu0
    %606 = vmatprep.mubr.f32.mxu0 0.0
    %607 = vmatmul.mubr.f32.gmra.mrb[0].mxu0 %v522
    %v608 = vpop.f32.mrb[0].mxu0
    %v609 = vadd.f32 0.0, %v608
    %v610 = vpop.f32.mrb[0].mxu0
    %611 = vmatprep.mubr.f32.mxu0 0.0
    %612 = vmatmul.mubr.f32.gmra.mrb[0].mxu0 %v524
    %v613 = vpop.f32.mrb[0].mxu0
    %v614 = vadd.f32 0.0, %v613
    %v615 = vpop.f32.mrb[0].mxu0
    %616 = vmatprep.mubr.f32.mxu0 0.0
    %617 = vmatmul.mubr.f32.gmra.mrb[0].mxu0 %v526
    %v618 = vpop.f32.mrb[0].mxu0
    %v619 = vadd.f32 0.0, %v618
    %v620 = vpop.f32.mrb[0].mxu0
    %621 = vdwg.mxu0
    %v622 = vadd.f32 %v269, %v594
    %v623 = vadd.f32 %v274, %v599
    %v624 = vadd.f32 %v279, %v604
    %v625 = vadd.f32 %v284, %v609
    %v626 = vadd.f32 %v289, %v614
    %v627 = vadd.f32 %v294, %v619
    %s628 = scalar_lea.vmem %s0, 102
    %v629 = vld [vmem:[%s628] ss:$2 sm:$0xff]
    %s630 = scalar_lea.vmem %s0, 118
    %v631 = vld [vmem:[%s630] ss:$2 sm:$0xff]
    %s632 = scalar_lea.vmem %s0, 134
    %v633 = vld [vmem:[%s632] ss:$2 sm:$0xff]
    %s634 = scalar_lea.vmem %s0, 150
    %v635 = vld [vmem:[%s634] ss:$2 sm:$0xff]
    %s636 = scalar_lea.vmem %s0, 166
    %v637 = vld [vmem:[%s636] ss:$2 sm:$0xff]
    %s638 = scalar_lea.vmem %s0, 182
    %v639 = vld [vmem:[%s638] ss:$2 sm:$0xff]
    %640 = vmatprep.subr.mxu0 0.0
    %641 = vmatpush1.msra.mxu0 %v499
    %642 = vmatprep.subr.mxu0 0.0
    %643 = vmatpush1.msra.mxu0 %v500
    %644 = vmatprep.subr.mxu0 0.0
    %645 = vmatpush1.msra.mxu0 %v501
    %646 = vmatprep.subr.mxu0 0.0
    %647 = vmatpush1.msra.mxu0 %v502
    %648 = vmatprep.subr.mxu0 0.0
    %649 = vmatpush1.msra.mxu0 %v503
    %650 = vmatprep.subr.mxu0 0.0
    %651 = vmatpush1.msra.mxu0 %v504
    %652 = vmatprep.subr.mxu0 0.0
    %653 = vmatpush1.msra.mxu0 %v505
    %654 = vmatprep.subr.mxu0 0.0
    %655 = vmatpush1.msra.mxu0 %v506
    %656 = vmatprep.subr.mxu0 0.0
    %657 = vmatpush1.msra.mxu0 %v507
    %658 = vmatprep.subr.mxu0 0.0
    %659 = vmatpush1.msra.mxu0 %v508
    %660 = vmatprep.subr.mxu0 0.0
    %661 = vmatpush1.msra.mxu0 %v509
    %662 = vmatprep.subr.mxu0 0.0
    %663 = vmatpush1.msra.mxu0 %v510
    %664 = vmatprep.subr.mxu0 0.0
    %665 = vmatpush1.msra.mxu0 %v511
    %666 = vmatprep.subr.mxu0 0.0
    %667 = vmatpush1.msra.mxu0 %v512
    %668 = vmatprep.subr.mxu0 0.0
    %669 = vmatpush1.msra.mxu0 %v513
    %670 = vmatprep.subr.mxu0 0.0
    %671 = vmatpush1.msra.mxu0 %v514
    %672 = vmatprep.subr.mxu0 0.0
    %673 = vmatpush1.msra.mxu0 0.0
    %674 = vmatprep.subr.mxu0 0.0
    %675 = vmatpush1.msra.mxu0 0.0
    %676 = vmatprep.subr.mxu0 0.0
    %677 = vmatpush1.msra.mxu0 0.0
    %678 = vmatprep.subr.mxu0 0.0
    %679 = vmatpush1.msra.mxu0 0.0
    %680 = vmatprep.subr.mxu0 0.0
    %681 = vmatpush1.msra.mxu0 0.0
    %682 = vmatprep.subr.mxu0 0.0
    %683 = vmatpush1.msra.mxu0 0.0
    %684 = vmatprep.subr.mxu0 0.0
    %685 = vmatpush1.msra.mxu0 0.0
    %686 = vmatprep.subr.mxu0 0.0
    %687 = vmatpush1.msra.mxu0 0.0
    %688 = vmatprep.subr.mxu0 0.0
    %689 = vmatpush1.msra.mxu0 0.0
    %690 = vmatprep.subr.mxu0 0.0
    %691 = vmatpush1.msra.mxu0 0.0
    %692 = vmatprep.subr.mxu0 0.0
    %693 = vmatpush1.msra.mxu0 0.0
    %694 = vmatprep.subr.mxu0 0.0
    %695 = vmatpush1.msra.mxu0 0.0
    %696 = vmatprep.subr.mxu0 0.0
    %697 = vmatpush1.msra.mxu0 0.0
    %698 = vmatprep.subr.mxu0 0.0
    %699 = vmatpush1.msra.mxu0 0.0
    %700 = vmatprep.subr.mxu0 0.0
    %701 = vmatpush1.msra.mxu0 0.0
    %702 = vmatprep.subr.mxu0 0.0
    %703 = vmatpush1.msra.mxu0 0.0
    %704 = vmatprep.mubr.f32.mxu0 0.0
    %705 = vmatmul.mubr.f32.gmra.mrb[0].mxu0 %v629
    %v706 = vpop.f32.mrb[0].mxu0
    %v707 = vadd.f32 0.0, %v706
    %v708 = vpop.f32.mrb[0].mxu0
    %709 = vmatprep.mubr.f32.mxu0 0.0
    %710 = vmatmul.mubr.f32.gmra.mrb[0].mxu0 %v631
    %v711 = vpop.f32.mrb[0].mxu0
    %v712 = vadd.f32 0.0, %v711
    %v713 = vpop.f32.mrb[0].mxu0
    %714 = vmatprep.mubr.f32.mxu0 0.0
    %715 = vmatmul.mubr.f32.gmra.mrb[0].mxu0 %v633
    %v716 = vpop.f32.mrb[0].mxu0
    %v717 = vadd.f32 0.0, %v716
    %v718 = vpop.f32.mrb[0].mxu0
    %719 = vmatprep.mubr.f32.mxu0 0.0
    %720 = vmatmul.mubr.f32.gmra.mrb[0].mxu0 %v635
    %v721 = vpop.f32.mrb[0].mxu0
    %v722 = vadd.f32 0.0, %v721
    %v723 = vpop.f32.mrb[0].mxu0
    %724 = vmatprep.mubr.f32.mxu0 0.0
    %725 = vmatmul.mubr.f32.gmra.mrb[0].mxu0 %v637
    %v726 = vpop.f32.mrb[0].mxu0
    %v727 = vadd.f32 0.0, %v726
    %v728 = vpop.f32.mrb[0].mxu0
    %729 = vmatprep.mubr.f32.mxu0 0.0
    %730 = vmatmul.mubr.f32.gmra.mrb[0].mxu0 %v639
    %v731 = vpop.f32.mrb[0].mxu0
    %v732 = vadd.f32 0.0, %v731
    %v733 = vpop.f32.mrb[0].mxu0
    %734 = vdwg.mxu0
    %v735 = vadd.f32 %v471, %v707
    %v736 = vadd.f32 %v476, %v712
    %v737 = vadd.f32 %v481, %v717
    %v738 = vadd.f32 %v486, %v722
    %v739 = vadd.f32 %v491, %v727
    %v740 = vadd.f32 %v496, %v732
    %v741 = vld [vmem:[#allocation5 + $0x180] sm:$0xff]
    %v742 = vld [vmem:[#allocation5 + $0x188] sm:$0xff]
    %v743 = vld [vmem:[#allocation5 + $0x190] sm:$0xff]
    %v744 = vld [vmem:[#allocation5 + $0x198] sm:$0xff]
    %v745 = vld [vmem:[#allocation5 + $0x1a0] sm:$0xff]
    %v746 = vld [vmem:[#allocation5 + $0x1a8] sm:$0xff]
    %v747 = vld [vmem:[#allocation5 + $0x1b0] sm:$0xff]
    %v748 = vld [vmem:[#allocation5 + $0x1b8] sm:$0xff]
    %v749 = vld [vmem:[#allocation5 + $0x1c0] sm:$0xff]
    %v750 = vld [vmem:[#allocation5 + $0x1c8] sm:$0xff]
    %v751 = vld [vmem:[#allocation5 + $0x1d0] sm:$0xff]
    %v752 = vld [vmem:[#allocation5 + $0x1d8] sm:$0xff]
    %v753 = vld [vmem:[#allocation5 + $0x1e0] sm:$0xff]
    %v754 = vld [vmem:[#allocation5 + $0x1e8] sm:$0xff]
    %v755 = vld [vmem:[#allocation5 + $0x1f0] sm:$0xff]
    %v756 = vld [vmem:[#allocation5 + $0x1f8] sm:$0xff]
    %s757 = scalar_lea.vmem %s0, 3
    %v758 = vld [vmem:[%s757] ss:$2 sm:$0xff]
    %s759 = scalar_lea.vmem %s0, 19
    %v760 = vld [vmem:[%s759] ss:$2 sm:$0xff]
    %s761 = scalar_lea.vmem %s0, 35
    %v762 = vld [vmem:[%s761] ss:$2 sm:$0xff]
    %s763 = scalar_lea.vmem %s0, 51
    %v764 = vld [vmem:[%s763] ss:$2 sm:$0xff]
    %s765 = scalar_lea.vmem %s0, 67
    %v766 = vld [vmem:[%s765] ss:$2 sm:$0xff]
    %s767 = scalar_lea.vmem %s0, 83
    %v768 = vld [vmem:[%s767] ss:$2 sm:$0xff]
    %769 = vmatprep.subr.mxu0 0.0
    %770 = vmatpush1.msra.mxu0 %v741
    %771 = vmatprep.subr.mxu0 0.0
    %772 = vmatpush1.msra.mxu0 %v742
    %773 = vmatprep.subr.mxu0 0.0
    %774 = vmatpush1.msra.mxu0 %v743
    %775 = vmatprep.subr.mxu0 0.0
    %776 = vmatpush1.msra.mxu0 %v744
    %777 = vmatprep.subr.mxu0 0.0
    %778 = vmatpush1.msra.mxu0 %v745
    %779 = vmatprep.subr.mxu0 0.0
    %780 = vmatpush1.msra.mxu0 %v746
    %781 = vmatprep.subr.mxu0 0.0
    %782 = vmatpush1.msra.mxu0 %v747
    %783 = vmatprep.subr.mxu0 0.0
    %784 = vmatpush1.msra.mxu0 %v748
    %785 = vmatprep.subr.mxu0 0.0
    %786 = vmatpush1.msra.mxu0 %v749
    %787 = vmatprep.subr.mxu0 0.0
    %788 = vmatpush1.msra.mxu0 %v750
    %789 = vmatprep.subr.mxu0 0.0
    %790 = vmatpush1.msra.mxu0 %v751
    %791 = vmatprep.subr.mxu0 0.0
    %792 = vmatpush1.msra.mxu0 %v752
    %793 = vmatprep.subr.mxu0 0.0
    %794 = vmatpush1.msra.mxu0 %v753
    %795 = vmatprep.subr.mxu0 0.0
    %796 = vmatpush1.msra.mxu0 %v754
    %797 = vmatprep.subr.mxu0 0.0
    %798 = vmatpush1.msra.mxu0 %v755
    %799 = vmatprep.subr.mxu0 0.0
    %800 = vmatpush1.msra.mxu0 %v756
    %801 = vmatprep.subr.mxu0 0.0
    %802 = vmatpush1.msra.mxu0 0.0
    %803 = vmatprep.subr.mxu0 0.0
    %804 = vmatpush1.msra.mxu0 0.0
    %805 = vmatprep.subr.mxu0 0.0
    %806 = vmatpush1.msra.mxu0 0.0
    %807 = vmatprep.subr.mxu0 0.0
    %808 = vmatpush1.msra.mxu0 0.0
    %809 = vmatprep.subr.mxu0 0.0
    %810 = vmatpush1.msra.mxu0 0.0
    %811 = vmatprep.subr.mxu0 0.0
    %812 = vmatpush1.msra.mxu0 0.0
    %813 = vmatprep.subr.mxu0 0.0
    %814 = vmatpush1.msra.mxu0 0.0
    %815 = vmatprep.subr.mxu0 0.0
    %816 = vmatpush1.msra.mxu0 0.0
    %817 = vmatprep.subr.mxu0 0.0
    %818 = vmatpush1.msra.mxu0 0.0
    %819 = vmatprep.subr.mxu0 0.0
    %820 = vmatpush1.msra.mxu0 0.0
    %821 = vmatprep.subr.mxu0 0.0
    %822 = vmatpush1.msra.mxu0 0.0
    %823 = vmatprep.subr.mxu0 0.0
    %824 = vmatpush1.msra.mxu0 0.0
    %825 = vmatprep.subr.mxu0 0.0
    %826 = vmatpush1.msra.mxu0 0.0
    %827 = vmatprep.subr.mxu0 0.0
    %828 = vmatpush1.msra.mxu0 0.0
    %829 = vmatprep.subr.mxu0 0.0
    %830 = vmatpush1.msra.mxu0 0.0
    %831 = vmatprep.subr.mxu0 0.0
    %832 = vmatpush1.msra.mxu0 0.0
    %833 = vmatprep.mubr.f32.mxu0 0.0
    %834 = vmatmul.mubr.f32.gmra.mrb[0].mxu0 %v758
    %v835 = vpop.f32.mrb[0].mxu0
    %v836 = vadd.f32 0.0, %v835
    %v837 = vpop.f32.mrb[0].mxu0
    %838 = vmatprep.mubr.f32.mxu0 0.0
    %839 = vmatmul.mubr.f32.gmra.mrb[0].mxu0 %v760
    %v840 = vpop.f32.mrb[0].mxu0
    %v841 = vadd.f32 0.0, %v840
    %v842 = vpop.f32.mrb[0].mxu0
    %843 = vmatprep.mubr.f32.mxu0 0.0
    %844 = vmatmul.mubr.f32.gmra.mrb[0].mxu0 %v762
    %v845 = vpop.f32.mrb[0].mxu0
    %v846 = vadd.f32 0.0, %v845
    %v847 = vpop.f32.mrb[0].mxu0
    %848 = vmatprep.mubr.f32.mxu0 0.0
    %849 = vmatmul.mubr.f32.gmra.mrb[0].mxu0 %v764
    %v850 = vpop.f32.mrb[0].mxu0
    %v851 = vadd.f32 0.0, %v850
    %v852 = vpop.f32.mrb[0].mxu0
    %853 = vmatprep.mubr.f32.mxu0 0.0
    %854 = vmatmul.mubr.f32.gmra.mrb[0].mxu0 %v766
    %v855 = vpop.f32.mrb[0].mxu0
    %v856 = vadd.f32 0.0, %v855
    %v857 = vpop.f32.mrb[0].mxu0
    %858 = vmatprep.mubr.f32.mxu0 0.0
    %859 = vmatmul.mubr.f32.gmra.mrb[0].mxu0 %v768
    %v860 = vpop.f32.mrb[0].mxu0
    %v861 = vadd.f32 0.0, %v860
    %v862 = vpop.f32.mrb[0].mxu0
    %863 = vdwg.mxu0
    %v864 = vadd.f32 %v622, %v836
    %v865 = vadd.f32 %v623, %v841
    %v866 = vadd.f32 %v624, %v846
    %v867 = vadd.f32 %v625, %v851
    %v868 = vadd.f32 %v626, %v856
    %v869 = vadd.f32 %v627, %v861
    %s870 = scalar_lea.vmem %s0, 103
    %v871 = vld [vmem:[%s870] ss:$2 sm:$0xff]
    %s872 = scalar_lea.vmem %s0, 119
    %v873 = vld [vmem:[%s872] ss:$2 sm:$0xff]
    %s874 = scalar_lea.vmem %s0, 135
    %v875 = vld [vmem:[%s874] ss:$2 sm:$0xff]
    %s876 = scalar_lea.vmem %s0, 151
    %v877 = vld [vmem:[%s876] ss:$2 sm:$0xff]
    %s878 = scalar_lea.vmem %s0, 167
    %v879 = vld [vmem:[%s878] ss:$2 sm:$0xff]
    %s880 = scalar_lea.vmem %s0, 183
    %v881 = vld [vmem:[%s880] ss:$2 sm:$0xff]
    %882 = vmatprep.subr.mxu0 0.0
    %883 = vmatpush1.msra.mxu0 %v741
    %884 = vmatprep.subr.mxu0 0.0
    %885 = vmatpush1.msra.mxu0 %v742
    %886 = vmatprep.subr.mxu0 0.0
    %887 = vmatpush1.msra.mxu0 %v743
    %888 = vmatprep.subr.mxu0 0.0
    %889 = vmatpush1.msra.mxu0 %v744
    %890 = vmatprep.subr.mxu0 0.0
    %891 = vmatpush1.msra.mxu0 %v745
    %892 = vmatprep.subr.mxu0 0.0
    %893 = vmatpush1.msra.mxu0 %v746
    %894 = vmatprep.subr.mxu0 0.0
    %895 = vmatpush1.msra.mxu0 %v747
    %896 = vmatprep.subr.mxu0 0.0
    %897 = vmatpush1.msra.mxu0 %v748
    %898 = vmatprep.subr.mxu0 0.0
    %899 = vmatpush1.msra.mxu0 %v749
    %900 = vmatprep.subr.mxu0 0.0
    %901 = vmatpush1.msra.mxu0 %v750
    %902 = vmatprep.subr.mxu0 0.0
    %903 = vmatpush1.msra.mxu0 %v751
    %904 = vmatprep.subr.mxu0 0.0
    %905 = vmatpush1.msra.mxu0 %v752
    %906 = vmatprep.subr.mxu0 0.0
    %907 = vmatpush1.msra.mxu0 %v753
    %908 = vmatprep.subr.mxu0 0.0
    %909 = vmatpush1.msra.mxu0 %v754
    %910 = vmatprep.subr.mxu0 0.0
    %911 = vmatpush1.msra.mxu0 %v755
    %912 = vmatprep.subr.mxu0 0.0
    %913 = vmatpush1.msra.mxu0 %v756
    %914 = vmatprep.subr.mxu0 0.0
    %915 = vmatpush1.msra.mxu0 0.0
    %916 = vmatprep.subr.mxu0 0.0
    %917 = vmatpush1.msra.mxu0 0.0
    %918 = vmatprep.subr.mxu0 0.0
    %919 = vmatpush1.msra.mxu0 0.0
    %920 = vmatprep.subr.mxu0 0.0
    %921 = vmatpush1.msra.mxu0 0.0
    %922 = vmatprep.subr.mxu0 0.0
    %923 = vmatpush1.msra.mxu0 0.0
    %924 = vmatprep.subr.mxu0 0.0
    %925 = vmatpush1.msra.mxu0 0.0
    %926 = vmatprep.subr.mxu0 0.0
    %927 = vmatpush1.msra.mxu0 0.0
    %928 = vmatprep.subr.mxu0 0.0
    %929 = vmatpush1.msra.mxu0 0.0
    %930 = vmatprep.subr.mxu0 0.0
    %931 = vmatpush1.msra.mxu0 0.0
    %932 = vmatprep.subr.mxu0 0.0
    %933 = vmatpush1.msra.mxu0 0.0
    %934 = vmatprep.subr.mxu0 0.0
    %935 = vmatpush1.msra.mxu0 0.0
    %936 = vmatprep.subr.mxu0 0.0
    %937 = vmatpush1.msra.mxu0 0.0
    %938 = vmatprep.subr.mxu0 0.0
    %939 = vmatpush1.msra.mxu0 0.0
    %940 = vmatprep.subr.mxu0 0.0
    %941 = vmatpush1.msra.mxu0 0.0
    %942 = vmatprep.subr.mxu0 0.0
    %943 = vmatpush1.msra.mxu0 0.0
    %944 = vmatprep.subr.mxu0 0.0
    %945 = vmatpush1.msra.mxu0 0.0
    %946 = vmatprep.mubr.f32.mxu0 0.0
    %947 = vmatmul.mubr.f32.gmra.mrb[0].mxu0 %v871
    %v948 = vpop.f32.mrb[0].mxu0
    %v949 = vadd.f32 0.0, %v948
    %v950 = vpop.f32.mrb[0].mxu0
    %951 = vmatprep.mubr.f32.mxu0 0.0
    %952 = vmatmul.mubr.f32.gmra.mrb[0].mxu0 %v873
    %v953 = vpop.f32.mrb[0].mxu0
    %v954 = vadd.f32 0.0, %v953
    %v955 = vpop.f32.mrb[0].mxu0
    %956 = vmatprep.mubr.f32.mxu0 0.0
    %957 = vmatmul.mubr.f32.gmra.mrb[0].mxu0 %v875
    %v958 = vpop.f32.mrb[0].mxu0
    %v959 = vadd.f32 0.0, %v958
    %v960 = vpop.f32.mrb[0].mxu0
    %961 = vmatprep.mubr.f32.mxu0 0.0
    %962 = vmatmul.mubr.f32.gmra.mrb[0].mxu0 %v877
    %v963 = vpop.f32.mrb[0].mxu0
    %v964 = vadd.f32 0.0, %v963
    %v965 = vpop.f32.mrb[0].mxu0
    %966 = vmatprep.mubr.f32.mxu0 0.0
    %967 = vmatmul.mubr.f32.gmra.mrb[0].mxu0 %v879
    %v968 = vpop.f32.mrb[0].mxu0
    %v969 = vadd.f32 0.0, %v968
    %v970 = vpop.f32.mrb[0].mxu0
    %971 = vmatprep.mubr.f32.mxu0 0.0
    %972 = vmatmul.mubr.f32.gmra.mrb[0].mxu0 %v881
    %v973 = vpop.f32.mrb[0].mxu0
    %v974 = vadd.f32 0.0, %v973
    %v975 = vpop.f32.mrb[0].mxu0
    %976 = vdwg.mxu0
    %v977 = vadd.f32 %v735, %v949
    %v978 = vadd.f32 %v736, %v954
    %v979 = vadd.f32 %v737, %v959
    %v980 = vadd.f32 %v738, %v964
    %v981 = vadd.f32 %v739, %v969
    %v982 = vadd.f32 %v740, %v974
    %v983 = vld [vmem:[#allocation5 + $0x200] sm:$0xff]
    %v984 = vld [vmem:[#allocation5 + $0x208] sm:$0xff]
    %v985 = vld [vmem:[#allocation5 + $0x210] sm:$0xff]
    %v986 = vld [vmem:[#allocation5 + $0x218] sm:$0xff]
    %v987 = vld [vmem:[#allocation5 + $0x220] sm:$0xff]
    %v988 = vld [vmem:[#allocation5 + $0x228] sm:$0xff]
    %v989 = vld [vmem:[#allocation5 + $0x230] sm:$0xff]
    %v990 = vld [vmem:[#allocation5 + $0x238] sm:$0xff]
    %v991 = vld [vmem:[#allocation5 + $0x240] sm:$0xff]
    %v992 = vld [vmem:[#allocation5 + $0x248] sm:$0xff]
    %v993 = vld [vmem:[#allocation5 + $0x250] sm:$0xff]
    %v994 = vld [vmem:[#allocation5 + $0x258] sm:$0xff]
    %v995 = vld [vmem:[#allocation5 + $0x260] sm:$0xff]
    %v996 = vld [vmem:[#allocation5 + $0x268] sm:$0xff]
    %v997 = vld [vmem:[#allocation5 + $0x270] sm:$0xff]
    %v998 = vld [vmem:[#allocation5 + $0x278] sm:$0xff]
    %s999 = scalar_lea.vmem %s0, 4
    %v1000 = vld [vmem:[%s999] ss:$2 sm:$0xff]
    %s1001 = scalar_lea.vmem %s0, 20
    %v1002 = vld [vmem:[%s1001] ss:$2 sm:$0xff]
    %s1003 = scalar_lea.vmem %s0, 36
    %v1004 = vld [vmem:[%s1003] ss:$2 sm:$0xff]
    %s1005 = scalar_lea.vmem %s0, 52
    %v1006 = vld [vmem:[%s1005] ss:$2 sm:$0xff]
    %s1007 = scalar_lea.vmem %s0, 68
    %v1008 = vld [vmem:[%s1007] ss:$2 sm:$0xff]
    %s1009 = scalar_lea.vmem %s0, 84
    %v1010 = vld [vmem:[%s1009] ss:$2 sm:$0xff]
    %1011 = vmatprep.subr.mxu0 0.0
    %1012 = vmatpush1.msra.mxu0 %v983
    %1013 = vmatprep.subr.mxu0 0.0
    %1014 = vmatpush1.msra.mxu0 %v984
    %1015 = vmatprep.subr.mxu0 0.0
    %1016 = vmatpush1.msra.mxu0 %v985
    %1017 = vmatprep.subr.mxu0 0.0
    %1018 = vmatpush1.msra.mxu0 %v986
    %1019 = vmatprep.subr.mxu0 0.0
    %1020 = vmatpush1.msra.mxu0 %v987
    %1021 = vmatprep.subr.mxu0 0.0
    %1022 = vmatpush1.msra.mxu0 %v988
    %1023 = vmatprep.subr.mxu0 0.0
    %1024 = vmatpush1.msra.mxu0 %v989
    %1025 = vmatprep.subr.mxu0 0.0
    %1026 = vmatpush1.msra.mxu0 %v990
    %1027 = vmatprep.subr.mxu0 0.0
    %1028 = vmatpush1.msra.mxu0 %v991
    %1029 = vmatprep.subr.mxu0 0.0
    %1030 = vmatpush1.msra.mxu0 %v992
    %1031 = vmatprep.subr.mxu0 0.0
    %1032 = vmatpush1.msra.mxu0 %v993
    %1033 = vmatprep.subr.mxu0 0.0
    %1034 = vmatpush1.msra.mxu0 %v994
    %1035 = vmatprep.subr.mxu0 0.0
    %1036 = vmatpush1.msra.mxu0 %v995
    %1037 = vmatprep.subr.mxu0 0.0
    %1038 = vmatpush1.msra.mxu0 %v996
    %1039 = vmatprep.subr.mxu0 0.0
    %1040 = vmatpush1.msra.mxu0 %v997
    %1041 = vmatprep.subr.mxu0 0.0
    %1042 = vmatpush1.msra.mxu0 %v998
    %1043 = vmatprep.subr.mxu0 0.0
    %1044 = vmatpush1.msra.mxu0 0.0
    %1045 = vmatprep.subr.mxu0 0.0
    %1046 = vmatpush1.msra.mxu0 0.0
    %1047 = vmatprep.subr.mxu0 0.0
    %1048 = vmatpush1.msra.mxu0 0.0
    %1049 = vmatprep.subr.mxu0 0.0
    %1050 = vmatpush1.msra.mxu0 0.0
    %1051 = vmatprep.subr.mxu0 0.0
    %1052 = vmatpush1.msra.mxu0 0.0
    %1053 = vmatprep.subr.mxu0 0.0
    %1054 = vmatpush1.msra.mxu0 0.0
    %1055 = vmatprep.subr.mxu0 0.0
    %1056 = vmatpush1.msra.mxu0 0.0
    %1057 = vmatprep.subr.mxu0 0.0
    %1058 = vmatpush1.msra.mxu0 0.0
    %1059 = vmatprep.subr.mxu0 0.0
    %1060 = vmatpush1.msra.mxu0 0.0
    %1061 = vmatprep.subr.mxu0 0.0
    %1062 = vmatpush1.msra.mxu0 0.0
    %1063 = vmatprep.subr.mxu0 0.0
    %1064 = vmatpush1.msra.mxu0 0.0
    %1065 = vmatprep.subr.mxu0 0.0
    %1066 = vmatpush1.msra.mxu0 0.0
    %1067 = vmatprep.subr.mxu0 0.0
    %1068 = vmatpush1.msra.mxu0 0.0
    %1069 = vmatprep.subr.mxu0 0.0
    %1070 = vmatpush1.msra.mxu0 0.0
    %1071 = vmatprep.subr.mxu0 0.0
    %1072 = vmatpush1.msra.mxu0 0.0
    %1073 = vmatprep.subr.mxu0 0.0
    %1074 = vmatpush1.msra.mxu0 0.0
    %1075 = vmatprep.mubr.f32.mxu0 0.0
    %1076 = vmatmul.mubr.f32.gmra.mrb[0].mxu0 %v1000
    %v1077 = vpop.f32.mrb[0].mxu0
    %v1078 = vadd.f32 0.0, %v1077
    %v1079 = vpop.f32.mrb[0].mxu0
    %1080 = vmatprep.mubr.f32.mxu0 0.0
    %1081 = vmatmul.mubr.f32.gmra.mrb[0].mxu0 %v1002
    %v1082 = vpop.f32.mrb[0].mxu0
    %v1083 = vadd.f32 0.0, %v1082
    %v1084 = vpop.f32.mrb[0].mxu0
    %1085 = vmatprep.mubr.f32.mxu0 0.0
    %1086 = vmatmul.mubr.f32.gmra.mrb[0].mxu0 %v1004
    %v1087 = vpop.f32.mrb[0].mxu0
    %v1088 = vadd.f32 0.0, %v1087
    %v1089 = vpop.f32.mrb[0].mxu0
    %1090 = vmatprep.mubr.f32.mxu0 0.0
    %1091 = vmatmul.mubr.f32.gmra.mrb[0].mxu0 %v1006
    %v1092 = vpop.f32.mrb[0].mxu0
    %v1093 = vadd.f32 0.0, %v1092
    %v1094 = vpop.f32.mrb[0].mxu0
    %1095 = vmatprep.mubr.f32.mxu0 0.0
    %1096 = vmatmul.mubr.f32.gmra.mrb[0].mxu0 %v1008
    %v1097 = vpop.f32.mrb[0].mxu0
    %v1098 = vadd.f32 0.0, %v1097
    %v1099 = vpop.f32.mrb[0].mxu0
    %1100 = vmatprep.mubr.f32.mxu0 0.0
    %1101 = vmatmul.mubr.f32.gmra.mrb[0].mxu0 %v1010
    %v1102 = vpop.f32.mrb[0].mxu0
    %v1103 = vadd.f32 0.0, %v1102
    %v1104 = vpop.f32.mrb[0].mxu0
    %1105 = vdwg.mxu0
    %v1106 = vadd.f32 %v864, %v1078
    %v1107 = vadd.f32 %v865, %v1083
    %v1108 = vadd.f32 %v866, %v1088
    %v1109 = vadd.f32 %v867, %v1093
    %v1110 = vadd.f32 %v868, %v1098
    %v1111 = vadd.f32 %v869, %v1103
    %s1112 = scalar_lea.vmem %s0, 104
    %v1113 = vld [vmem:[%s1112] ss:$2 sm:$0xff]
    %s1114 = scalar_lea.vmem %s0, 120
    %v1115 = vld [vmem:[%s1114] ss:$2 sm:$0xff]
    %s1116 = scalar_lea.vmem %s0, 136
    %v1117 = vld [vmem:[%s1116] ss:$2 sm:$0xff]
    %s1118 = scalar_lea.vmem %s0, 152
    %v1119 = vld [vmem:[%s1118] ss:$2 sm:$0xff]
    %s1120 = scalar_lea.vmem %s0, 168
    %v1121 = vld [vmem:[%s1120] ss:$2 sm:$0xff]
    %s1122 = scalar_lea.vmem %s0, 184
    %v1123 = vld [vmem:[%s1122] ss:$2 sm:$0xff]
    %1124 = vmatprep.subr.mxu0 0.0
    %1125 = vmatpush1.msra.mxu0 %v983
    %1126 = vmatprep.subr.mxu0 0.0
    %1127 = vmatpush1.msra.mxu0 %v984
    %1128 = vmatprep.subr.mxu0 0.0
    %1129 = vmatpush1.msra.mxu0 %v985
    %1130 = vmatprep.subr.mxu0 0.0
    %1131 = vmatpush1.msra.mxu0 %v986
    %1132 = vmatprep.subr.mxu0 0.0
    %1133 = vmatpush1.msra.mxu0 %v987
    %1134 = vmatprep.subr.mxu0 0.0
    %1135 = vmatpush1.msra.mxu0 %v988
    %1136 = vmatprep.subr.mxu0 0.0
    %1137 = vmatpush1.msra.mxu0 %v989
    %1138 = vmatprep.subr.mxu0 0.0
    %1139 = vmatpush1.msra.mxu0 %v990
    %1140 = vmatprep.subr.mxu0 0.0
    %1141 = vmatpush1.msra.mxu0 %v991
    %1142 = vmatprep.subr.mxu0 0.0
    %1143 = vmatpush1.msra.mxu0 %v992
    %1144 = vmatprep.subr.mxu0 0.0
    %1145 = vmatpush1.msra.mxu0 %v993
    %1146 = vmatprep.subr.mxu0 0.0
    %1147 = vmatpush1.msra.mxu0 %v994
    %1148 = vmatprep.subr.mxu0 0.0
    %1149 = vmatpush1.msra.mxu0 %v995
    %1150 = vmatprep.subr.mxu0 0.0
    %1151 = vmatpush1.msra.mxu0 %v996
    %1152 = vmatprep.subr.mxu0 0.0
    %1153 = vmatpush1.msra.mxu0 %v997
    %1154 = vmatprep.subr.mxu0 0.0
    %1155 = vmatpush1.msra.mxu0 %v998
    %1156 = vmatprep.subr.mxu0 0.0
    %1157 = vmatpush1.msra.mxu0 0.0
    %1158 = vmatprep.subr.mxu0 0.0
    %1159 = vmatpush1.msra.mxu0 0.0
    %1160 = vmatprep.subr.mxu0 0.0
    %1161 = vmatpush1.msra.mxu0 0.0
    %1162 = vmatprep.subr.mxu0 0.0
    %1163 = vmatpush1.msra.mxu0 0.0
    %1164 = vmatprep.subr.mxu0 0.0
    %1165 = vmatpush1.msra.mxu0 0.0
    %1166 = vmatprep.subr.mxu0 0.0
    %1167 = vmatpush1.msra.mxu0 0.0
    %1168 = vmatprep.subr.mxu0 0.0
    %1169 = vmatpush1.msra.mxu0 0.0
    %1170 = vmatprep.subr.mxu0 0.0
    %1171 = vmatpush1.msra.mxu0 0.0
    %1172 = vmatprep.subr.mxu0 0.0
    %1173 = vmatpush1.msra.mxu0 0.0
    %1174 = vmatprep.subr.mxu0 0.0
    %1175 = vmatpush1.msra.mxu0 0.0
    %1176 = vmatprep.subr.mxu0 0.0
    %1177 = vmatpush1.msra.mxu0 0.0
    %1178 = vmatprep.subr.mxu0 0.0
    %1179 = vmatpush1.msra.mxu0 0.0
    %1180 = vmatprep.subr.mxu0 0.0
    %1181 = vmatpush1.msra.mxu0 0.0
    %1182 = vmatprep.subr.mxu0 0.0
    %1183 = vmatpush1.msra.mxu0 0.0
    %1184 = vmatprep.subr.mxu0 0.0
    %1185 = vmatpush1.msra.mxu0 0.0
    %1186 = vmatprep.subr.mxu0 0.0
    %1187 = vmatpush1.msra.mxu0 0.0
    %1188 = vmatprep.mubr.f32.mxu0 0.0
    %1189 = vmatmul.mubr.f32.gmra.mrb[0].mxu0 %v1113
    %v1190 = vpop.f32.mrb[0].mxu0
    %v1191 = vadd.f32 0.0, %v1190
    %v1192 = vpop.f32.mrb[0].mxu0
    %1193 = vmatprep.mubr.f32.mxu0 0.0
    %1194 = vmatmul.mubr.f32.gmra.mrb[0].mxu0 %v1115
    %v1195 = vpop.f32.mrb[0].mxu0
    %v1196 = vadd.f32 0.0, %v1195
    %v1197 = vpop.f32.mrb[0].mxu0
    %1198 = vmatprep.mubr.f32.mxu0 0.0
    %1199 = vmatmul.mubr.f32.gmra.mrb[0].mxu0 %v1117
    %v1200 = vpop.f32.mrb[0].mxu0
    %v1201 = vadd.f32 0.0, %v1200
    %v1202 = vpop.f32.mrb[0].mxu0
    %1203 = vmatprep.mubr.f32.mxu0 0.0
    %1204 = vmatmul.mubr.f32.gmra.mrb[0].mxu0 %v1119
    %v1205 = vpop.f32.mrb[0].mxu0
    %v1206 = vadd.f32 0.0, %v1205
    %v1207 = vpop.f32.mrb[0].mxu0
    %1208 = vmatprep.mubr.f32.mxu0 0.0
    %1209 = vmatmul.mubr.f32.gmra.mrb[0].mxu0 %v1121
    %v1210 = vpop.f32.mrb[0].mxu0
    %v1211 = vadd.f32 0.0, %v1210
    %v1212 = vpop.f32.mrb[0].mxu0
    %1213 = vmatprep.mubr.f32.mxu0 0.0
    %1214 = vmatmul.mubr.f32.gmra.mrb[0].mxu0 %v1123
    %v1215 = vpop.f32.mrb[0].mxu0
    %v1216 = vadd.f32 0.0, %v1215
    %v1217 = vpop.f32.mrb[0].mxu0
    %1218 = vdwg.mxu0
    %v1219 = vadd.f32 %v977, %v1191
    %v1220 = vadd.f32 %v978, %v1196
    %v1221 = vadd.f32 %v979, %v1201
    %v1222 = vadd.f32 %v980, %v1206
    %v1223 = vadd.f32 %v981, %v1211
    %v1224 = vadd.f32 %v982, %v1216
    %v1225 = vadd.f32 %v1106, %v1107
    %v1226 = vadd.f32 %v1225, %v1108
    %v1227 = vadd.f32 %v1226, %v1109
    %v1228 = vadd.f32 %v1227, %v1110
    %v1229 = vadd.f32 %v1228, %v1111
    %v1230 = vrot.slane %v1229, 4
    %v1231 = vadd.f32 %v1229, %v1230
    %v1232 = vrot.slane %v1231, 2
    %v1233 = vadd.f32 %v1231, %v1232
    %v1234 = vrot.slane %v1233, 1
    %v1235 = vadd.f32 %v1233, %v1234
    %v1236 = vmul.f32 %v1106, %v1106
    %v1237 = vmul.f32 %v1107, %v1107
    %v1238 = vmul.f32 %v1108, %v1108
    %v1239 = vmul.f32 %v1109, %v1109
    %v1240 = vmul.f32 %v1110, %v1110
    %v1241 = vmul.f32 %v1111, %v1111
    %v1242 = vadd.f32 %v1236, %v1237
    %v1243 = vadd.f32 %v1242, %v1238
    %v1244 = vadd.f32 %v1243, %v1239
    %v1245 = vadd.f32 %v1244, %v1240
    %v1246 = vadd.f32 %v1245, %v1241
    %v1247 = vrot.slane %v1246, 4
    %v1248 = vadd.f32 %v1246, %v1247
    %v1249 = vrot.slane %v1248, 2
    %v1250 = vadd.f32 %v1248, %v1249
    %v1251 = vrot.slane %v1250, 1
    %v1252 = vadd.f32 %v1250, %v1251
    %v1253 = vadd.f32 %v1219, %v1220
    %v1254 = vadd.f32 %v1253, %v1221
    %v1255 = vadd.f32 %v1254, %v1222
    %v1256 = vadd.f32 %v1255, %v1223
    %v1257 = vadd.f32 %v1256, %v1224
    %v1258 = vrot.slane %v1257, 4
    %v1259 = vadd.f32 %v1257, %v1258
    %v1260 = vrot.slane %v1259, 2
    %v1261 = vadd.f32 %v1259, %v1260
    %v1262 = vrot.slane %v1261, 1
    %v1263 = vadd.f32 %v1261, %v1262
    %v1264 = vadd.f32 %v1235, %v1263
    %v1265 = vmul.f32 %v1219, %v1219
    %v1266 = vmul.f32 %v1220, %v1220
    %v1267 = vmul.f32 %v1221, %v1221
    %v1268 = vmul.f32 %v1222, %v1222
    %v1269 = vmul.f32 %v1223, %v1223
    %v1270 = vmul.f32 %v1224, %v1224
    %v1271 = vadd.f32 %v1265, %v1266
    %v1272 = vadd.f32 %v1271, %v1267
    %v1273 = vadd.f32 %v1272, %v1268
    %v1274 = vadd.f32 %v1273, %v1269
    %v1275 = vadd.f32 %v1274, %v1270
    %v1276 = vrot.slane %v1275, 4
    %v1277 = vadd.f32 %v1275, %v1276
    %v1278 = vrot.slane %v1277, 2
    %v1279 = vadd.f32 %v1277, %v1278
    %v1280 = vrot.slane %v1279, 1
    %v1281 = vadd.f32 %v1279, %v1280
    %v1282 = vadd.f32 %v1252, %v1281
    %v1283 = vmul.f32 %v1264, 0.010416667
    %v1284 = vmul.f32 %v1282, 0.010416667
    %v1285 = vmul.f32 %v1283, %v1283
    %v1286 = vsub.f32 %v1284, %v1285
    %v1287 = vld [vmem:[#allocation7] sm:$0x1]
    %v1288 = vld [vmem:[#allocation7 + $0x1] sm:$0x1]
    %v1289 = vadd.f32 %v1286, 1e-05
    %v1290 = vrsqrt.pop %v1289
    %v1291 = vmul.f32 %v1287, %v1290
    %v1292 = vmul.f32 %v1283, %v1291
    %v1293 = vsub.f32 %v1288, %v1292
    %v1294 = vlaneseq
    %v1295 = vshrl.u32 %v1294, 7
    %v1296 = vsub.s32 0, %v1295
    %v1297 = vrot.slane %v1291, %v1296
    %v1298 = vmul.f32 %v1106, %v1297
    %v1299 = vmul.f32 %v1107, %v1297
    %v1300 = vmul.f32 %v1108, %v1297
    %v1301 = vmul.f32 %v1109, %v1297
    %v1302 = vmul.f32 %v1110, %v1297
    %v1303 = vmul.f32 %v1111, %v1297
    %v1304 = vlaneseq
    %v1305 = vshrl.u32 %v1304, 7
    %v1306 = vsub.s32 0, %v1305
    %v1307 = vrot.slane %v1293, %v1306
    %v1308 = vadd.f32 %v1298, %v1307
    %v1309 = vadd.f32 %v1299, %v1307
    %v1310 = vadd.f32 %v1300, %v1307
    %v1311 = vadd.f32 %v1301, %v1307
    %v1312 = vadd.f32 %v1302, %v1307
    %v1313 = vadd.f32 %v1303, %v1307
    %vm1314 = vcmp.ge.f32.partialorder %v1308, 0.0
    %vm1315 = vcmp.ge.f32.partialorder %v1309, 0.0
    %vm1316 = vcmp.ge.f32.partialorder %v1310, 0.0
    %vm1317 = vcmp.ge.f32.partialorder %v1311, 0.0
    %vm1318 = vcmp.ge.f32.partialorder %v1312, 0.0
    %vm1319 = vcmp.ge.f32.partialorder %v1313, 0.0
    %v1320 = vmul.f32 %v1308, 0.1
    %v1321 = vmul.f32 %v1309, 0.1
    %v1322 = vmul.f32 %v1310, 0.1
    %v1323 = vmul.f32 %v1311, 0.1
    %v1324 = vmul.f32 %v1312, 0.1
    %v1325 = vmul.f32 %v1313, 0.1
    %v1326 = vsel %vm1314, %v1308, %v1320
    %v1327 = vsel %vm1315, %v1309, %v1321
    %v1328 = vsel %vm1316, %v1310, %v1322
    %v1329 = vsel %vm1317, %v1311, %v1323
    %v1330 = vsel %vm1318, %v1312, %v1324
    %v1331 = vsel %vm1319, %v1313, %v1325
    %1332 = vst [vmem:[#allocation2] sm:$0xff] %v1326
    %1333 = vst [vmem:[#allocation2 + $0x8] sm:$0xff] %v1327
    %1334 = vst [vmem:[#allocation2 + $0x10] sm:$0xff] %v1328
    %1335 = vst [vmem:[#allocation2 + $0x18] sm:$0xff] %v1329
    %1336 = vst [vmem:[#allocation2 + $0x20] sm:$0xff] %v1330
    %1337 = vst [vmem:[#allocation2 + $0x28] sm:$0xff] %v1331
    %v1338 = vmul.f32 %v1219, %v1297
    %v1339 = vmul.f32 %v1220, %v1297
    %v1340 = vmul.f32 %v1221, %v1297
    %v1341 = vmul.f32 %v1222, %v1297
    %v1342 = vmul.f32 %v1223, %v1297
    %v1343 = vmul.f32 %v1224, %v1297
    %v1344 = vadd.f32 %v1338, %v1307
    %v1345 = vadd.f32 %v1339, %v1307
    %v1346 = vadd.f32 %v1340, %v1307
    %v1347 = vadd.f32 %v1341, %v1307
    %v1348 = vadd.f32 %v1342, %v1307
    %v1349 = vadd.f32 %v1343, %v1307
    %vm1350 = vcmp.ge.f32.partialorder %v1344, 0.0
    %vm1351 = vcmp.ge.f32.partialorder %v1345, 0.0
    %vm1352 = vcmp.ge.f32.partialorder %v1346, 0.0
    %vm1353 = vcmp.ge.f32.partialorder %v1347, 0.0
    %vm1354 = vcmp.ge.f32.partialorder %v1348, 0.0
    %vm1355 = vcmp.ge.f32.partialorder %v1349, 0.0
    %v1356 = vmul.f32 %v1344, 0.1
    %v1357 = vmul.f32 %v1345, 0.1
    %v1358 = vmul.f32 %v1346, 0.1
    %v1359 = vmul.f32 %v1347, 0.1
    %v1360 = vmul.f32 %v1348, 0.1
    %v1361 = vmul.f32 %v1349, 0.1
    %v1362 = vsel %vm1350, %v1344, %v1356
    %v1363 = vsel %vm1351, %v1345, %v1357
    %v1364 = vsel %vm1352, %v1346, %v1358
    %v1365 = vsel %vm1353, %v1347, %v1359
    %v1366 = vsel %vm1354, %v1348, %v1360
    %v1367 = vsel %vm1355, %v1349, %v1361
    %1368 = vst [vmem:[#allocation2 + $0x30] sm:$0xff] %v1362
    %1369 = vst [vmem:[#allocation2 + $0x38] sm:$0xff] %v1363
    %1370 = vst [vmem:[#allocation2 + $0x40] sm:$0xff] %v1364
    %1371 = vst [vmem:[#allocation2 + $0x48] sm:$0xff] %v1365
    %1372 = vst [vmem:[#allocation2 + $0x50] sm:$0xff] %v1366
    %1373 = vst [vmem:[#allocation2 + $0x58] sm:$0xff] %v1367
    %v1374 = vld [vmem:[#allocation5 + $0x280] sm:$0xff]
    %v1375 = vld [vmem:[#allocation5 + $0x288] sm:$0xff]
    %v1376 = vld [vmem:[#allocation5 + $0x290] sm:$0xff]
    %v1377 = vld [vmem:[#allocation5 + $0x298] sm:$0xff]
    %v1378 = vld [vmem:[#allocation5 + $0x2a0] sm:$0xff]
    %v1379 = vld [vmem:[#allocation5 + $0x2a8] sm:$0xff]
    %v1380 = vld [vmem:[#allocation5 + $0x2b0] sm:$0xff]
    %v1381 = vld [vmem:[#allocation5 + $0x2b8] sm:$0xff]
    %v1382 = vld [vmem:[#allocation5 + $0x2c0] sm:$0xff]
    %v1383 = vld [vmem:[#allocation5 + $0x2c8] sm:$0xff]
    %v1384 = vld [vmem:[#allocation5 + $0x2d0] sm:$0xff]
    %v1385 = vld [vmem:[#allocation5 + $0x2d8] sm:$0xff]
    %v1386 = vld [vmem:[#allocation5 + $0x2e0] sm:$0xff]
    %v1387 = vld [vmem:[#allocation5 + $0x2e8] sm:$0xff]
    %v1388 = vld [vmem:[#allocation5 + $0x2f0] sm:$0xff]
    %v1389 = vld [vmem:[#allocation5 + $0x2f8] sm:$0xff]
    %v1390 = vld [vmem:[#allocation2] ss:$2 sm:$0xff]
    %s1391 = scalar_lea.vmem [#allocation2], 16
    %v1392 = vld [vmem:[%s1391] ss:$2 sm:$0xff]
    %s1393 = scalar_lea.vmem [#allocation2], 32
    %v1394 = vld [vmem:[%s1393] ss:$2 sm:$0x3f]
    %s1395 = scalar_lea.vmem [#allocation2], 48
    %v1396 = vld [vmem:[%s1395] ss:$2 sm:$0xff]
    %s1397 = scalar_lea.vmem [#allocation2], 64
    %v1398 = vld [vmem:[%s1397] ss:$2 sm:$0xff]
    %s1399 = scalar_lea.vmem [#allocation2], 80
    %v1400 = vld [vmem:[%s1399] ss:$2 sm:$0x3f]
    %v1401 = vld [vmem:[#allocation5 + $0x300] sm:$0xff]
    %v1402 = vld [vmem:[#allocation5 + $0x308] sm:$0xff]
    %v1403 = vld [vmem:[#allocation5 + $0x310] sm:$0xff]
    %v1404 = vld [vmem:[#allocation5 + $0x318] sm:$0xff]
    %v1405 = vld [vmem:[#allocation5 + $0x320] sm:$0xff]
    %v1406 = vld [vmem:[#allocation5 + $0x328] sm:$0xff]
    %v1407 = vld [vmem:[#allocation5 + $0x330] sm:$0xff]
    %v1408 = vld [vmem:[#allocation5 + $0x338] sm:$0xff]
    %v1409 = vld [vmem:[#allocation5 + $0x340] sm:$0xff]
    %v1410 = vld [vmem:[#allocation5 + $0x348] sm:$0xff]
    %v1411 = vld [vmem:[#allocation5 + $0x350] sm:$0xff]
    %v1412 = vld [vmem:[#allocation5 + $0x358] sm:$0xff]
    %v1413 = vld [vmem:[#allocation5 + $0x360] sm:$0xff]
    %v1414 = vld [vmem:[#allocation5 + $0x368] sm:$0xff]
    %v1415 = vld [vmem:[#allocation5 + $0x370] sm:$0xff]
    %v1416 = vld [vmem:[#allocation5 + $0x378] sm:$0xff]
    %s1417 = scalar_lea.vmem [#allocation2], 1
    %v1418 = vld [vmem:[%s1417] ss:$2 sm:$0xff]
    %s1419 = scalar_lea.vmem [#allocation2], 17
    %v1420 = vld [vmem:[%s1419] ss:$2 sm:$0xff]
    %s1421 = scalar_lea.vmem [#allocation2], 33
    %v1422 = vld [vmem:[%s1421] ss:$2 sm:$0x3f]
    %1423 = vmatprep.subr.mxu0 0.0
    %1424 = vmatpush1.msra.mxu0 %v1401
    %1425 = vmatprep.subr.mxu0 0.0
    %1426 = vmatpush1.msra.mxu0 %v1402
    %1427 = vmatprep.subr.mxu0 0.0
    %1428 = vmatpush1.msra.mxu0 %v1403
    %1429 = vmatprep.subr.mxu0 0.0
    %1430 = vmatpush1.msra.mxu0 %v1404
    %1431 = vmatprep.subr.mxu0 0.0
    %1432 = vmatpush1.msra.mxu0 %v1405
    %1433 = vmatprep.subr.mxu0 0.0
    %1434 = vmatpush1.msra.mxu0 %v1406
    %1435 = vmatprep.subr.mxu0 0.0
    %1436 = vmatpush1.msra.mxu0 %v1407
    %1437 = vmatprep.subr.mxu0 0.0
    %1438 = vmatpush1.msra.mxu0 %v1408
    %1439 = vmatprep.subr.mxu0 0.0
    %1440 = vmatpush1.msra.mxu0 %v1409
    %1441 = vmatprep.subr.mxu0 0.0
    %1442 = vmatpush1.msra.mxu0 %v1410
    %1443 = vmatprep.subr.mxu0 0.0
    %1444 = vmatpush1.msra.mxu0 %v1411
    %1445 = vmatprep.subr.mxu0 0.0
    %1446 = vmatpush1.msra.mxu0 %v1412
    %1447 = vmatprep.subr.mxu0 0.0
    %1448 = vmatpush1.msra.mxu0 %v1413
    %1449 = vmatprep.subr.mxu0 0.0
    %1450 = vmatpush1.msra.mxu0 %v1414
    %1451 = vmatprep.subr.mxu0 0.0
    %1452 = vmatpush1.msra.mxu0 %v1415
    %1453 = vmatprep.subr.mxu0 0.0
    %1454 = vmatpush1.msra.mxu0 %v1416
    %1455 = vmatprep.subr.mxu0 0.0
    %1456 = vmatpush1.msra.mxu0 0.0
    %1457 = vmatprep.subr.mxu0 0.0
    %1458 = vmatpush1.msra.mxu0 0.0
    %1459 = vmatprep.subr.mxu0 0.0
    %1460 = vmatpush1.msra.mxu0 0.0
    %1461 = vmatprep.subr.mxu0 0.0
    %1462 = vmatpush1.msra.mxu0 0.0
    %1463 = vmatprep.subr.mxu0 0.0
    %1464 = vmatpush1.msra.mxu0 0.0
    %1465 = vmatprep.subr.mxu0 0.0
    %1466 = vmatpush1.msra.mxu0 0.0
    %1467 = vmatprep.subr.mxu0 0.0
    %1468 = vmatpush1.msra.mxu0 0.0
    %1469 = vmatprep.subr.mxu0 0.0
    %1470 = vmatpush1.msra.mxu0 0.0
    %1471 = vmatprep.subr.mxu0 0.0
    %1472 = vmatpush1.msra.mxu0 0.0
    %1473 = vmatprep.subr.mxu0 0.0
    %1474 = vmatpush1.msra.mxu0 0.0
    %1475 = vmatprep.subr.mxu0 0.0
    %1476 = vmatpush1.msra.mxu0 0.0
    %1477 = vmatprep.subr.mxu0 0.0
    %1478 = vmatpush1.msra.mxu0 0.0
    %1479 = vmatprep.subr.mxu0 0.0
    %1480 = vmatpush1.msra.mxu0 0.0
    %1481 = vmatprep.subr.mxu0 0.0
    %1482 = vmatpush1.msra.mxu0 0.0
    %1483 = vmatprep.subr.mxu0 0.0
    %1484 = vmatpush1.msra.mxu0 0.0
    %1485 = vmatprep.subr.mxu0 0.0
    %1486 = vmatpush1.msra.mxu0 0.0
    %1487 = vmatprep.mubr.f32.mxu0 0.0
    %1488 = vmatmul.mubr.f32.gmra.mrb[0].mxu0 %v1418
    %v1489 = vpop.f32.mrb[0].mxu0
    %v1490 = vadd.f32 0.0, %v1489
    %v1491 = vpop.f32.mrb[0].mxu0
    %1492 = vmatprep.mubr.f32.mxu0 0.0
    %1493 = vmatmul.mubr.f32.gmra.mrb[0].mxu0 %v1420
    %v1494 = vpop.f32.mrb[0].mxu0
    %v1495 = vadd.f32 0.0, %v1494
    %v1496 = vpop.f32.mrb[0].mxu0
    %1497 = vmatprep.mubr.f32.mxu0 0.0
    %1498 = vmatmul.mubr.f32.gmra.mrb[0].mxu0 %v1422
    %v1499 = vpop.f32.mrb[0].mxu0
    %v1500 = vadd.f32 0.0, %v1499
    %v1501 = vpop.f32.mrb[0].mxu0
    %1502 = vdwg.mxu0
    %1503 = vmatprep.subr.mxu0 0.0
    %1504 = vmatpush1.msra.mxu0 %v1374
    %1505 = vmatprep.subr.mxu0 0.0
    %1506 = vmatpush1.msra.mxu0 %v1375
    %1507 = vmatprep.subr.mxu0 0.0
    %1508 = vmatpush1.msra.mxu0 %v1376
    %1509 = vmatprep.subr.mxu0 0.0
    %1510 = vmatpush1.msra.mxu0 %v1377
    %1511 = vmatprep.subr.mxu0 0.0
    %1512 = vmatpush1.msra.mxu0 %v1378
    %1513 = vmatprep.subr.mxu0 0.0
    %1514 = vmatpush1.msra.mxu0 %v1379
    %1515 = vmatprep.subr.mxu0 0.0
    %1516 = vmatpush1.msra.mxu0 %v1380
    %1517 = vmatprep.subr.mxu0 0.0
    %1518 = vmatpush1.msra.mxu0 %v1381
    %1519 = vmatprep.subr.mxu0 0.0
    %1520 = vmatpush1.msra.mxu0 %v1382
    %1521 = vmatprep.subr.mxu0 0.0
    %1522 = vmatpush1.msra.mxu0 %v1383
    %1523 = vmatprep.subr.mxu0 0.0
    %1524 = vmatpush1.msra.mxu0 %v1384
    %1525 = vmatprep.subr.mxu0 0.0
    %1526 = vmatpush1.msra.mxu0 %v1385
    %1527 = vmatprep.subr.mxu0 0.0
    %1528 = vmatpush1.msra.mxu0 %v1386
    %1529 = vmatprep.subr.mxu0 0.0
    %1530 = vmatpush1.msra.mxu0 %v1387
    %1531 = vmatprep.subr.mxu0 0.0
    %1532 = vmatpush1.msra.mxu0 %v1388
    %1533 = vmatprep.subr.mxu0 0.0
    %1534 = vmatpush1.msra.mxu0 %v1389
    %1535 = vmatprep.subr.mxu0 0.0
    %1536 = vmatpush1.msra.mxu0 0.0
    %1537 = vmatprep.subr.mxu0 0.0
    %1538 = vmatpush1.msra.mxu0 0.0
    %1539 = vmatprep.subr.mxu0 0.0
    %1540 = vmatpush1.msra.mxu0 0.0
    %1541 = vmatprep.subr.mxu0 0.0
    %1542 = vmatpush1.msra.mxu0 0.0
    %1543 = vmatprep.subr.mxu0 0.0
    %1544 = vmatpush1.msra.mxu0 0.0
    %1545 = vmatprep.subr.mxu0 0.0
    %1546 = vmatpush1.msra.mxu0 0.0
    %1547 = vmatprep.subr.mxu0 0.0
    %1548 = vmatpush1.msra.mxu0 0.0
    %1549 = vmatprep.subr.mxu0 0.0
    %1550 = vmatpush1.msra.mxu0 0.0
    %1551 = vmatprep.subr.mxu0 0.0
    %1552 = vmatpush1.msra.mxu0 0.0
    %1553 = vmatprep.subr.mxu0 0.0
    %1554 = vmatpush1.msra.mxu0 0.0
    %1555 = vmatprep.subr.mxu0 0.0
    %1556 = vmatpush1.msra.mxu0 0.0
    %1557 = vmatprep.subr.mxu0 0.0
    %1558 = vmatpush1.msra.mxu0 0.0
    %1559 = vmatprep.subr.mxu0 0.0
    %1560 = vmatpush1.msra.mxu0 0.0
    %1561 = vmatprep.subr.mxu0 0.0
    %1562 = vmatpush1.msra.mxu0 0.0
    %1563 = vmatprep.subr.mxu0 0.0
    %1564 = vmatpush1.msra.mxu0 0.0
    %1565 = vmatprep.subr.mxu0 0.0
    %1566 = vmatpush1.msra.mxu0 0.0
    %1567 = vmatprep.mubr.f32.mxu0 0.0
    %1568 = vmatmul.mubr.f32.gmra.mrb[0].mxu0 %v1390
    %v1569 = vpop.f32.mrb[0].mxu0
    %v1570 = vadd.f32 %v1490, %v1569
    %v1571 = vpop.f32.mrb[0].mxu0
    %1572 = vmatprep.mubr.f32.mxu0 0.0
    %1573 = vmatmul.mubr.f32.gmra.mrb[0].mxu0 %v1392
    %v1574 = vpop.f32.mrb[0].mxu0
    %v1575 = vadd.f32 %v1495, %v1574
    %v1576 = vpop.f32.mrb[0].mxu0
    %1577 = vmatprep.mubr.f32.mxu0 0.0
    %1578 = vmatmul.mubr.f32.gmra.mrb[0].mxu0 %v1394
    %v1579 = vpop.f32.mrb[0].mxu0
    %v1580 = vadd.f32 %v1500, %v1579
    %v1581 = vpop.f32.mrb[0].mxu0
    %1582 = vdwg.mxu0
    %s1583 = scalar_lea.vmem [#allocation2], 49
    %v1584 = vld [vmem:[%s1583] ss:$2 sm:$0xff]
    %s1585 = scalar_lea.vmem [#allocation2], 65
    %v1586 = vld [vmem:[%s1585] ss:$2 sm:$0xff]
    %s1587 = scalar_lea.vmem [#allocation2], 81
    %v1588 = vld [vmem:[%s1587] ss:$2 sm:$0x3f]
    %1589 = vmatprep.subr.mxu0 0.0
    %1590 = vmatpush1.msra.mxu0 %v1401
    %1591 = vmatprep.subr.mxu0 0.0
    %1592 = vmatpush1.msra.mxu0 %v1402
    %1593 = vmatprep.subr.mxu0 0.0
    %1594 = vmatpush1.msra.mxu0 %v1403
    %1595 = vmatprep.subr.mxu0 0.0
    %1596 = vmatpush1.msra.mxu0 %v1404
    %1597 = vmatprep.subr.mxu0 0.0
    %1598 = vmatpush1.msra.mxu0 %v1405
    %1599 = vmatprep.subr.mxu0 0.0
    %1600 = vmatpush1.msra.mxu0 %v1406
    %1601 = vmatprep.subr.mxu0 0.0
    %1602 = vmatpush1.msra.mxu0 %v1407
    %1603 = vmatprep.subr.mxu0 0.0
    %1604 = vmatpush1.msra.mxu0 %v1408
    %1605 = vmatprep.subr.mxu0 0.0
    %1606 = vmatpush1.msra.mxu0 %v1409
    %1607 = vmatprep.subr.mxu0 0.0
    %1608 = vmatpush1.msra.mxu0 %v1410
    %1609 = vmatprep.subr.mxu0 0.0
    %1610 = vmatpush1.msra.mxu0 %v1411
    %1611 = vmatprep.subr.mxu0 0.0
    %1612 = vmatpush1.msra.mxu0 %v1412
    %1613 = vmatprep.subr.mxu0 0.0
    %1614 = vmatpush1.msra.mxu0 %v1413
    %1615 = vmatprep.subr.mxu0 0.0
    %1616 = vmatpush1.msra.mxu0 %v1414
    %1617 = vmatprep.subr.mxu0 0.0
    %1618 = vmatpush1.msra.mxu0 %v1415
    %1619 = vmatprep.subr.mxu0 0.0
    %1620 = vmatpush1.msra.mxu0 %v1416
    %1621 = vmatprep.subr.mxu0 0.0
    %1622 = vmatpush1.msra.mxu0 0.0
    %1623 = vmatprep.subr.mxu0 0.0
    %1624 = vmatpush1.msra.mxu0 0.0
    %1625 = vmatprep.subr.mxu0 0.0
    %1626 = vmatpush1.msra.mxu0 0.0
    %1627 = vmatprep.subr.mxu0 0.0
    %1628 = vmatpush1.msra.mxu0 0.0
    %1629 = vmatprep.subr.mxu0 0.0
    %1630 = vmatpush1.msra.mxu0 0.0
    %1631 = vmatprep.subr.mxu0 0.0
    %1632 = vmatpush1.msra.mxu0 0.0
    %1633 = vmatprep.subr.mxu0 0.0
    %1634 = vmatpush1.msra.mxu0 0.0
    %1635 = vmatprep.subr.mxu0 0.0
    %1636 = vmatpush1.msra.mxu0 0.0
    %1637 = vmatprep.subr.mxu0 0.0
    %1638 = vmatpush1.msra.mxu0 0.0
    %1639 = vmatprep.subr.mxu0 0.0
    %1640 = vmatpush1.msra.mxu0 0.0
    %1641 = vmatprep.subr.mxu0 0.0
    %1642 = vmatpush1.msra.mxu0 0.0
    %1643 = vmatprep.subr.mxu0 0.0
    %1644 = vmatpush1.msra.mxu0 0.0
    %1645 = vmatprep.subr.mxu0 0.0
    %1646 = vmatpush1.msra.mxu0 0.0
    %1647 = vmatprep.subr.mxu0 0.0
    %1648 = vmatpush1.msra.mxu0 0.0
    %1649 = vmatprep.subr.mxu0 0.0
    %1650 = vmatpush1.msra.mxu0 0.0
    %1651 = vmatprep.subr.mxu0 0.0
    %1652 = vmatpush1.msra.mxu0 0.0
    %1653 = vmatprep.mubr.f32.mxu0 0.0
    %1654 = vmatmul.mubr.f32.gmra.mrb[0].mxu0 %v1584
    %v1655 = vpop.f32.mrb[0].mxu0
    %v1656 = vadd.f32 0.0, %v1655
    %v1657 = vpop.f32.mrb[0].mxu0
    %1658 = vmatprep.mubr.f32.mxu0 0.0
    %1659 = vmatmul.mubr.f32.gmra.mrb[0].mxu0 %v1586
    %v1660 = vpop.f32.mrb[0].mxu0
    %v1661 = vadd.f32 0.0, %v1660
    %v1662 = vpop.f32.mrb[0].mxu0
    %1663 = vmatprep.mubr.f32.mxu0 0.0
    %1664 = vmatmul.mubr.f32.gmra.mrb[0].mxu0 %v1588
    %v1665 = vpop.f32.mrb[0].mxu0
    %v1666 = vadd.f32 0.0, %v1665
    %v1667 = vpop.f32.mrb[0].mxu0
    %1668 = vdwg.mxu0
    %1669 = vmatprep.subr.mxu0 0.0
    %1670 = vmatpush1.msra.mxu0 %v1374
    %1671 = vmatprep.subr.mxu0 0.0
    %1672 = vmatpush1.msra.mxu0 %v1375
    %1673 = vmatprep.subr.mxu0 0.0
    %1674 = vmatpush1.msra.mxu0 %v1376
    %1675 = vmatprep.subr.mxu0 0.0
    %1676 = vmatpush1.msra.mxu0 %v1377
    %1677 = vmatprep.subr.mxu0 0.0
    %1678 = vmatpush1.msra.mxu0 %v1378
    %1679 = vmatprep.subr.mxu0 0.0
    %1680 = vmatpush1.msra.mxu0 %v1379
    %1681 = vmatprep.subr.mxu0 0.0
    %1682 = vmatpush1.msra.mxu0 %v1380
    %1683 = vmatprep.subr.mxu0 0.0
    %1684 = vmatpush1.msra.mxu0 %v1381
    %1685 = vmatprep.subr.mxu0 0.0
    %1686 = vmatpush1.msra.mxu0 %v1382
    %1687 = vmatprep.subr.mxu0 0.0
    %1688 = vmatpush1.msra.mxu0 %v1383
    %1689 = vmatprep.subr.mxu0 0.0
    %1690 = vmatpush1.msra.mxu0 %v1384
    %1691 = vmatprep.subr.mxu0 0.0
    %1692 = vmatpush1.msra.mxu0 %v1385
    %1693 = vmatprep.subr.mxu0 0.0
    %1694 = vmatpush1.msra.mxu0 %v1386
    %1695 = vmatprep.subr.mxu0 0.0
    %1696 = vmatpush1.msra.mxu0 %v1387
    %1697 = vmatprep.subr.mxu0 0.0
    %1698 = vmatpush1.msra.mxu0 %v1388
    %1699 = vmatprep.subr.mxu0 0.0
    %1700 = vmatpush1.msra.mxu0 %v1389
    %1701 = vmatprep.subr.mxu0 0.0
    %1702 = vmatpush1.msra.mxu0 0.0
    %1703 = vmatprep.subr.mxu0 0.0
    %1704 = vmatpush1.msra.mxu0 0.0
    %1705 = vmatprep.subr.mxu0 0.0
    %1706 = vmatpush1.msra.mxu0 0.0
    %1707 = vmatprep.subr.mxu0 0.0
    %1708 = vmatpush1.msra.mxu0 0.0
    %1709 = vmatprep.subr.mxu0 0.0
    %1710 = vmatpush1.msra.mxu0 0.0
    %1711 = vmatprep.subr.mxu0 0.0
    %1712 = vmatpush1.msra.mxu0 0.0
    %1713 = vmatprep.subr.mxu0 0.0
    %1714 = vmatpush1.msra.mxu0 0.0
    %1715 = vmatprep.subr.mxu0 0.0
    %1716 = vmatpush1.msra.mxu0 0.0
    %1717 = vmatprep.subr.mxu0 0.0
    %1718 = vmatpush1.msra.mxu0 0.0
    %1719 = vmatprep.subr.mxu0 0.0
    %1720 = vmatpush1.msra.mxu0 0.0
    %1721 = vmatprep.subr.mxu0 0.0
    %1722 = vmatpush1.msra.mxu0 0.0
    %1723 = vmatprep.subr.mxu0 0.0
    %1724 = vmatpush1.msra.mxu0 0.0
    %1725 = vmatprep.subr.mxu0 0.0
    %1726 = vmatpush1.msra.mxu0 0.0
    %1727 = vmatprep.subr.mxu0 0.0
    %1728 = vmatpush1.msra.mxu0 0.0
    %1729 = vmatprep.subr.mxu0 0.0
    %1730 = vmatpush1.msra.mxu0 0.0
    %1731 = vmatprep.subr.mxu0 0.0
    %1732 = vmatpush1.msra.mxu0 0.0
    %1733 = vmatprep.mubr.f32.mxu0 0.0
    %1734 = vmatmul.mubr.f32.gmra.mrb[0].mxu0 %v1396
    %v1735 = vpop.f32.mrb[0].mxu0
    %v1736 = vadd.f32 %v1656, %v1735
    %v1737 = vpop.f32.mrb[0].mxu0
    %1738 = vmatprep.mubr.f32.mxu0 0.0
    %1739 = vmatmul.mubr.f32.gmra.mrb[0].mxu0 %v1398
    %v1740 = vpop.f32.mrb[0].mxu0
    %v1741 = vadd.f32 %v1661, %v1740
    %v1742 = vpop.f32.mrb[0].mxu0
    %1743 = vmatprep.mubr.f32.mxu0 0.0
    %1744 = vmatmul.mubr.f32.gmra.mrb[0].mxu0 %v1400
    %v1745 = vpop.f32.mrb[0].mxu0
    %v1746 = vadd.f32 %v1666, %v1745
    %v1747 = vpop.f32.mrb[0].mxu0
    %1748 = vdwg.mxu0
    %v1749 = vld [vmem:[#allocation5 + $0x380] sm:$0xff]
    %v1750 = vld [vmem:[#allocation5 + $0x388] sm:$0xff]
    %v1751 = vld [vmem:[#allocation5 + $0x390] sm:$0xff]
    %v1752 = vld [vmem:[#allocation5 + $0x398] sm:$0xff]
    %v1753 = vld [vmem:[#allocation5 + $0x3a0] sm:$0xff]
    %v1754 = vld [vmem:[#allocation5 + $0x3a8] sm:$0xff]
    %v1755 = vld [vmem:[#allocation5 + $0x3b0] sm:$0xff]
    %v1756 = vld [vmem:[#allocation5 + $0x3b8] sm:$0xff]
    %v1757 = vld [vmem:[#allocation5 + $0x3c0] sm:$0xff]
    %v1758 = vld [vmem:[#allocation5 + $0x3c8] sm:$0xff]
    %v1759 = vld [vmem:[#allocation5 + $0x3d0] sm:$0xff]
    %v1760 = vld [vmem:[#allocation5 + $0x3d8] sm:$0xff]
    %v1761 = vld [vmem:[#allocation5 + $0x3e0] sm:$0xff]
    %v1762 = vld [vmem:[#allocation5 + $0x3e8] sm:$0xff]
    %v1763 = vld [vmem:[#allocation5 + $0x3f0] sm:$0xff]
    %v1764 = vld [vmem:[#allocation5 + $0x3f8] sm:$0xff]
    %s1765 = scalar_lea.vmem [#allocation2], 2
    %v1766 = vld [vmem:[%s1765] ss:$2 sm:$0xff]
    %s1767 = scalar_lea.vmem [#allocation2], 18
    %v1768 = vld [vmem:[%s1767] ss:$2 sm:$0xff]
    %s1769 = scalar_lea.vmem [#allocation2], 34
    %v1770 = vld [vmem:[%s1769] ss:$2 sm:$0x3f]
    %1771 = vmatprep.subr.mxu0 0.0
    %1772 = vmatpush1.msra.mxu0 %v1749
    %1773 = vmatprep.subr.mxu0 0.0
    %1774 = vmatpush1.msra.mxu0 %v1750
    %1775 = vmatprep.subr.mxu0 0.0
    %1776 = vmatpush1.msra.mxu0 %v1751
    %1777 = vmatprep.subr.mxu0 0.0
    %1778 = vmatpush1.msra.mxu0 %v1752
    %1779 = vmatprep.subr.mxu0 0.0
    %1780 = vmatpush1.msra.mxu0 %v1753
    %1781 = vmatprep.subr.mxu0 0.0
    %1782 = vmatpush1.msra.mxu0 %v1754
    %1783 = vmatprep.subr.mxu0 0.0
    %1784 = vmatpush1.msra.mxu0 %v1755
    %1785 = vmatprep.subr.mxu0 0.0
    %1786 = vmatpush1.msra.mxu0 %v1756
    %1787 = vmatprep.subr.mxu0 0.0
    %1788 = vmatpush1.msra.mxu0 %v1757
    %1789 = vmatprep.subr.mxu0 0.0
    %1790 = vmatpush1.msra.mxu0 %v1758
    %1791 = vmatprep.subr.mxu0 0.0
    %1792 = vmatpush1.msra.mxu0 %v1759
    %1793 = vmatprep.subr.mxu0 0.0
    %1794 = vmatpush1.msra.mxu0 %v1760
    %1795 = vmatprep.subr.mxu0 0.0
    %1796 = vmatpush1.msra.mxu0 %v1761
    %1797 = vmatprep.subr.mxu0 0.0
    %1798 = vmatpush1.msra.mxu0 %v1762
    %1799 = vmatprep.subr.mxu0 0.0
    %1800 = vmatpush1.msra.mxu0 %v1763
    %1801 = vmatprep.subr.mxu0 0.0
    %1802 = vmatpush1.msra.mxu0 %v1764
    %1803 = vmatprep.subr.mxu0 0.0
    %1804 = vmatpush1.msra.mxu0 0.0
    %1805 = vmatprep.subr.mxu0 0.0
    %1806 = vmatpush1.msra.mxu0 0.0
    %1807 = vmatprep.subr.mxu0 0.0
    %1808 = vmatpush1.msra.mxu0 0.0
    %1809 = vmatprep.subr.mxu0 0.0
    %1810 = vmatpush1.msra.mxu0 0.0
    %1811 = vmatprep.subr.mxu0 0.0
    %1812 = vmatpush1.msra.mxu0 0.0
    %1813 = vmatprep.subr.mxu0 0.0
    %1814 = vmatpush1.msra.mxu0 0.0
    %1815 = vmatprep.subr.mxu0 0.0
    %1816 = vmatpush1.msra.mxu0 0.0
    %1817 = vmatprep.subr.mxu0 0.0
    %1818 = vmatpush1.msra.mxu0 0.0
    %1819 = vmatprep.subr.mxu0 0.0
    %1820 = vmatpush1.msra.mxu0 0.0
    %1821 = vmatprep.subr.mxu0 0.0
    %1822 = vmatpush1.msra.mxu0 0.0
    %1823 = vmatprep.subr.mxu0 0.0
    %1824 = vmatpush1.msra.mxu0 0.0
    %1825 = vmatprep.subr.mxu0 0.0
    %1826 = vmatpush1.msra.mxu0 0.0
    %1827 = vmatprep.subr.mxu0 0.0
    %1828 = vmatpush1.msra.mxu0 0.0
    %1829 = vmatprep.subr.mxu0 0.0
    %1830 = vmatpush1.msra.mxu0 0.0
    %1831 = vmatprep.subr.mxu0 0.0
    %1832 = vmatpush1.msra.mxu0 0.0
    %1833 = vmatprep.subr.mxu0 0.0
    %1834 = vmatpush1.msra.mxu0 0.0
    %1835 = vmatprep.mubr.f32.mxu0 0.0
    %1836 = vmatmul.mubr.f32.gmra.mrb[0].mxu0 %v1766
    %v1837 = vpop.f32.mrb[0].mxu0
    %v1838 = vadd.f32 0.0, %v1837
    %v1839 = vpop.f32.mrb[0].mxu0
    %1840 = vmatprep.mubr.f32.mxu0 0.0
    %1841 = vmatmul.mubr.f32.gmra.mrb[0].mxu0 %v1768
    %v1842 = vpop.f32.mrb[0].mxu0
    %v1843 = vadd.f32 0.0, %v1842
    %v1844 = vpop.f32.mrb[0].mxu0
    %1845 = vmatprep.mubr.f32.mxu0 0.0
    %1846 = vmatmul.mubr.f32.gmra.mrb[0].mxu0 %v1770
    %v1847 = vpop.f32.mrb[0].mxu0
    %v1848 = vadd.f32 0.0, %v1847
    %v1849 = vpop.f32.mrb[0].mxu0
    %1850 = vdwg.mxu0
    %v1851 = vadd.f32 %v1570, %v1838
    %v1852 = vadd.f32 %v1575, %v1843
    %v1853 = vadd.f32 %v1580, %v1848
    %s1854 = scalar_lea.vmem [#allocation2], 50
    %v1855 = vld [vmem:[%s1854] ss:$2 sm:$0xff]
    %s1856 = scalar_lea.vmem [#allocation2], 66
    %v1857 = vld [vmem:[%s1856] ss:$2 sm:$0xff]
    %s1858 = scalar_lea.vmem [#allocation2], 82
    %v1859 = vld [vmem:[%s1858] ss:$2 sm:$0x3f]
    %1860 = vmatprep.subr.mxu0 0.0
    %1861 = vmatpush1.msra.mxu0 %v1749
    %1862 = vmatprep.subr.mxu0 0.0
    %1863 = vmatpush1.msra.mxu0 %v1750
    %1864 = vmatprep.subr.mxu0 0.0
    %1865 = vmatpush1.msra.mxu0 %v1751
    %1866 = vmatprep.subr.mxu0 0.0
    %1867 = vmatpush1.msra.mxu0 %v1752
    %1868 = vmatprep.subr.mxu0 0.0
    %1869 = vmatpush1.msra.mxu0 %v1753
    %1870 = vmatprep.subr.mxu0 0.0
    %1871 = vmatpush1.msra.mxu0 %v1754
    %1872 = vmatprep.subr.mxu0 0.0
    %1873 = vmatpush1.msra.mxu0 %v1755
    %1874 = vmatprep.subr.mxu0 0.0
    %1875 = vmatpush1.msra.mxu0 %v1756
    %1876 = vmatprep.subr.mxu0 0.0
    %1877 = vmatpush1.msra.mxu0 %v1757
    %1878 = vmatprep.subr.mxu0 0.0
    %1879 = vmatpush1.msra.mxu0 %v1758
    %1880 = vmatprep.subr.mxu0 0.0
    %1881 = vmatpush1.msra.mxu0 %v1759
    %1882 = vmatprep.subr.mxu0 0.0
    %1883 = vmatpush1.msra.mxu0 %v1760
    %1884 = vmatprep.subr.mxu0 0.0
    %1885 = vmatpush1.msra.mxu0 %v1761
    %1886 = vmatprep.subr.mxu0 0.0
    %1887 = vmatpush1.msra.mxu0 %v1762
    %1888 = vmatprep.subr.mxu0 0.0
    %1889 = vmatpush1.msra.mxu0 %v1763
    %1890 = vmatprep.subr.mxu0 0.0
    %1891 = vmatpush1.msra.mxu0 %v1764
    %1892 = vmatprep.subr.mxu0 0.0
    %1893 = vmatpush1.msra.mxu0 0.0
    %1894 = vmatprep.subr.mxu0 0.0
    %1895 = vmatpush1.msra.mxu0 0.0
    %1896 = vmatprep.subr.mxu0 0.0
    %1897 = vmatpush1.msra.mxu0 0.0
    %1898 = vmatprep.subr.mxu0 0.0
    %1899 = vmatpush1.msra.mxu0 0.0
    %1900 = vmatprep.subr.mxu0 0.0
    %1901 = vmatpush1.msra.mxu0 0.0
    %1902 = vmatprep.subr.mxu0 0.0
    %1903 = vmatpush1.msra.mxu0 0.0
    %1904 = vmatprep.subr.mxu0 0.0
    %1905 = vmatpush1.msra.mxu0 0.0
    %1906 = vmatprep.subr.mxu0 0.0
    %1907 = vmatpush1.msra.mxu0 0.0
    %1908 = vmatprep.subr.mxu0 0.0
    %1909 = vmatpush1.msra.mxu0 0.0
    %1910 = vmatprep.subr.mxu0 0.0
    %1911 = vmatpush1.msra.mxu0 0.0
    %1912 = vmatprep.subr.mxu0 0.0
    %1913 = vmatpush1.msra.mxu0 0.0
    %1914 = vmatprep.subr.mxu0 0.0
    %1915 = vmatpush1.msra.mxu0 0.0
    %1916 = vmatprep.subr.mxu0 0.0
    %1917 = vmatpush1.msra.mxu0 0.0
    %1918 = vmatprep.subr.mxu0 0.0
    %1919 = vmatpush1.msra.mxu0 0.0
    %1920 = vmatprep.subr.mxu0 0.0
    %1921 = vmatpush1.msra.mxu0 0.0
    %1922 = vmatprep.subr.mxu0 0.0
    %1923 = vmatpush1.msra.mxu0 0.0
    %1924 = vmatprep.mubr.f32.mxu0 0.0
    %1925 = vmatmul.mubr.f32.gmra.mrb[0].mxu0 %v1855
    %v1926 = vpop.f32.mrb[0].mxu0
    %v1927 = vadd.f32 0.0, %v1926
    %v1928 = vpop.f32.mrb[0].mxu0
    %1929 = vmatprep.mubr.f32.mxu0 0.0
    %1930 = vmatmul.mubr.f32.gmra.mrb[0].mxu0 %v1857
    %v1931 = vpop.f32.mrb[0].mxu0
    %v1932 = vadd.f32 0.0, %v1931
    %v1933 = vpop.f32.mrb[0].mxu0
    %1934 = vmatprep.mubr.f32.mxu0 0.0
    %1935 = vmatmul.mubr.f32.gmra.mrb[0].mxu0 %v1859
    %v1936 = vpop.f32.mrb[0].mxu0
    %v1937 = vadd.f32 0.0, %v1936
    %v1938 = vpop.f32.mrb[0].mxu0
    %1939 = vdwg.mxu0
    %v1940 = vadd.f32 %v1736, %v1927
    %v1941 = vadd.f32 %v1741, %v1932
    %v1942 = vadd.f32 %v1746, %v1937
    %v1943 = vld [vmem:[#allocation5 + $0x400] sm:$0xff]
    %v1944 = vld [vmem:[#allocation5 + $0x408] sm:$0xff]
    %v1945 = vld [vmem:[#allocation5 + $0x410] sm:$0xff]
    %v1946 = vld [vmem:[#allocation5 + $0x418] sm:$0xff]
    %v1947 = vld [vmem:[#allocation5 + $0x420] sm:$0xff]
    %v1948 = vld [vmem:[#allocation5 + $0x428] sm:$0xff]
    %v1949 = vld [vmem:[#allocation5 + $0x430] sm:$0xff]
    %v1950 = vld [vmem:[#allocation5 + $0x438] sm:$0xff]
    %v1951 = vld [vmem:[#allocation5 + $0x440] sm:$0xff]
    %v1952 = vld [vmem:[#allocation5 + $0x448] sm:$0xff]
    %v1953 = vld [vmem:[#allocation5 + $0x450] sm:$0xff]
    %v1954 = vld [vmem:[#allocation5 + $0x458] sm:$0xff]
    %v1955 = vld [vmem:[#allocation5 + $0x460] sm:$0xff]
    %v1956 = vld [vmem:[#allocation5 + $0x468] sm:$0xff]
    %v1957 = vld [vmem:[#allocation5 + $0x470] sm:$0xff]
    %v1958 = vld [vmem:[#allocation5 + $0x478] sm:$0xff]
    %s1959 = scalar_lea.vmem [#allocation2], 3
    %v1960 = vld [vmem:[%s1959] ss:$2 sm:$0xff]
    %s1961 = scalar_lea.vmem [#allocation2], 19
    %v1962 = vld [vmem:[%s1961] ss:$2 sm:$0xff]
    %s1963 = scalar_lea.vmem [#allocation2], 35
    %v1964 = vld [vmem:[%s1963] ss:$2 sm:$0x3f]
    %1965 = vmatprep.subr.mxu0 0.0
    %1966 = vmatpush1.msra.mxu0 %v1943
    %1967 = vmatprep.subr.mxu0 0.0
    %1968 = vmatpush1.msra.mxu0 %v1944
    %1969 = vmatprep.subr.mxu0 0.0
    %1970 = vmatpush1.msra.mxu0 %v1945
    %1971 = vmatprep.subr.mxu0 0.0
    %1972 = vmatpush1.msra.mxu0 %v1946
    %1973 = vmatprep.subr.mxu0 0.0
    %1974 = vmatpush1.msra.mxu0 %v1947
    %1975 = vmatprep.subr.mxu0 0.0
    %1976 = vmatpush1.msra.mxu0 %v1948
    %1977 = vmatprep.subr.mxu0 0.0
    %1978 = vmatpush1.msra.mxu0 %v1949
    %1979 = vmatprep.subr.mxu0 0.0
    %1980 = vmatpush1.msra.mxu0 %v1950
    %1981 = vmatprep.subr.mxu0 0.0
    %1982 = vmatpush1.msra.mxu0 %v1951
    %1983 = vmatprep.subr.mxu0 0.0
    %1984 = vmatpush1.msra.mxu0 %v1952
    %1985 = vmatprep.subr.mxu0 0.0
    %1986 = vmatpush1.msra.mxu0 %v1953
    %1987 = vmatprep.subr.mxu0 0.0
    %1988 = vmatpush1.msra.mxu0 %v1954
    %1989 = vmatprep.subr.mxu0 0.0
    %1990 = vmatpush1.msra.mxu0 %v1955
    %1991 = vmatprep.subr.mxu0 0.0
    %1992 = vmatpush1.msra.mxu0 %v1956
    %1993 = vmatprep.subr.mxu0 0.0
    %1994 = vmatpush1.msra.mxu0 %v1957
    %1995 = vmatprep.subr.mxu0 0.0
    %1996 = vmatpush1.msra.mxu0 %v1958
    %1997 = vmatprep.subr.mxu0 0.0
    %1998 = vmatpush1.msra.mxu0 0.0
    %1999 = vmatprep.subr.mxu0 0.0
    %2000 = vmatpush1.msra.mxu0 0.0
    %2001 = vmatprep.subr.mxu0 0.0
    %2002 = vmatpush1.msra.mxu0 0.0
    %2003 = vmatprep.subr.mxu0 0.0
    %2004 = vmatpush1.msra.mxu0 0.0
    %2005 = vmatprep.subr.mxu0 0.0
    %2006 = vmatpush1.msra.mxu0 0.0
    %2007 = vmatprep.subr.mxu0 0.0
    %2008 = vmatpush1.msra.mxu0 0.0
    %2009 = vmatprep.subr.mxu0 0.0
    %2010 = vmatpush1.msra.mxu0 0.0
    %2011 = vmatprep.subr.mxu0 0.0
    %2012 = vmatpush1.msra.mxu0 0.0
    %2013 = vmatprep.subr.mxu0 0.0
    %2014 = vmatpush1.msra.mxu0 0.0
    %2015 = vmatprep.subr.mxu0 0.0
    %2016 = vmatpush1.msra.mxu0 0.0
    %2017 = vmatprep.subr.mxu0 0.0
    %2018 = vmatpush1.msra.mxu0 0.0
    %2019 = vmatprep.subr.mxu0 0.0
    %2020 = vmatpush1.msra.mxu0 0.0
    %2021 = vmatprep.subr.mxu0 0.0
    %2022 = vmatpush1.msra.mxu0 0.0
    %2023 = vmatprep.subr.mxu0 0.0
    %2024 = vmatpush1.msra.mxu0 0.0
    %2025 = vmatprep.subr.mxu0 0.0
    %2026 = vmatpush1.msra.mxu0 0.0
    %2027 = vmatprep.subr.mxu0 0.0
    %2028 = vmatpush1.msra.mxu0 0.0
    %2029 = vmatprep.mubr.f32.mxu0 0.0
    %2030 = vmatmul.mubr.f32.gmra.mrb[0].mxu0 %v1960
    %v2031 = vpop.f32.mrb[0].mxu0
    %v2032 = vadd.f32 0.0, %v2031
    %v2033 = vpop.f32.mrb[0].mxu0
    %2034 = vmatprep.mubr.f32.mxu0 0.0
    %2035 = vmatmul.mubr.f32.gmra.mrb[0].mxu0 %v1962
    %v2036 = vpop.f32.mrb[0].mxu0
    %v2037 = vadd.f32 0.0, %v2036
    %v2038 = vpop.f32.mrb[0].mxu0
    %2039 = vmatprep.mubr.f32.mxu0 0.0
    %2040 = vmatmul.mubr.f32.gmra.mrb[0].mxu0 %v1964
    %v2041 = vpop.f32.mrb[0].mxu0
    %v2042 = vadd.f32 0.0, %v2041
    %v2043 = vpop.f32.mrb[0].mxu0
    %2044 = vdwg.mxu0
    %v2045 = vadd.f32 %v1851, %v2032
    %v2046 = vadd.f32 %v1852, %v2037
    %v2047 = vadd.f32 %v1853, %v2042
    %s2048 = scalar_lea.vmem [#allocation2], 51
    %v2049 = vld [vmem:[%s2048] ss:$2 sm:$0xff]
    %s2050 = scalar_lea.vmem [#allocation2], 67
    %v2051 = vld [vmem:[%s2050] ss:$2 sm:$0xff]
    %s2052 = scalar_lea.vmem [#allocation2], 83
    %v2053 = vld [vmem:[%s2052] ss:$2 sm:$0x3f]
    %2054 = vmatprep.subr.mxu0 0.0
    %2055 = vmatpush1.msra.mxu0 %v1943
    %2056 = vmatprep.subr.mxu0 0.0
    %2057 = vmatpush1.msra.mxu0 %v1944
    %2058 = vmatprep.subr.mxu0 0.0
    %2059 = vmatpush1.msra.mxu0 %v1945
    %2060 = vmatprep.subr.mxu0 0.0
    %2061 = vmatpush1.msra.mxu0 %v1946
    %2062 = vmatprep.subr.mxu0 0.0
    %2063 = vmatpush1.msra.mxu0 %v1947
    %2064 = vmatprep.subr.mxu0 0.0
    %2065 = vmatpush1.msra.mxu0 %v1948
    %2066 = vmatprep.subr.mxu0 0.0
    %2067 = vmatpush1.msra.mxu0 %v1949
    %2068 = vmatprep.subr.mxu0 0.0
    %2069 = vmatpush1.msra.mxu0 %v1950
    %2070 = vmatprep.subr.mxu0 0.0
    %2071 = vmatpush1.msra.mxu0 %v1951
    %2072 = vmatprep.subr.mxu0 0.0
    %2073 = vmatpush1.msra.mxu0 %v1952
    %2074 = vmatprep.subr.mxu0 0.0
    %2075 = vmatpush1.msra.mxu0 %v1953
    %2076 = vmatprep.subr.mxu0 0.0
    %2077 = vmatpush1.msra.mxu0 %v1954
    %2078 = vmatprep.subr.mxu0 0.0
    %2079 = vmatpush1.msra.mxu0 %v1955
    %2080 = vmatprep.subr.mxu0 0.0
    %2081 = vmatpush1.msra.mxu0 %v1956
    %2082 = vmatprep.subr.mxu0 0.0
    %2083 = vmatpush1.msra.mxu0 %v1957
    %2084 = vmatprep.subr.mxu0 0.0
    %2085 = vmatpush1.msra.mxu0 %v1958
    %2086 = vmatprep.subr.mxu0 0.0
    %2087 = vmatpush1.msra.mxu0 0.0
    %2088 = vmatprep.subr.mxu0 0.0
    %2089 = vmatpush1.msra.mxu0 0.0
    %2090 = vmatprep.subr.mxu0 0.0
    %2091 = vmatpush1.msra.mxu0 0.0
    %2092 = vmatprep.subr.mxu0 0.0
    %2093 = vmatpush1.msra.mxu0 0.0
    %2094 = vmatprep.subr.mxu0 0.0
    %2095 = vmatpush1.msra.mxu0 0.0
    %2096 = vmatprep.subr.mxu0 0.0
    %2097 = vmatpush1.msra.mxu0 0.0
    %2098 = vmatprep.subr.mxu0 0.0
    %2099 = vmatpush1.msra.mxu0 0.0
    %2100 = vmatprep.subr.mxu0 0.0
    %2101 = vmatpush1.msra.mxu0 0.0
    %2102 = vmatprep.subr.mxu0 0.0
    %2103 = vmatpush1.msra.mxu0 0.0
    %2104 = vmatprep.subr.mxu0 0.0
    %2105 = vmatpush1.msra.mxu0 0.0
    %2106 = vmatprep.subr.mxu0 0.0
    %2107 = vmatpush1.msra.mxu0 0.0
    %2108 = vmatprep.subr.mxu0 0.0
    %2109 = vmatpush1.msra.mxu0 0.0
    %2110 = vmatprep.subr.mxu0 0.0
    %2111 = vmatpush1.msra.mxu0 0.0
    %2112 = vmatprep.subr.mxu0 0.0
    %2113 = vmatpush1.msra.mxu0 0.0
    %2114 = vmatprep.subr.mxu0 0.0
    %2115 = vmatpush1.msra.mxu0 0.0
    %2116 = vmatprep.subr.mxu0 0.0
    %2117 = vmatpush1.msra.mxu0 0.0
    %2118 = vmatprep.mubr.f32.mxu0 0.0
    %2119 = vmatmul.mubr.f32.gmra.mrb[0].mxu0 %v2049
    %v2120 = vpop.f32.mrb[0].mxu0
    %v2121 = vadd.f32 0.0, %v2120
    %v2122 = vpop.f32.mrb[0].mxu0
    %2123 = vmatprep.mubr.f32.mxu0 0.0
    %2124 = vmatmul.mubr.f32.gmra.mrb[0].mxu0 %v2051
    %v2125 = vpop.f32.mrb[0].mxu0
    %v2126 = vadd.f32 0.0, %v2125
    %v2127 = vpop.f32.mrb[0].mxu0
    %2128 = vmatprep.mubr.f32.mxu0 0.0
    %2129 = vmatmul.mubr.f32.gmra.mrb[0].mxu0 %v2053
    %v2130 = vpop.f32.mrb[0].mxu0
    %v2131 = vadd.f32 0.0, %v2130
    %v2132 = vpop.f32.mrb[0].mxu0
    %2133 = vdwg.mxu0
    %v2134 = vadd.f32 %v1940, %v2121
    %v2135 = vadd.f32 %v1941, %v2126
    %v2136 = vadd.f32 %v1942, %v2131
    %v2137 = vld [vmem:[#allocation5 + $0x480] sm:$0xff]
    %v2138 = vld [vmem:[#allocation5 + $0x488] sm:$0xff]
    %v2139 = vld [vmem:[#allocation5 + $0x490] sm:$0xff]
    %v2140 = vld [vmem:[#allocation5 + $0x498] sm:$0xff]
    %v2141 = vld [vmem:[#allocation5 + $0x4a0] sm:$0xff]
    %v2142 = vld [vmem:[#allocation5 + $0x4a8] sm:$0xff]
    %v2143 = vld [vmem:[#allocation5 + $0x4b0] sm:$0xff]
    %v2144 = vld [vmem:[#allocation5 + $0x4b8] sm:$0xff]
    %v2145 = vld [vmem:[#allocation5 + $0x4c0] sm:$0xff]
    %v2146 = vld [vmem:[#allocation5 + $0x4c8] sm:$0xff]
    %v2147 = vld [vmem:[#allocation5 + $0x4d0] sm:$0xff]
    %v2148 = vld [vmem:[#allocation5 + $0x4d8] sm:$0xff]
    %v2149 = vld [vmem:[#allocation5 + $0x4e0] sm:$0xff]
    %v2150 = vld [vmem:[#allocation5 + $0x4e8] sm:$0xff]
    %v2151 = vld [vmem:[#allocation5 + $0x4f0] sm:$0xff]
    %v2152 = vld [vmem:[#allocation5 + $0x4f8] sm:$0xff]
    %s2153 = scalar_lea.vmem [#allocation2], 4
    %v2154 = vld [vmem:[%s2153] ss:$2 sm:$0xff]
    %s2155 = scalar_lea.vmem [#allocation2], 20
    %v2156 = vld [vmem:[%s2155] ss:$2 sm:$0xff]
    %s2157 = scalar_lea.vmem [#allocation2], 36
    %v2158 = vld [vmem:[%s2157] ss:$2 sm:$0x3f]
    %2159 = vmatprep.subr.mxu0 0.0
    %2160 = vmatpush1.msra.mxu0 %v2137
    %2161 = vmatprep.subr.mxu0 0.0
    %2162 = vmatpush1.msra.mxu0 %v2138
    %2163 = vmatprep.subr.mxu0 0.0
    %2164 = vmatpush1.msra.mxu0 %v2139
    %2165 = vmatprep.subr.mxu0 0.0
    %2166 = vmatpush1.msra.mxu0 %v2140
    %2167 = vmatprep.subr.mxu0 0.0
    %2168 = vmatpush1.msra.mxu0 %v2141
    %2169 = vmatprep.subr.mxu0 0.0
    %2170 = vmatpush1.msra.mxu0 %v2142
    %2171 = vmatprep.subr.mxu0 0.0
    %2172 = vmatpush1.msra.mxu0 %v2143
    %2173 = vmatprep.subr.mxu0 0.0
    %2174 = vmatpush1.msra.mxu0 %v2144
    %2175 = vmatprep.subr.mxu0 0.0
    %2176 = vmatpush1.msra.mxu0 %v2145
    %2177 = vmatprep.subr.mxu0 0.0
    %2178 = vmatpush1.msra.mxu0 %v2146
    %2179 = vmatprep.subr.mxu0 0.0
    %2180 = vmatpush1.msra.mxu0 %v2147
    %2181 = vmatprep.subr.mxu0 0.0
    %2182 = vmatpush1.msra.mxu0 %v2148
    %2183 = vmatprep.subr.mxu0 0.0
    %2184 = vmatpush1.msra.mxu0 %v2149
    %2185 = vmatprep.subr.mxu0 0.0
    %2186 = vmatpush1.msra.mxu0 %v2150
    %2187 = vmatprep.subr.mxu0 0.0
    %2188 = vmatpush1.msra.mxu0 %v2151
    %2189 = vmatprep.subr.mxu0 0.0
    %2190 = vmatpush1.msra.mxu0 %v2152
    %2191 = vmatprep.subr.mxu0 0.0
    %2192 = vmatpush1.msra.mxu0 0.0
    %2193 = vmatprep.subr.mxu0 0.0
    %2194 = vmatpush1.msra.mxu0 0.0
    %2195 = vmatprep.subr.mxu0 0.0
    %2196 = vmatpush1.msra.mxu0 0.0
    %2197 = vmatprep.subr.mxu0 0.0
    %2198 = vmatpush1.msra.mxu0 0.0
    %2199 = vmatprep.subr.mxu0 0.0
    %2200 = vmatpush1.msra.mxu0 0.0
    %2201 = vmatprep.subr.mxu0 0.0
    %2202 = vmatpush1.msra.mxu0 0.0
    %2203 = vmatprep.subr.mxu0 0.0
    %2204 = vmatpush1.msra.mxu0 0.0
    %2205 = vmatprep.subr.mxu0 0.0
    %2206 = vmatpush1.msra.mxu0 0.0
    %2207 = vmatprep.subr.mxu0 0.0
    %2208 = vmatpush1.msra.mxu0 0.0
    %2209 = vmatprep.subr.mxu0 0.0
    %2210 = vmatpush1.msra.mxu0 0.0
    %2211 = vmatprep.subr.mxu0 0.0
    %2212 = vmatpush1.msra.mxu0 0.0
    %2213 = vmatprep.subr.mxu0 0.0
    %2214 = vmatpush1.msra.mxu0 0.0
    %2215 = vmatprep.subr.mxu0 0.0
    %2216 = vmatpush1.msra.mxu0 0.0
    %2217 = vmatprep.subr.mxu0 0.0
    %2218 = vmatpush1.msra.mxu0 0.0
    %2219 = vmatprep.subr.mxu0 0.0
    %2220 = vmatpush1.msra.mxu0 0.0
    %2221 = vmatprep.subr.mxu0 0.0
    %2222 = vmatpush1.msra.mxu0 0.0
    %2223 = vmatprep.mubr.f32.mxu0 0.0
    %2224 = vmatmul.mubr.f32.gmra.mrb[0].mxu0 %v2154
    %v2225 = vpop.f32.mrb[0].mxu0
    %v2226 = vadd.f32 0.0, %v2225
    %v2227 = vpop.f32.mrb[0].mxu0
    %2228 = vmatprep.mubr.f32.mxu0 0.0
    %2229 = vmatmul.mubr.f32.gmra.mrb[0].mxu0 %v2156
    %v2230 = vpop.f32.mrb[0].mxu0
    %v2231 = vadd.f32 0.0, %v2230
    %v2232 = vpop.f32.mrb[0].mxu0
    %2233 = vmatprep.mubr.f32.mxu0 0.0
    %2234 = vmatmul.mubr.f32.gmra.mrb[0].mxu0 %v2158
    %v2235 = vpop.f32.mrb[0].mxu0
    %v2236 = vadd.f32 0.0, %v2235
    %v2237 = vpop.f32.mrb[0].mxu0
    %2238 = vdwg.mxu0
    %v2239 = vadd.f32 %v2045, %v2226
    %v2240 = vadd.f32 %v2046, %v2231
    %v2241 = vadd.f32 %v2047, %v2236
    %s2242 = scalar_lea.vmem [#allocation2], 52
    %v2243 = vld [vmem:[%s2242] ss:$2 sm:$0xff]
    %s2244 = scalar_lea.vmem [#allocation2], 68
    %v2245 = vld [vmem:[%s2244] ss:$2 sm:$0xff]
    %s2246 = scalar_lea.vmem [#allocation2], 84
    %v2247 = vld [vmem:[%s2246] ss:$2 sm:$0x3f]
    %2248 = vmatprep.subr.mxu0 0.0
    %2249 = vmatpush1.msra.mxu0 %v2137
    %2250 = vmatprep.subr.mxu0 0.0
    %2251 = vmatpush1.msra.mxu0 %v2138
    %2252 = vmatprep.subr.mxu0 0.0
    %2253 = vmatpush1.msra.mxu0 %v2139
    %2254 = vmatprep.subr.mxu0 0.0
    %2255 = vmatpush1.msra.mxu0 %v2140
    %2256 = vmatprep.subr.mxu0 0.0
    %2257 = vmatpush1.msra.mxu0 %v2141
    %2258 = vmatprep.subr.mxu0 0.0
    %2259 = vmatpush1.msra.mxu0 %v2142
    %2260 = vmatprep.subr.mxu0 0.0
    %2261 = vmatpush1.msra.mxu0 %v2143
    %2262 = vmatprep.subr.mxu0 0.0
    %2263 = vmatpush1.msra.mxu0 %v2144
    %2264 = vmatprep.subr.mxu0 0.0
    %2265 = vmatpush1.msra.mxu0 %v2145
    %2266 = vmatprep.subr.mxu0 0.0
    %2267 = vmatpush1.msra.mxu0 %v2146
    %2268 = vmatprep.subr.mxu0 0.0
    %2269 = vmatpush1.msra.mxu0 %v2147
    %2270 = vmatprep.subr.mxu0 0.0
    %2271 = vmatpush1.msra.mxu0 %v2148
    %2272 = vmatprep.subr.mxu0 0.0
    %2273 = vmatpush1.msra.mxu0 %v2149
    %2274 = vmatprep.subr.mxu0 0.0
    %2275 = vmatpush1.msra.mxu0 %v2150
    %2276 = vmatprep.subr.mxu0 0.0
    %2277 = vmatpush1.msra.mxu0 %v2151
    %2278 = vmatprep.subr.mxu0 0.0
    %2279 = vmatpush1.msra.mxu0 %v2152
    %2280 = vmatprep.subr.mxu0 0.0
    %2281 = vmatpush1.msra.mxu0 0.0
    %2282 = vmatprep.subr.mxu0 0.0
    %2283 = vmatpush1.msra.mxu0 0.0
    %2284 = vmatprep.subr.mxu0 0.0
    %2285 = vmatpush1.msra.mxu0 0.0
    %2286 = vmatprep.subr.mxu0 0.0
    %2287 = vmatpush1.msra.mxu0 0.0
    %2288 = vmatprep.subr.mxu0 0.0
    %2289 = vmatpush1.msra.mxu0 0.0
    %2290 = vmatprep.subr.mxu0 0.0
    %2291 = vmatpush1.msra.mxu0 0.0
    %2292 = vmatprep.subr.mxu0 0.0
    %2293 = vmatpush1.msra.mxu0 0.0
    %2294 = vmatprep.subr.mxu0 0.0
    %2295 = vmatpush1.msra.mxu0 0.0
    %2296 = vmatprep.subr.mxu0 0.0
    %2297 = vmatpush1.msra.mxu0 0.0
    %2298 = vmatprep.subr.mxu0 0.0
    %2299 = vmatpush1.msra.mxu0 0.0
    %2300 = vmatprep.subr.mxu0 0.0
    %2301 = vmatpush1.msra.mxu0 0.0
    %2302 = vmatprep.subr.mxu0 0.0
    %2303 = vmatpush1.msra.mxu0 0.0
    %2304 = vmatprep.subr.mxu0 0.0
    %2305 = vmatpush1.msra.mxu0 0.0
    %2306 = vmatprep.subr.mxu0 0.0
    %2307 = vmatpush1.msra.mxu0 0.0
    %2308 = vmatprep.subr.mxu0 0.0
    %2309 = vmatpush1.msra.mxu0 0.0
    %2310 = vmatprep.subr.mxu0 0.0
    %2311 = vmatpush1.msra.mxu0 0.0
    %2312 = vmatprep.mubr.f32.mxu0 0.0
    %2313 = vmatmul.mubr.f32.gmra.mrb[0].mxu0 %v2243
    %v2314 = vpop.f32.mrb[0].mxu0
    %v2315 = vadd.f32 0.0, %v2314
    %v2316 = vpop.f32.mrb[0].mxu0
    %2317 = vmatprep.mubr.f32.mxu0 0.0
    %2318 = vmatmul.mubr.f32.gmra.mrb[0].mxu0 %v2245
    %v2319 = vpop.f32.mrb[0].mxu0
    %v2320 = vadd.f32 0.0, %v2319
    %v2321 = vpop.f32.mrb[0].mxu0
    %2322 = vmatprep.mubr.f32.mxu0 0.0
    %2323 = vmatmul.mubr.f32.gmra.mrb[0].mxu0 %v2247
    %v2324 = vpop.f32.mrb[0].mxu0
    %v2325 = vadd.f32 0.0, %v2324
    %v2326 = vpop.f32.mrb[0].mxu0
    %2327 = vdwg.mxu0
    %v2328 = vadd.f32 %v2134, %v2315
    %v2329 = vadd.f32 %v2135, %v2320
    %v2330 = vadd.f32 %v2136, %v2325
    %v2331 = vadd.f32 %v2239, %v2240
    %vm2332 = vcmask 1045504
    %v2333 = vsel %vm2332, %v2241, 0.0
    %v2334 = vadd.f32 %v2331, %v2333
    %v2335 = vrot.slane %v2334, 4
    %v2336 = vadd.f32 %v2334, %v2335
    %v2337 = vrot.slane %v2336, 2
    %v2338 = vadd.f32 %v2336, %v2337
    %v2339 = vrot.slane %v2338, 1
    %v2340 = vadd.f32 %v2338, %v2339
    %v2341 = vmul.f32 %v2239, %v2239
    %v2342 = vmul.f32 %v2240, %v2240
    %v2343 = vmul.f32 %v2241, %v2241
    %v2344 = vadd.f32 %v2341, %v2342
    %v2345 = vsel %vm2332, %v2343, 0.0
    %v2346 = vadd.f32 %v2344, %v2345
    %v2347 = vrot.slane %v2346, 4
    %v2348 = vadd.f32 %v2346, %v2347
    %v2349 = vrot.slane %v2348, 2
    %v2350 = vadd.f32 %v2348, %v2349
    %v2351 = vrot.slane %v2350, 1
    %v2352 = vadd.f32 %v2350, %v2351
    %v2353 = vadd.f32 %v2328, %v2329
    %v2354 = vsel %vm2332, %v2330, 0.0
    %v2355 = vadd.f32 %v2353, %v2354
    %v2356 = vrot.slane %v2355, 4
    %v2357 = vadd.f32 %v2355, %v2356
    %v2358 = vrot.slane %v2357, 2
    %v2359 = vadd.f32 %v2357, %v2358
    %v2360 = vrot.slane %v2359, 1
    %v2361 = vadd.f32 %v2359, %v2360
    %v2362 = vadd.f32 %v2340, %v2361
    %v2363 = vmul.f32 %v2328, %v2328
    %v2364 = vmul.f32 %v2329, %v2329
    %v2365 = vmul.f32 %v2330, %v2330
    %v2366 = vadd.f32 %v2363, %v2364
    %v2367 = vsel %vm2332, %v2365, 0.0
    %v2368 = vadd.f32 %v2366, %v2367
    %v2369 = vrot.slane %v2368, 4
    %v2370 = vadd.f32 %v2368, %v2369
    %v2371 = vrot.slane %v2370, 2
    %v2372 = vadd.f32 %v2370, %v2371
    %v2373 = vrot.slane %v2372, 1
    %v2374 = vadd.f32 %v2372, %v2373
    %v2375 = vadd.f32 %v2352, %v2374
    %v2376 = vmul.f32 %v2362, 0.022727273
    %v2377 = vmul.f32 %v2375, 0.022727273
    %v2378 = vmul.f32 %v2376, %v2376
    %v2379 = vsub.f32 %v2377, %v2378
    %v2380 = vld [vmem:[#allocation7 + $0x2] sm:$0x1]
    %v2381 = vld [vmem:[#allocation7 + $0x3] sm:$0x1]
    %v2382 = vadd.f32 %v2379, 1e-05
    %v2383 = vrsqrt.pop %v2382
    %v2384 = vmul.f32 %v2380, %v2383
    %v2385 = vmul.f32 %v2376, %v2384
    %v2386 = vsub.f32 %v2381, %v2385
    %v2387 = vlaneseq
    %v2388 = vshrl.u32 %v2387, 7
    %v2389 = vsub.s32 0, %v2388
    %v2390 = vrot.slane %v2384, %v2389
    %v2391 = vmul.f32 %v2239, %v2390
    %v2392 = vmul.f32 %v2240, %v2390
    %v2393 = vmul.f32 %v2241, %v2390
    %v2394 = vlaneseq
    %v2395 = vshrl.u32 %v2394, 7
    %v2396 = vsub.s32 0, %v2395
    %v2397 = vrot.slane %v2386, %v2396
    %v2398 = vadd.f32 %v2391, %v2397
    %v2399 = vadd.f32 %v2392, %v2397
    %v2400 = vadd.f32 %v2393, %v2397
    %vm2401 = vcmp.ge.f32.partialorder %v2398, 0.0
    %vm2402 = vcmp.ge.f32.partialorder %v2399, 0.0
    %vm2403 = vcmp.ge.f32.partialorder %v2400, 0.0
    %v2404 = vmul.f32 %v2398, 0.1
    %v2405 = vmul.f32 %v2399, 0.1
    %v2406 = vmul.f32 %v2400, 0.1
    %v2407 = vsel %vm2401, %v2398, %v2404
    %v2408 = vsel %vm2402, %v2399, %v2405
    %v2409 = vsel %vm2403, %v2400, %v2406
    %2410 = vst [vmem:[#allocation3] sm:$0xff] %v2407
    %2411 = vst [vmem:[#allocation3 + $0x8] sm:$0xff] %v2408
    %2412 = vst [vmem:[#allocation3 + $0x10] sm:$0x3f] %v2409
    %v2413 = vmul.f32 %v2328, %v2390
    %v2414 = vmul.f32 %v2329, %v2390
    %v2415 = vmul.f32 %v2330, %v2390
    %v2416 = vadd.f32 %v2413, %v2397
    %v2417 = vadd.f32 %v2414, %v2397
    %v2418 = vadd.f32 %v2415, %v2397
    %vm2419 = vcmp.ge.f32.partialorder %v2416, 0.0
    %vm2420 = vcmp.ge.f32.partialorder %v2417, 0.0
    %vm2421 = vcmp.ge.f32.partialorder %v2418, 0.0
    %v2422 = vmul.f32 %v2416, 0.1
    %v2423 = vmul.f32 %v2417, 0.1
    %v2424 = vmul.f32 %v2418, 0.1
    %v2425 = vsel %vm2419, %v2416, %v2422
    %v2426 = vsel %vm2420, %v2417, %v2423
    %v2427 = vsel %vm2421, %v2418, %v2424
    %2428 = vst [vmem:[#allocation3 + $0x16] sm:$0xff] %v2425
    %2429 = vst [vmem:[#allocation3 + $0x1e] sm:$0xff] %v2426
    %2430 = vst [vmem:[#allocation3 + $0x26] sm:$0x3f] %v2427
    %v2431 = vld [vmem:[#allocation5 + $0x500] sm:$0xff]
    %v2432 = vld [vmem:[#allocation5 + $0x508] sm:$0xff]
    %v2433 = vld [vmem:[#allocation5 + $0x510] sm:$0xff]
    %v2434 = vld [vmem:[#allocation5 + $0x518] sm:$0xff]
    %v2435 = vld [vmem:[#allocation5 + $0x520] sm:$0xff]
    %v2436 = vld [vmem:[#allocation5 + $0x528] sm:$0xff]
    %v2437 = vld [vmem:[#allocation5 + $0x530] sm:$0xff]
    %v2438 = vld [vmem:[#allocation5 + $0x538] sm:$0xff]
    %v2439 = vld [vmem:[#allocation5 + $0x540] sm:$0xff]
    %v2440 = vld [vmem:[#allocation5 + $0x548] sm:$0xff]
    %v2441 = vld [vmem:[#allocation5 + $0x550] sm:$0xff]
    %v2442 = vld [vmem:[#allocation5 + $0x558] sm:$0xff]
    %v2443 = vld [vmem:[#allocation5 + $0x560] sm:$0xff]
    %v2444 = vld [vmem:[#allocation5 + $0x568] sm:$0xff]
    %v2445 = vld [vmem:[#allocation5 + $0x570] sm:$0xff]
    %v2446 = vld [vmem:[#allocation5 + $0x578] sm:$0xff]
    %v2447 = vld [vmem:[#allocation3] ss:$2 sm:$0xff]
    %s2448 = scalar_lea.vmem [#allocation3], 16
    %v2449 = vld [vmem:[%s2448] ss:$2 sm:$0x1]
    %s2450 = scalar_lea.vmem [#allocation3], 22
    %v2451 = vld [vmem:[%s2450] ss:$2 sm:$0xff]
    %s2452 = scalar_lea.vmem [#allocation3], 38
    %v2453 = vld [vmem:[%s2452] ss:$2 sm:$0x1]
    %v2454 = vld [vmem:[#allocation5 + $0x580] sm:$0xff]
    %v2455 = vld [vmem:[#allocation5 + $0x588] sm:$0xff]
    %v2456 = vld [vmem:[#allocation5 + $0x590] sm:$0xff]
    %v2457 = vld [vmem:[#allocation5 + $0x598] sm:$0xff]
    %v2458 = vld [vmem:[#allocation5 + $0x5a0] sm:$0xff]
    %v2459 = vld [vmem:[#allocation5 + $0x5a8] sm:$0xff]
    %v2460 = vld [vmem:[#allocation5 + $0x5b0] sm:$0xff]
    %v2461 = vld [vmem:[#allocation5 + $0x5b8] sm:$0xff]
    %v2462 = vld [vmem:[#allocation5 + $0x5c0] sm:$0xff]
    %v2463 = vld [vmem:[#allocation5 + $0x5c8] sm:$0xff]
    %v2464 = vld [vmem:[#allocation5 + $0x5d0] sm:$0xff]
    %v2465 = vld [vmem:[#allocation5 + $0x5d8] sm:$0xff]
    %v2466 = vld [vmem:[#allocation5 + $0x5e0] sm:$0xff]
    %v2467 = vld [vmem:[#allocation5 + $0x5e8] sm:$0xff]
    %v2468 = vld [vmem:[#allocation5 + $0x5f0] sm:$0xff]
    %v2469 = vld [vmem:[#allocation5 + $0x5f8] sm:$0xff]
    %s2470 = scalar_lea.vmem [#allocation3], 1
    %v2471 = vld [vmem:[%s2470] ss:$2 sm:$0xff]
    %s2472 = scalar_lea.vmem [#allocation3], 17
    %v2473 = vld [vmem:[%s2472] ss:$2 sm:$0x1]
    %2474 = vmatprep.subr.mxu0 0.0
    %2475 = vmatpush1.msra.mxu0 %v2454
    %2476 = vmatprep.subr.mxu0 0.0
    %2477 = vmatpush1.msra.mxu0 %v2455
    %2478 = vmatprep.subr.mxu0 0.0
    %2479 = vmatpush1.msra.mxu0 %v2456
    %2480 = vmatprep.subr.mxu0 0.0
    %2481 = vmatpush1.msra.mxu0 %v2457
    %2482 = vmatprep.subr.mxu0 0.0
    %2483 = vmatpush1.msra.mxu0 %v2458
    %2484 = vmatprep.subr.mxu0 0.0
    %2485 = vmatpush1.msra.mxu0 %v2459
    %2486 = vmatprep.subr.mxu0 0.0
    %2487 = vmatpush1.msra.mxu0 %v2460
    %2488 = vmatprep.subr.mxu0 0.0
    %2489 = vmatpush1.msra.mxu0 %v2461
    %2490 = vmatprep.subr.mxu0 0.0
    %2491 = vmatpush1.msra.mxu0 %v2462
    %2492 = vmatprep.subr.mxu0 0.0
    %2493 = vmatpush1.msra.mxu0 %v2463
    %2494 = vmatprep.subr.mxu0 0.0
    %2495 = vmatpush1.msra.mxu0 %v2464
    %2496 = vmatprep.subr.mxu0 0.0
    %2497 = vmatpush1.msra.mxu0 %v2465
    %2498 = vmatprep.subr.mxu0 0.0
    %2499 = vmatpush1.msra.mxu0 %v2466
    %2500 = vmatprep.subr.mxu0 0.0
    %2501 = vmatpush1.msra.mxu0 %v2467
    %2502 = vmatprep.subr.mxu0 0.0
    %2503 = vmatpush1.msra.mxu0 %v2468
    %2504 = vmatprep.subr.mxu0 0.0
    %2505 = vmatpush1.msra.mxu0 %v2469
    %2506 = vmatprep.subr.mxu0 0.0
    %2507 = vmatpush1.msra.mxu0 0.0
    %2508 = vmatprep.subr.mxu0 0.0
    %2509 = vmatpush1.msra.mxu0 0.0
    %2510 = vmatprep.subr.mxu0 0.0
    %2511 = vmatpush1.msra.mxu0 0.0
    %2512 = vmatprep.subr.mxu0 0.0
    %2513 = vmatpush1.msra.mxu0 0.0
    %2514 = vmatprep.subr.mxu0 0.0
    %2515 = vmatpush1.msra.mxu0 0.0
    %2516 = vmatprep.subr.mxu0 0.0
    %2517 = vmatpush1.msra.mxu0 0.0
    %2518 = vmatprep.subr.mxu0 0.0
    %2519 = vmatpush1.msra.mxu0 0.0
    %2520 = vmatprep.subr.mxu0 0.0
    %2521 = vmatpush1.msra.mxu0 0.0
    %2522 = vmatprep.subr.mxu0 0.0
    %2523 = vmatpush1.msra.mxu0 0.0
    %2524 = vmatprep.subr.mxu0 0.0
    %2525 = vmatpush1.msra.mxu0 0.0
    %2526 = vmatprep.subr.mxu0 0.0
    %2527 = vmatpush1.msra.mxu0 0.0
    %2528 = vmatprep.subr.mxu0 0.0
    %2529 = vmatpush1.msra.mxu0 0.0
    %2530 = vmatprep.subr.mxu0 0.0
    %2531 = vmatpush1.msra.mxu0 0.0
    %2532 = vmatprep.subr.mxu0 0.0
    %2533 = vmatpush1.msra.mxu0 0.0
    %2534 = vmatprep.subr.mxu0 0.0
    %2535 = vmatpush1.msra.mxu0 0.0
    %2536 = vmatprep.subr.mxu0 0.0
    %2537 = vmatpush1.msra.mxu0 0.0
    %2538 = vmatprep.mubr.f32.mxu0 0.0
    %2539 = vmatmul.mubr.f32.gmra.mrb[0].mxu0 %v2471
    %v2540 = vpop.f32.mrb[0].mxu0
    %v2541 = vadd.f32 0.0, %v2540
    %v2542 = vpop.f32.mrb[0].mxu0
    %2543 = vmatprep.mubr.f32.mxu0 0.0
    %2544 = vmatmul.mubr.f32.gmra.mrb[0].mxu0 %v2473
    %v2545 = vpop.f32.mrb[0].mxu0
    %v2546 = vadd.f32 0.0, %v2545
    %v2547 = vpop.f32.mrb[0].mxu0
    %2548 = vdwg.mxu0
    %2549 = vmatprep.subr.mxu0 0.0
    %2550 = vmatpush1.msra.mxu0 %v2431
    %2551 = vmatprep.subr.mxu0 0.0
    %2552 = vmatpush1.msra.mxu0 %v2432
    %2553 = vmatprep.subr.mxu0 0.0
    %2554 = vmatpush1.msra.mxu0 %v2433
    %2555 = vmatprep.subr.mxu0 0.0
    %2556 = vmatpush1.msra.mxu0 %v2434
    %2557 = vmatprep.subr.mxu0 0.0
    %2558 = vmatpush1.msra.mxu0 %v2435
    %2559 = vmatprep.subr.mxu0 0.0
    %2560 = vmatpush1.msra.mxu0 %v2436
    %2561 = vmatprep.subr.mxu0 0.0
    %2562 = vmatpush1.msra.mxu0 %v2437
    %2563 = vmatprep.subr.mxu0 0.0
    %2564 = vmatpush1.msra.mxu0 %v2438
    %2565 = vmatprep.subr.mxu0 0.0
    %2566 = vmatpush1.msra.mxu0 %v2439
    %2567 = vmatprep.subr.mxu0 0.0
    %2568 = vmatpush1.msra.mxu0 %v2440
    %2569 = vmatprep.subr.mxu0 0.0
    %2570 = vmatpush1.msra.mxu0 %v2441
    %2571 = vmatprep.subr.mxu0 0.0
    %2572 = vmatpush1.msra.mxu0 %v2442
    %2573 = vmatprep.subr.mxu0 0.0
    %2574 = vmatpush1.msra.mxu0 %v2443
    %2575 = vmatprep.subr.mxu0 0.0
    %2576 = vmatpush1.msra.mxu0 %v2444
    %2577 = vmatprep.subr.mxu0 0.0
    %2578 = vmatpush1.msra.mxu0 %v2445
    %2579 = vmatprep.subr.mxu0 0.0
    %2580 = vmatpush1.msra.mxu0 %v2446
    %2581 = vmatprep.subr.mxu0 0.0
    %2582 = vmatpush1.msra.mxu0 0.0
    %2583 = vmatprep.subr.mxu0 0.0
    %2584 = vmatpush1.msra.mxu0 0.0
    %2585 = vmatprep.subr.mxu0 0.0
    %2586 = vmatpush1.msra.mxu0 0.0
    %2587 = vmatprep.subr.mxu0 0.0
    %2588 = vmatpush1.msra.mxu0 0.0
    %2589 = vmatprep.subr.mxu0 0.0
    %2590 = vmatpush1.msra.mxu0 0.0
    %2591 = vmatprep.subr.mxu0 0.0
    %2592 = vmatpush1.msra.mxu0 0.0
    %2593 = vmatprep.subr.mxu0 0.0
    %2594 = vmatpush1.msra.mxu0 0.0
    %2595 = vmatprep.subr.mxu0 0.0
    %2596 = vmatpush1.msra.mxu0 0.0
    %2597 = vmatprep.subr.mxu0 0.0
    %2598 = vmatpush1.msra.mxu0 0.0
    %2599 = vmatprep.subr.mxu0 0.0
    %2600 = vmatpush1.msra.mxu0 0.0
    %2601 = vmatprep.subr.mxu0 0.0
    %2602 = vmatpush1.msra.mxu0 0.0
    %2603 = vmatprep.subr.mxu0 0.0
    %2604 = vmatpush1.msra.mxu0 0.0
    %2605 = vmatprep.subr.mxu0 0.0
    %2606 = vmatpush1.msra.mxu0 0.0
    %2607 = vmatprep.subr.mxu0 0.0
    %2608 = vmatpush1.msra.mxu0 0.0
    %2609 = vmatprep.subr.mxu0 0.0
    %2610 = vmatpush1.msra.mxu0 0.0
    %2611 = vmatprep.subr.mxu0 0.0
    %2612 = vmatpush1.msra.mxu0 0.0
    %2613 = vmatprep.mubr.f32.mxu0 0.0
    %2614 = vmatmul.mubr.f32.gmra.mrb[0].mxu0 %v2447
    %v2615 = vpop.f32.mrb[0].mxu0
    %v2616 = vadd.f32 %v2541, %v2615
    %v2617 = vpop.f32.mrb[0].mxu0
    %2618 = vmatprep.mubr.f32.mxu0 0.0
    %2619 = vmatmul.mubr.f32.gmra.mrb[0].mxu0 %v2449
    %v2620 = vpop.f32.mrb[0].mxu0
    %v2621 = vadd.f32 %v2546, %v2620
    %v2622 = vpop.f32.mrb[0].mxu0
    %2623 = vdwg.mxu0
    %s2624 = scalar_lea.vmem [#allocation3], 23
    %v2625 = vld [vmem:[%s2624] ss:$2 sm:$0xff]
    %s2626 = scalar_lea.vmem [#allocation3], 39
    %v2627 = vld [vmem:[%s2626] ss:$2 sm:$0x1]
    %2628 = vmatprep.subr.mxu0 0.0
    %2629 = vmatpush1.msra.mxu0 %v2454
    %2630 = vmatprep.subr.mxu0 0.0
    %2631 = vmatpush1.msra.mxu0 %v2455
    %2632 = vmatprep.subr.mxu0 0.0
    %2633 = vmatpush1.msra.mxu0 %v2456
    %2634 = vmatprep.subr.mxu0 0.0
    %2635 = vmatpush1.msra.mxu0 %v2457
    %2636 = vmatprep.subr.mxu0 0.0
    %2637 = vmatpush1.msra.mxu0 %v2458
    %2638 = vmatprep.subr.mxu0 0.0
    %2639 = vmatpush1.msra.mxu0 %v2459
    %2640 = vmatprep.subr.mxu0 0.0
    %2641 = vmatpush1.msra.mxu0 %v2460
    %2642 = vmatprep.subr.mxu0 0.0
    %2643 = vmatpush1.msra.mxu0 %v2461
    %2644 = vmatprep.subr.mxu0 0.0
    %2645 = vmatpush1.msra.mxu0 %v2462
    %2646 = vmatprep.subr.mxu0 0.0
    %2647 = vmatpush1.msra.mxu0 %v2463
    %2648 = vmatprep.subr.mxu0 0.0
    %2649 = vmatpush1.msra.mxu0 %v2464
    %2650 = vmatprep.subr.mxu0 0.0
    %2651 = vmatpush1.msra.mxu0 %v2465
    %2652 = vmatprep.subr.mxu0 0.0
    %2653 = vmatpush1.msra.mxu0 %v2466
    %2654 = vmatprep.subr.mxu0 0.0
    %2655 = vmatpush1.msra.mxu0 %v2467
    %2656 = vmatprep.subr.mxu0 0.0
    %2657 = vmatpush1.msra.mxu0 %v2468
    %2658 = vmatprep.subr.mxu0 0.0
    %2659 = vmatpush1.msra.mxu0 %v2469
    %2660 = vmatprep.subr.mxu0 0.0
    %2661 = vmatpush1.msra.mxu0 0.0
    %2662 = vmatprep.subr.mxu0 0.0
    %2663 = vmatpush1.msra.mxu0 0.0
    %2664 = vmatprep.subr.mxu0 0.0
    %2665 = vmatpush1.msra.mxu0 0.0
    %2666 = vmatprep.subr.mxu0 0.0
    %2667 = vmatpush1.msra.mxu0 0.0
    %2668 = vmatprep.subr.mxu0 0.0
    %2669 = vmatpush1.msra.mxu0 0.0
    %2670 = vmatprep.subr.mxu0 0.0
    %2671 = vmatpush1.msra.mxu0 0.0
    %2672 = vmatprep.subr.mxu0 0.0
    %2673 = vmatpush1.msra.mxu0 0.0
    %2674 = vmatprep.subr.mxu0 0.0
    %2675 = vmatpush1.msra.mxu0 0.0
    %2676 = vmatprep.subr.mxu0 0.0
    %2677 = vmatpush1.msra.mxu0 0.0
    %2678 = vmatprep.subr.mxu0 0.0
    %2679 = vmatpush1.msra.mxu0 0.0
    %2680 = vmatprep.subr.mxu0 0.0
    %2681 = vmatpush1.msra.mxu0 0.0
    %2682 = vmatprep.subr.mxu0 0.0
    %2683 = vmatpush1.msra.mxu0 0.0
    %2684 = vmatprep.subr.mxu0 0.0
    %2685 = vmatpush1.msra.mxu0 0.0
    %2686 = vmatprep.subr.mxu0 0.0
    %2687 = vmatpush1.msra.mxu0 0.0
    %2688 = vmatprep.subr.mxu0 0.0
    %2689 = vmatpush1.msra.mxu0 0.0
    %2690 = vmatprep.subr.mxu0 0.0
    %2691 = vmatpush1.msra.mxu0 0.0
    %2692 = vmatprep.mubr.f32.mxu0 0.0
    %2693 = vmatmul.mubr.f32.gmra.mrb[0].mxu0 %v2625
    %v2694 = vpop.f32.mrb[0].mxu0
    %v2695 = vadd.f32 0.0, %v2694
    %v2696 = vpop.f32.mrb[0].mxu0
    %2697 = vmatprep.mubr.f32.mxu0 0.0
    %2698 = vmatmul.mubr.f32.gmra.mrb[0].mxu0 %v2627
    %v2699 = vpop.f32.mrb[0].mxu0
    %v2700 = vadd.f32 0.0, %v2699
    %v2701 = vpop.f32.mrb[0].mxu0
    %2702 = vdwg.mxu0
    %2703 = vmatprep.subr.mxu0 0.0
    %2704 = vmatpush1.msra.mxu0 %v2431
    %2705 = vmatprep.subr.mxu0 0.0
    %2706 = vmatpush1.msra.mxu0 %v2432
    %2707 = vmatprep.subr.mxu0 0.0
    %2708 = vmatpush1.msra.mxu0 %v2433
    %2709 = vmatprep.subr.mxu0 0.0
    %2710 = vmatpush1.msra.mxu0 %v2434
    %2711 = vmatprep.subr.mxu0 0.0
    %2712 = vmatpush1.msra.mxu0 %v2435
    %2713 = vmatprep.subr.mxu0 0.0
    %2714 = vmatpush1.msra.mxu0 %v2436
    %2715 = vmatprep.subr.mxu0 0.0
    %2716 = vmatpush1.msra.mxu0 %v2437
    %2717 = vmatprep.subr.mxu0 0.0
    %2718 = vmatpush1.msra.mxu0 %v2438
    %2719 = vmatprep.subr.mxu0 0.0
    %2720 = vmatpush1.msra.mxu0 %v2439
    %2721 = vmatprep.subr.mxu0 0.0
    %2722 = vmatpush1.msra.mxu0 %v2440
    %2723 = vmatprep.subr.mxu0 0.0
    %2724 = vmatpush1.msra.mxu0 %v2441
    %2725 = vmatprep.subr.mxu0 0.0
    %2726 = vmatpush1.msra.mxu0 %v2442
    %2727 = vmatprep.subr.mxu0 0.0
    %2728 = vmatpush1.msra.mxu0 %v2443
    %2729 = vmatprep.subr.mxu0 0.0
    %2730 = vmatpush1.msra.mxu0 %v2444
    %2731 = vmatprep.subr.mxu0 0.0
    %2732 = vmatpush1.msra.mxu0 %v2445
    %2733 = vmatprep.subr.mxu0 0.0
    %2734 = vmatpush1.msra.mxu0 %v2446
    %2735 = vmatprep.subr.mxu0 0.0
    %2736 = vmatpush1.msra.mxu0 0.0
    %2737 = vmatprep.subr.mxu0 0.0
    %2738 = vmatpush1.msra.mxu0 0.0
    %2739 = vmatprep.subr.mxu0 0.0
    %2740 = vmatpush1.msra.mxu0 0.0
    %2741 = vmatprep.subr.mxu0 0.0
    %2742 = vmatpush1.msra.mxu0 0.0
    %2743 = vmatprep.subr.mxu0 0.0
    %2744 = vmatpush1.msra.mxu0 0.0
    %2745 = vmatprep.subr.mxu0 0.0
    %2746 = vmatpush1.msra.mxu0 0.0
    %2747 = vmatprep.subr.mxu0 0.0
    %2748 = vmatpush1.msra.mxu0 0.0
    %2749 = vmatprep.subr.mxu0 0.0
    %2750 = vmatpush1.msra.mxu0 0.0
    %2751 = vmatprep.subr.mxu0 0.0
    %2752 = vmatpush1.msra.mxu0 0.0
    %2753 = vmatprep.subr.mxu0 0.0
    %2754 = vmatpush1.msra.mxu0 0.0
    %2755 = vmatprep.subr.mxu0 0.0
    %2756 = vmatpush1.msra.mxu0 0.0
    %2757 = vmatprep.subr.mxu0 0.0
    %2758 = vmatpush1.msra.mxu0 0.0
    %2759 = vmatprep.subr.mxu0 0.0
    %2760 = vmatpush1.msra.mxu0 0.0
    %2761 = vmatprep.subr.mxu0 0.0
    %2762 = vmatpush1.msra.mxu0 0.0
    %2763 = vmatprep.subr.mxu0 0.0
    %2764 = vmatpush1.msra.mxu0 0.0
    %2765 = vmatprep.subr.mxu0 0.0
    %2766 = vmatpush1.msra.mxu0 0.0
    %2767 = vmatprep.mubr.f32.mxu0 0.0
    %2768 = vmatmul.mubr.f32.gmra.mrb[0].mxu0 %v2451
    %v2769 = vpop.f32.mrb[0].mxu0
    %v2770 = vadd.f32 %v2695, %v2769
    %v2771 = vpop.f32.mrb[0].mxu0
    %2772 = vmatprep.mubr.f32.mxu0 0.0
    %2773 = vmatmul.mubr.f32.gmra.mrb[0].mxu0 %v2453
    %v2774 = vpop.f32.mrb[0].mxu0
    %v2775 = vadd.f32 %v2700, %v2774
    %v2776 = vpop.f32.mrb[0].mxu0
    %2777 = vdwg.mxu0
    %v2778 = vld [vmem:[#allocation5 + $0x600] sm:$0xff]
    %v2779 = vld [vmem:[#allocation5 + $0x608] sm:$0xff]
    %v2780 = vld [vmem:[#allocation5 + $0x610] sm:$0xff]
    %v2781 = vld [vmem:[#allocation5 + $0x618] sm:$0xff]
    %v2782 = vld [vmem:[#allocation5 + $0x620] sm:$0xff]
    %v2783 = vld [vmem:[#allocation5 + $0x628] sm:$0xff]
    %v2784 = vld [vmem:[#allocation5 + $0x630] sm:$0xff]
    %v2785 = vld [vmem:[#allocation5 + $0x638] sm:$0xff]
    %v2786 = vld [vmem:[#allocation5 + $0x640] sm:$0xff]
    %v2787 = vld [vmem:[#allocation5 + $0x648] sm:$0xff]
    %v2788 = vld [vmem:[#allocation5 + $0x650] sm:$0xff]
    %v2789 = vld [vmem:[#allocation5 + $0x658] sm:$0xff]
    %v2790 = vld [vmem:[#allocation5 + $0x660] sm:$0xff]
    %v2791 = vld [vmem:[#allocation5 + $0x668] sm:$0xff]
    %v2792 = vld [vmem:[#allocation5 + $0x670] sm:$0xff]
    %v2793 = vld [vmem:[#allocation5 + $0x678] sm:$0xff]
    %s2794 = scalar_lea.vmem [#allocation3], 2
    %v2795 = vld [vmem:[%s2794] ss:$2 sm:$0xff]
    %s2796 = scalar_lea.vmem [#allocation3], 18
    %v2797 = vld [vmem:[%s2796] ss:$2 sm:$0x1]
    %2798 = vmatprep.subr.mxu0 0.0
    %2799 = vmatpush1.msra.mxu0 %v2778
    %2800 = vmatprep.subr.mxu0 0.0
    %2801 = vmatpush1.msra.mxu0 %v2779
    %2802 = vmatprep.subr.mxu0 0.0
    %2803 = vmatpush1.msra.mxu0 %v2780
    %2804 = vmatprep.subr.mxu0 0.0
    %2805 = vmatpush1.msra.mxu0 %v2781
    %2806 = vmatprep.subr.mxu0 0.0
    %2807 = vmatpush1.msra.mxu0 %v2782
    %2808 = vmatprep.subr.mxu0 0.0
    %2809 = vmatpush1.msra.mxu0 %v2783
    %2810 = vmatprep.subr.mxu0 0.0
    %2811 = vmatpush1.msra.mxu0 %v2784
    %2812 = vmatprep.subr.mxu0 0.0
    %2813 = vmatpush1.msra.mxu0 %v2785
    %2814 = vmatprep.subr.mxu0 0.0
    %2815 = vmatpush1.msra.mxu0 %v2786
    %2816 = vmatprep.subr.mxu0 0.0
    %2817 = vmatpush1.msra.mxu0 %v2787
    %2818 = vmatprep.subr.mxu0 0.0
    %2819 = vmatpush1.msra.mxu0 %v2788
    %2820 = vmatprep.subr.mxu0 0.0
    %2821 = vmatpush1.msra.mxu0 %v2789
    %2822 = vmatprep.subr.mxu0 0.0
    %2823 = vmatpush1.msra.mxu0 %v2790
    %2824 = vmatprep.subr.mxu0 0.0
    %2825 = vmatpush1.msra.mxu0 %v2791
    %2826 = vmatprep.subr.mxu0 0.0
    %2827 = vmatpush1.msra.mxu0 %v2792
    %2828 = vmatprep.subr.mxu0 0.0
    %2829 = vmatpush1.msra.mxu0 %v2793
    %2830 = vmatprep.subr.mxu0 0.0
    %2831 = vmatpush1.msra.mxu0 0.0
    %2832 = vmatprep.subr.mxu0 0.0
    %2833 = vmatpush1.msra.mxu0 0.0
    %2834 = vmatprep.subr.mxu0 0.0
    %2835 = vmatpush1.msra.mxu0 0.0
    %2836 = vmatprep.subr.mxu0 0.0
    %2837 = vmatpush1.msra.mxu0 0.0
    %2838 = vmatprep.subr.mxu0 0.0
    %2839 = vmatpush1.msra.mxu0 0.0
    %2840 = vmatprep.subr.mxu0 0.0
    %2841 = vmatpush1.msra.mxu0 0.0
    %2842 = vmatprep.subr.mxu0 0.0
    %2843 = vmatpush1.msra.mxu0 0.0
    %2844 = vmatprep.subr.mxu0 0.0
    %2845 = vmatpush1.msra.mxu0 0.0
    %2846 = vmatprep.subr.mxu0 0.0
    %2847 = vmatpush1.msra.mxu0 0.0
    %2848 = vmatprep.subr.mxu0 0.0
    %2849 = vmatpush1.msra.mxu0 0.0
    %2850 = vmatprep.subr.mxu0 0.0
    %2851 = vmatpush1.msra.mxu0 0.0
    %2852 = vmatprep.subr.mxu0 0.0
    %2853 = vmatpush1.msra.mxu0 0.0
    %2854 = vmatprep.subr.mxu0 0.0
    %2855 = vmatpush1.msra.mxu0 0.0
    %2856 = vmatprep.subr.mxu0 0.0
    %2857 = vmatpush1.msra.mxu0 0.0
    %2858 = vmatprep.subr.mxu0 0.0
    %2859 = vmatpush1.msra.mxu0 0.0
    %2860 = vmatprep.subr.mxu0 0.0
    %2861 = vmatpush1.msra.mxu0 0.0
    %2862 = vmatprep.mubr.f32.mxu0 0.0
    %2863 = vmatmul.mubr.f32.gmra.mrb[0].mxu0 %v2795
    %v2864 = vpop.f32.mrb[0].mxu0
    %v2865 = vadd.f32 0.0, %v2864
    %v2866 = vpop.f32.mrb[0].mxu0
    %2867 = vmatprep.mubr.f32.mxu0 0.0
    %2868 = vmatmul.mubr.f32.gmra.mrb[0].mxu0 %v2797
    %v2869 = vpop.f32.mrb[0].mxu0
    %v2870 = vadd.f32 0.0, %v2869
    %v2871 = vpop.f32.mrb[0].mxu0
    %2872 = vdwg.mxu0
    %v2873 = vadd.f32 %v2616, %v2865
    %v2874 = vadd.f32 %v2621, %v2870
    %s2875 = scalar_lea.vmem [#allocation3], 24
    %v2876 = vld [vmem:[%s2875] ss:$2 sm:$0xff]
    %s2877 = scalar_lea.vmem [#allocation3], 40
    %v2878 = vld [vmem:[%s2877] ss:$2 sm:$0x1]
    %2879 = vmatprep.subr.mxu0 0.0
    %2880 = vmatpush1.msra.mxu0 %v2778
    %2881 = vmatprep.subr.mxu0 0.0
    %2882 = vmatpush1.msra.mxu0 %v2779
    %2883 = vmatprep.subr.mxu0 0.0
    %2884 = vmatpush1.msra.mxu0 %v2780
    %2885 = vmatprep.subr.mxu0 0.0
    %2886 = vmatpush1.msra.mxu0 %v2781
    %2887 = vmatprep.subr.mxu0 0.0
    %2888 = vmatpush1.msra.mxu0 %v2782
    %2889 = vmatprep.subr.mxu0 0.0
    %2890 = vmatpush1.msra.mxu0 %v2783
    %2891 = vmatprep.subr.mxu0 0.0
    %2892 = vmatpush1.msra.mxu0 %v2784
    %2893 = vmatprep.subr.mxu0 0.0
    %2894 = vmatpush1.msra.mxu0 %v2785
    %2895 = vmatprep.subr.mxu0 0.0
    %2896 = vmatpush1.msra.mxu0 %v2786
    %2897 = vmatprep.subr.mxu0 0.0
    %2898 = vmatpush1.msra.mxu0 %v2787
    %2899 = vmatprep.subr.mxu0 0.0
    %2900 = vmatpush1.msra.mxu0 %v2788
    %2901 = vmatprep.subr.mxu0 0.0
    %2902 = vmatpush1.msra.mxu0 %v2789
    %2903 = vmatprep.subr.mxu0 0.0
    %2904 = vmatpush1.msra.mxu0 %v2790
    %2905 = vmatprep.subr.mxu0 0.0
    %2906 = vmatpush1.msra.mxu0 %v2791
    %2907 = vmatprep.subr.mxu0 0.0
    %2908 = vmatpush1.msra.mxu0 %v2792
    %2909 = vmatprep.subr.mxu0 0.0
    %2910 = vmatpush1.msra.mxu0 %v2793
    %2911 = vmatprep.subr.mxu0 0.0
    %2912 = vmatpush1.msra.mxu0 0.0
    %2913 = vmatprep.subr.mxu0 0.0
    %2914 = vmatpush1.msra.mxu0 0.0
    %2915 = vmatprep.subr.mxu0 0.0
    %2916 = vmatpush1.msra.mxu0 0.0
    %2917 = vmatprep.subr.mxu0 0.0
    %2918 = vmatpush1.msra.mxu0 0.0
    %2919 = vmatprep.subr.mxu0 0.0
    %2920 = vmatpush1.msra.mxu0 0.0
    %2921 = vmatprep.subr.mxu0 0.0
    %2922 = vmatpush1.msra.mxu0 0.0
    %2923 = vmatprep.subr.mxu0 0.0
    %2924 = vmatpush1.msra.mxu0 0.0
    %2925 = vmatprep.subr.mxu0 0.0
    %2926 = vmatpush1.msra.mxu0 0.0
    %2927 = vmatprep.subr.mxu0 0.0
    %2928 = vmatpush1.msra.mxu0 0.0
    %2929 = vmatprep.subr.mxu0 0.0
    %2930 = vmatpush1.msra.mxu0 0.0
    %2931 = vmatprep.subr.mxu0 0.0
    %2932 = vmatpush1.msra.mxu0 0.0
    %2933 = vmatprep.subr.mxu0 0.0
    %2934 = vmatpush1.msra.mxu0 0.0
    %2935 = vmatprep.subr.mxu0 0.0
    %2936 = vmatpush1.msra.mxu0 0.0
    %2937 = vmatprep.subr.mxu0 0.0
    %2938 = vmatpush1.msra.mxu0 0.0
    %2939 = vmatprep.subr.mxu0 0.0
    %2940 = vmatpush1.msra.mxu0 0.0
    %2941 = vmatprep.subr.mxu0 0.0
    %2942 = vmatpush1.msra.mxu0 0.0
    %2943 = vmatprep.mubr.f32.mxu0 0.0
    %2944 = vmatmul.mubr.f32.gmra.mrb[0].mxu0 %v2876
    %v2945 = vpop.f32.mrb[0].mxu0
    %v2946 = vadd.f32 0.0, %v2945
    %v2947 = vpop.f32.mrb[0].mxu0
    %2948 = vmatprep.mubr.f32.mxu0 0.0
    %2949 = vmatmul.mubr.f32.gmra.mrb[0].mxu0 %v2878
    %v2950 = vpop.f32.mrb[0].mxu0
    %v2951 = vadd.f32 0.0, %v2950
    %v2952 = vpop.f32.mrb[0].mxu0
    %2953 = vdwg.mxu0
    %v2954 = vadd.f32 %v2770, %v2946
    %v2955 = vadd.f32 %v2775, %v2951
    %v2956 = vld [vmem:[#allocation5 + $0x680] sm:$0xff]
    %v2957 = vld [vmem:[#allocation5 + $0x688] sm:$0xff]
    %v2958 = vld [vmem:[#allocation5 + $0x690] sm:$0xff]
    %v2959 = vld [vmem:[#allocation5 + $0x698] sm:$0xff]
    %v2960 = vld [vmem:[#allocation5 + $0x6a0] sm:$0xff]
    %v2961 = vld [vmem:[#allocation5 + $0x6a8] sm:$0xff]
    %v2962 = vld [vmem:[#allocation5 + $0x6b0] sm:$0xff]
    %v2963 = vld [vmem:[#allocation5 + $0x6b8] sm:$0xff]
    %v2964 = vld [vmem:[#allocation5 + $0x6c0] sm:$0xff]
    %v2965 = vld [vmem:[#allocation5 + $0x6c8] sm:$0xff]
    %v2966 = vld [vmem:[#allocation5 + $0x6d0] sm:$0xff]
    %v2967 = vld [vmem:[#allocation5 + $0x6d8] sm:$0xff]
    %v2968 = vld [vmem:[#allocation5 + $0x6e0] sm:$0xff]
    %v2969 = vld [vmem:[#allocation5 + $0x6e8] sm:$0xff]
    %v2970 = vld [vmem:[#allocation5 + $0x6f0] sm:$0xff]
    %v2971 = vld [vmem:[#allocation5 + $0x6f8] sm:$0xff]
    %s2972 = scalar_lea.vmem [#allocation3], 3
    %v2973 = vld [vmem:[%s2972] ss:$2 sm:$0xff]
    %s2974 = scalar_lea.vmem [#allocation3], 19
    %v2975 = vld [vmem:[%s2974] ss:$2 sm:$0x1]
    %2976 = vmatprep.subr.mxu0 0.0
    %2977 = vmatpush1.msra.mxu0 %v2956
    %2978 = vmatprep.subr.mxu0 0.0
    %2979 = vmatpush1.msra.mxu0 %v2957
    %2980 = vmatprep.subr.mxu0 0.0
    %2981 = vmatpush1.msra.mxu0 %v2958
    %2982 = vmatprep.subr.mxu0 0.0
    %2983 = vmatpush1.msra.mxu0 %v2959
    %2984 = vmatprep.subr.mxu0 0.0
    %2985 = vmatpush1.msra.mxu0 %v2960
    %2986 = vmatprep.subr.mxu0 0.0
    %2987 = vmatpush1.msra.mxu0 %v2961
    %2988 = vmatprep.subr.mxu0 0.0
    %2989 = vmatpush1.msra.mxu0 %v2962
    %2990 = vmatprep.subr.mxu0 0.0
    %2991 = vmatpush1.msra.mxu0 %v2963
    %2992 = vmatprep.subr.mxu0 0.0
    %2993 = vmatpush1.msra.mxu0 %v2964
    %2994 = vmatprep.subr.mxu0 0.0
    %2995 = vmatpush1.msra.mxu0 %v2965
    %2996 = vmatprep.subr.mxu0 0.0
    %2997 = vmatpush1.msra.mxu0 %v2966
    %2998 = vmatprep.subr.mxu0 0.0
    %2999 = vmatpush1.msra.mxu0 %v2967
    %3000 = vmatprep.subr.mxu0 0.0
    %3001 = vmatpush1.msra.mxu0 %v2968
    %3002 = vmatprep.subr.mxu0 0.0
    %3003 = vmatpush1.msra.mxu0 %v2969
    %3004 = vmatprep.subr.mxu0 0.0
    %3005 = vmatpush1.msra.mxu0 %v2970
    %3006 = vmatprep.subr.mxu0 0.0
    %3007 = vmatpush1.msra.mxu0 %v2971
    %3008 = vmatprep.subr.mxu0 0.0
    %3009 = vmatpush1.msra.mxu0 0.0
    %3010 = vmatprep.subr.mxu0 0.0
    %3011 = vmatpush1.msra.mxu0 0.0
    %3012 = vmatprep.subr.mxu0 0.0
    %3013 = vmatpush1.msra.mxu0 0.0
    %3014 = vmatprep.subr.mxu0 0.0
    %3015 = vmatpush1.msra.mxu0 0.0
    %3016 = vmatprep.subr.mxu0 0.0
    %3017 = vmatpush1.msra.mxu0 0.0
    %3018 = vmatprep.subr.mxu0 0.0
    %3019 = vmatpush1.msra.mxu0 0.0
    %3020 = vmatprep.subr.mxu0 0.0
    %3021 = vmatpush1.msra.mxu0 0.0
    %3022 = vmatprep.subr.mxu0 0.0
    %3023 = vmatpush1.msra.mxu0 0.0
    %3024 = vmatprep.subr.mxu0 0.0
    %3025 = vmatpush1.msra.mxu0 0.0
    %3026 = vmatprep.subr.mxu0 0.0
    %3027 = vmatpush1.msra.mxu0 0.0
    %3028 = vmatprep.subr.mxu0 0.0
    %3029 = vmatpush1.msra.mxu0 0.0
    %3030 = vmatprep.subr.mxu0 0.0
    %3031 = vmatpush1.msra.mxu0 0.0
    %3032 = vmatprep.subr.mxu0 0.0
    %3033 = vmatpush1.msra.mxu0 0.0
    %3034 = vmatprep.subr.mxu0 0.0
    %3035 = vmatpush1.msra.mxu0 0.0
    %3036 = vmatprep.subr.mxu0 0.0
    %3037 = vmatpush1.msra.mxu0 0.0
    %3038 = vmatprep.subr.mxu0 0.0
    %3039 = vmatpush1.msra.mxu0 0.0
    %3040 = vmatprep.mubr.f32.mxu0 0.0
    %3041 = vmatmul.mubr.f32.gmra.mrb[0].mxu0 %v2973
    %v3042 = vpop.f32.mrb[0].mxu0
    %v3043 = vadd.f32 0.0, %v3042
    %v3044 = vpop.f32.mrb[0].mxu0
    %3045 = vmatprep.mubr.f32.mxu0 0.0
    %3046 = vmatmul.mubr.f32.gmra.mrb[0].mxu0 %v2975
    %v3047 = vpop.f32.mrb[0].mxu0
    %v3048 = vadd.f32 0.0, %v3047
    %v3049 = vpop.f32.mrb[0].mxu0
    %3050 = vdwg.mxu0
    %v3051 = vadd.f32 %v2873, %v3043
    %v3052 = vadd.f32 %v2874, %v3048
    %s3053 = scalar_lea.vmem [#allocation3], 25
    %v3054 = vld [vmem:[%s3053] ss:$2 sm:$0xff]
    %s3055 = scalar_lea.vmem [#allocation3], 41
    %v3056 = vld [vmem:[%s3055] ss:$2 sm:$0x1]
    %3057 = vmatprep.subr.mxu0 0.0
    %3058 = vmatpush1.msra.mxu0 %v2956
    %3059 = vmatprep.subr.mxu0 0.0
    %3060 = vmatpush1.msra.mxu0 %v2957
    %3061 = vmatprep.subr.mxu0 0.0
    %3062 = vmatpush1.msra.mxu0 %v2958
    %3063 = vmatprep.subr.mxu0 0.0
    %3064 = vmatpush1.msra.mxu0 %v2959
    %3065 = vmatprep.subr.mxu0 0.0
    %3066 = vmatpush1.msra.mxu0 %v2960
    %3067 = vmatprep.subr.mxu0 0.0
    %3068 = vmatpush1.msra.mxu0 %v2961
    %3069 = vmatprep.subr.mxu0 0.0
    %3070 = vmatpush1.msra.mxu0 %v2962
    %3071 = vmatprep.subr.mxu0 0.0
    %3072 = vmatpush1.msra.mxu0 %v2963
    %3073 = vmatprep.subr.mxu0 0.0
    %3074 = vmatpush1.msra.mxu0 %v2964
    %3075 = vmatprep.subr.mxu0 0.0
    %3076 = vmatpush1.msra.mxu0 %v2965
    %3077 = vmatprep.subr.mxu0 0.0
    %3078 = vmatpush1.msra.mxu0 %v2966
    %3079 = vmatprep.subr.mxu0 0.0
    %3080 = vmatpush1.msra.mxu0 %v2967
    %3081 = vmatprep.subr.mxu0 0.0
    %3082 = vmatpush1.msra.mxu0 %v2968
    %3083 = vmatprep.subr.mxu0 0.0
    %3084 = vmatpush1.msra.mxu0 %v2969
    %3085 = vmatprep.subr.mxu0 0.0
    %3086 = vmatpush1.msra.mxu0 %v2970
    %3087 = vmatprep.subr.mxu0 0.0
    %3088 = vmatpush1.msra.mxu0 %v2971
    %3089 = vmatprep.subr.mxu0 0.0
    %3090 = vmatpush1.msra.mxu0 0.0
    %3091 = vmatprep.subr.mxu0 0.0
    %3092 = vmatpush1.msra.mxu0 0.0
    %3093 = vmatprep.subr.mxu0 0.0
    %3094 = vmatpush1.msra.mxu0 0.0
    %3095 = vmatprep.subr.mxu0 0.0
    %3096 = vmatpush1.msra.mxu0 0.0
    %3097 = vmatprep.subr.mxu0 0.0
    %3098 = vmatpush1.msra.mxu0 0.0
    %3099 = vmatprep.subr.mxu0 0.0
    %3100 = vmatpush1.msra.mxu0 0.0
    %3101 = vmatprep.subr.mxu0 0.0
    %3102 = vmatpush1.msra.mxu0 0.0
    %3103 = vmatprep.subr.mxu0 0.0
    %3104 = vmatpush1.msra.mxu0 0.0
    %3105 = vmatprep.subr.mxu0 0.0
    %3106 = vmatpush1.msra.mxu0 0.0
    %3107 = vmatprep.subr.mxu0 0.0
    %3108 = vmatpush1.msra.mxu0 0.0
    %3109 = vmatprep.subr.mxu0 0.0
    %3110 = vmatpush1.msra.mxu0 0.0
    %3111 = vmatprep.subr.mxu0 0.0
    %3112 = vmatpush1.msra.mxu0 0.0
    %3113 = vmatprep.subr.mxu0 0.0
    %3114 = vmatpush1.msra.mxu0 0.0
    %3115 = vmatprep.subr.mxu0 0.0
    %3116 = vmatpush1.msra.mxu0 0.0
    %3117 = vmatprep.subr.mxu0 0.0
    %3118 = vmatpush1.msra.mxu0 0.0
    %3119 = vmatprep.subr.mxu0 0.0
    %3120 = vmatpush1.msra.mxu0 0.0
    %3121 = vmatprep.mubr.f32.mxu0 0.0
    %3122 = vmatmul.mubr.f32.gmra.mrb[0].mxu0 %v3054
    %v3123 = vpop.f32.mrb[0].mxu0
    %v3124 = vadd.f32 0.0, %v3123
    %v3125 = vpop.f32.mrb[0].mxu0
    %3126 = vmatprep.mubr.f32.mxu0 0.0
    %3127 = vmatmul.mubr.f32.gmra.mrb[0].mxu0 %v3056
    %v3128 = vpop.f32.mrb[0].mxu0
    %v3129 = vadd.f32 0.0, %v3128
    %v3130 = vpop.f32.mrb[0].mxu0
    %3131 = vdwg.mxu0
    %v3132 = vadd.f32 %v2954, %v3124
    %v3133 = vadd.f32 %v2955, %v3129
    %v3134 = vld [vmem:[#allocation5 + $0x700] sm:$0xff]
    %v3135 = vld [vmem:[#allocation5 + $0x708] sm:$0xff]
    %v3136 = vld [vmem:[#allocation5 + $0x710] sm:$0xff]
    %v3137 = vld [vmem:[#allocation5 + $0x718] sm:$0xff]
    %v3138 = vld [vmem:[#allocation5 + $0x720] sm:$0xff]
    %v3139 = vld [vmem:[#allocation5 + $0x728] sm:$0xff]
    %v3140 = vld [vmem:[#allocation5 + $0x730] sm:$0xff]
    %v3141 = vld [vmem:[#allocation5 + $0x738] sm:$0xff]
    %v3142 = vld [vmem:[#allocation5 + $0x740] sm:$0xff]
    %v3143 = vld [vmem:[#allocation5 + $0x748] sm:$0xff]
    %v3144 = vld [vmem:[#allocation5 + $0x750] sm:$0xff]
    %v3145 = vld [vmem:[#allocation5 + $0x758] sm:$0xff]
    %v3146 = vld [vmem:[#allocation5 + $0x760] sm:$0xff]
    %v3147 = vld [vmem:[#allocation5 + $0x768] sm:$0xff]
    %v3148 = vld [vmem:[#allocation5 + $0x770] sm:$0xff]
    %v3149 = vld [vmem:[#allocation5 + $0x778] sm:$0xff]
    %s3150 = scalar_lea.vmem [#allocation3], 4
    %v3151 = vld [vmem:[%s3150] ss:$2 sm:$0xff]
    %s3152 = scalar_lea.vmem [#allocation3], 20
    %v3153 = vld [vmem:[%s3152] ss:$2 sm:$0x1]
    %3154 = vmatprep.subr.mxu0 0.0
    %3155 = vmatpush1.msra.mxu0 %v3134
    %3156 = vmatprep.subr.mxu0 0.0
    %3157 = vmatpush1.msra.mxu0 %v3135
    %3158 = vmatprep.subr.mxu0 0.0
    %3159 = vmatpush1.msra.mxu0 %v3136
    %3160 = vmatprep.subr.mxu0 0.0
    %3161 = vmatpush1.msra.mxu0 %v3137
    %3162 = vmatprep.subr.mxu0 0.0
    %3163 = vmatpush1.msra.mxu0 %v3138
    %3164 = vmatprep.subr.mxu0 0.0
    %3165 = vmatpush1.msra.mxu0 %v3139
    %3166 = vmatprep.subr.mxu0 0.0
    %3167 = vmatpush1.msra.mxu0 %v3140
    %3168 = vmatprep.subr.mxu0 0.0
    %3169 = vmatpush1.msra.mxu0 %v3141
    %3170 = vmatprep.subr.mxu0 0.0
    %3171 = vmatpush1.msra.mxu0 %v3142
    %3172 = vmatprep.subr.mxu0 0.0
    %3173 = vmatpush1.msra.mxu0 %v3143
    %3174 = vmatprep.subr.mxu0 0.0
    %3175 = vmatpush1.msra.mxu0 %v3144
    %3176 = vmatprep.subr.mxu0 0.0
    %3177 = vmatpush1.msra.mxu0 %v3145
    %3178 = vmatprep.subr.mxu0 0.0
    %3179 = vmatpush1.msra.mxu0 %v3146
    %3180 = vmatprep.subr.mxu0 0.0
    %3181 = vmatpush1.msra.mxu0 %v3147
    %3182 = vmatprep.subr.mxu0 0.0
    %3183 = vmatpush1.msra.mxu0 %v3148
    %3184 = vmatprep.subr.mxu0 0.0
    %3185 = vmatpush1.msra.mxu0 %v3149
    %3186 = vmatprep.subr.mxu0 0.0
    %3187 = vmatpush1.msra.mxu0 0.0
    %3188 = vmatprep.subr.mxu0 0.0
    %3189 = vmatpush1.msra.mxu0 0.0
    %3190 = vmatprep.subr.mxu0 0.0
    %3191 = vmatpush1.msra.mxu0 0.0
    %3192 = vmatprep.subr.mxu0 0.0
    %3193 = vmatpush1.msra.mxu0 0.0
    %3194 = vmatprep.subr.mxu0 0.0
    %3195 = vmatpush1.msra.mxu0 0.0
    %3196 = vmatprep.subr.mxu0 0.0
    %3197 = vmatpush1.msra.mxu0 0.0
    %3198 = vmatprep.subr.mxu0 0.0
    %3199 = vmatpush1.msra.mxu0 0.0
    %3200 = vmatprep.subr.mxu0 0.0
    %3201 = vmatpush1.msra.mxu0 0.0
    %3202 = vmatprep.subr.mxu0 0.0
    %3203 = vmatpush1.msra.mxu0 0.0
    %3204 = vmatprep.subr.mxu0 0.0
    %3205 = vmatpush1.msra.mxu0 0.0
    %3206 = vmatprep.subr.mxu0 0.0
    %3207 = vmatpush1.msra.mxu0 0.0
    %3208 = vmatprep.subr.mxu0 0.0
    %3209 = vmatpush1.msra.mxu0 0.0
    %3210 = vmatprep.subr.mxu0 0.0
    %3211 = vmatpush1.msra.mxu0 0.0
    %3212 = vmatprep.subr.mxu0 0.0
    %3213 = vmatpush1.msra.mxu0 0.0
    %3214 = vmatprep.subr.mxu0 0.0
    %3215 = vmatpush1.msra.mxu0 0.0
    %3216 = vmatprep.subr.mxu0 0.0
    %3217 = vmatpush1.msra.mxu0 0.0
    %3218 = vmatprep.mubr.f32.mxu0 0.0
    %3219 = vmatmul.mubr.f32.gmra.mrb[0].mxu0 %v3151
    %v3220 = vpop.f32.mrb[0].mxu0
    %v3221 = vadd.f32 0.0, %v3220
    %v3222 = vpop.f32.mrb[0].mxu0
    %3223 = vmatprep.mubr.f32.mxu0 0.0
    %3224 = vmatmul.mubr.f32.gmra.mrb[0].mxu0 %v3153
    %v3225 = vpop.f32.mrb[0].mxu0
    %v3226 = vadd.f32 0.0, %v3225
    %v3227 = vpop.f32.mrb[0].mxu0
    %3228 = vdwg.mxu0
    %v3229 = vadd.f32 %v3051, %v3221
    %v3230 = vadd.f32 %v3052, %v3226
    %s3231 = scalar_lea.vmem [#allocation3], 26
    %v3232 = vld [vmem:[%s3231] ss:$2 sm:$0xff]
    %s3233 = scalar_lea.vmem [#allocation3], 42
    %v3234 = vld [vmem:[%s3233] ss:$2 sm:$0x1]
    %3235 = vmatprep.subr.mxu0 0.0
    %3236 = vmatpush1.msra.mxu0 %v3134
    %3237 = vmatprep.subr.mxu0 0.0
    %3238 = vmatpush1.msra.mxu0 %v3135
    %3239 = vmatprep.subr.mxu0 0.0
    %3240 = vmatpush1.msra.mxu0 %v3136
    %3241 = vmatprep.subr.mxu0 0.0
    %3242 = vmatpush1.msra.mxu0 %v3137
    %3243 = vmatprep.subr.mxu0 0.0
    %3244 = vmatpush1.msra.mxu0 %v3138
    %3245 = vmatprep.subr.mxu0 0.0
    %3246 = vmatpush1.msra.mxu0 %v3139
    %3247 = vmatprep.subr.mxu0 0.0
    %3248 = vmatpush1.msra.mxu0 %v3140
    %3249 = vmatprep.subr.mxu0 0.0
    %3250 = vmatpush1.msra.mxu0 %v3141
    %3251 = vmatprep.subr.mxu0 0.0
    %3252 = vmatpush1.msra.mxu0 %v3142
    %3253 = vmatprep.subr.mxu0 0.0
    %3254 = vmatpush1.msra.mxu0 %v3143
    %3255 = vmatprep.subr.mxu0 0.0
    %3256 = vmatpush1.msra.mxu0 %v3144
    %3257 = vmatprep.subr.mxu0 0.0
    %3258 = vmatpush1.msra.mxu0 %v3145
    %3259 = vmatprep.subr.mxu0 0.0
    %3260 = vmatpush1.msra.mxu0 %v3146
    %3261 = vmatprep.subr.mxu0 0.0
    %3262 = vmatpush1.msra.mxu0 %v3147
    %3263 = vmatprep.subr.mxu0 0.0
    %3264 = vmatpush1.msra.mxu0 %v3148
    %3265 = vmatprep.subr.mxu0 0.0
    %3266 = vmatpush1.msra.mxu0 %v3149
    %3267 = vmatprep.subr.mxu0 0.0
    %3268 = vmatpush1.msra.mxu0 0.0
    %3269 = vmatprep.subr.mxu0 0.0
    %3270 = vmatpush1.msra.mxu0 0.0
    %3271 = vmatprep.subr.mxu0 0.0
    %3272 = vmatpush1.msra.mxu0 0.0
    %3273 = vmatprep.subr.mxu0 0.0
    %3274 = vmatpush1.msra.mxu0 0.0
    %3275 = vmatprep.subr.mxu0 0.0
    %3276 = vmatpush1.msra.mxu0 0.0
    %3277 = vmatprep.subr.mxu0 0.0
    %3278 = vmatpush1.msra.mxu0 0.0
    %3279 = vmatprep.subr.mxu0 0.0
    %3280 = vmatpush1.msra.mxu0 0.0
    %3281 = vmatprep.subr.mxu0 0.0
    %3282 = vmatpush1.msra.mxu0 0.0
    %3283 = vmatprep.subr.mxu0 0.0
    %3284 = vmatpush1.msra.mxu0 0.0
    %3285 = vmatprep.subr.mxu0 0.0
    %3286 = vmatpush1.msra.mxu0 0.0
    %3287 = vmatprep.subr.mxu0 0.0
    %3288 = vmatpush1.msra.mxu0 0.0
    %3289 = vmatprep.subr.mxu0 0.0
    %3290 = vmatpush1.msra.mxu0 0.0
    %3291 = vmatprep.subr.mxu0 0.0
    %3292 = vmatpush1.msra.mxu0 0.0
    %3293 = vmatprep.subr.mxu0 0.0
    %3294 = vmatpush1.msra.mxu0 0.0
    %3295 = vmatprep.subr.mxu0 0.0
    %3296 = vmatpush1.msra.mxu0 0.0
    %3297 = vmatprep.subr.mxu0 0.0
    %3298 = vmatpush1.msra.mxu0 0.0
    %3299 = vmatprep.mubr.f32.mxu0 0.0
    %3300 = vmatmul.mubr.f32.gmra.mrb[0].mxu0 %v3232
    %v3301 = vpop.f32.mrb[0].mxu0
    %v3302 = vadd.f32 0.0, %v3301
    %v3303 = vpop.f32.mrb[0].mxu0
    %3304 = vmatprep.mubr.f32.mxu0 0.0
    %3305 = vmatmul.mubr.f32.gmra.mrb[0].mxu0 %v3234
    %v3306 = vpop.f32.mrb[0].mxu0
    %v3307 = vadd.f32 0.0, %v3306
    %v3308 = vpop.f32.mrb[0].mxu0
    %3309 = vdwg.mxu0
    %v3310 = vadd.f32 %v3132, %v3302
    %v3311 = vadd.f32 %v3133, %v3307
    %vm3312 = vcmask 1040384
    %v3313 = vsel %vm3312, %v3230, 0.0
    %v3314 = vadd.f32 %v3229, %v3313
    %v3315 = vrot.slane %v3314, 4
    %v3316 = vadd.f32 %v3314, %v3315
    %v3317 = vrot.slane %v3316, 2
    %v3318 = vadd.f32 %v3316, %v3317
    %v3319 = vrot.slane %v3318, 1
    %v3320 = vadd.f32 %v3318, %v3319
    %v3321 = vmul.f32 %v3229, %v3229
    %v3322 = vmul.f32 %v3230, %v3230
    %v3323 = vsel %vm3312, %v3322, 0.0
    %v3324 = vadd.f32 %v3321, %v3323
    %v3325 = vrot.slane %v3324, 4
    %v3326 = vadd.f32 %v3324, %v3325
    %v3327 = vrot.slane %v3326, 2
    %v3328 = vadd.f32 %v3326, %v3327
    %v3329 = vrot.slane %v3328, 1
    %v3330 = vadd.f32 %v3328, %v3329
    %v3331 = vsel %vm3312, %v3311, 0.0
    %v3332 = vadd.f32 %v3310, %v3331
    %v3333 = vrot.slane %v3332, 4
    %v3334 = vadd.f32 %v3332, %v3333
    %v3335 = vrot.slane %v3334, 2
    %v3336 = vadd.f32 %v3334, %v3335
    %v3337 = vrot.slane %v3336, 1
    %v3338 = vadd.f32 %v3336, %v3337
    %v3339 = vadd.f32 %v3320, %v3338
    %v3340 = vmul.f32 %v3310, %v3310
    %v3341 = vmul.f32 %v3311, %v3311
    %v3342 = vsel %vm3312, %v3341, 0.0
    %v3343 = vadd.f32 %v3340, %v3342
    %v3344 = vrot.slane %v3343, 4
    %v3345 = vadd.f32 %v3343, %v3344
    %v3346 = vrot.slane %v3345, 2
    %v3347 = vadd.f32 %v3345, %v3346
    %v3348 = vrot.slane %v3347, 1
    %v3349 = vadd.f32 %v3347, %v3348
    %v3350 = vadd.f32 %v3330, %v3349
    %v3351 = vmul.f32 %v3339, 0.055555556
    %v3352 = vmul.f32 %v3350, 0.055555556
    %v3353 = vmul.f32 %v3351, %v3351
    %v3354 = vsub.f32 %v3352, %v3353
    %v3355 = vld [vmem:[#allocation7 + $0x4] sm:$0x1]
    %v3356 = vld [vmem:[#allocation7 + $0x5] sm:$0x1]
    %v3357 = vadd.f32 %v3354, 1e-05
    %v3358 = vrsqrt.pop %v3357
    %v3359 = vmul.f32 %v3355, %v3358
    %v3360 = vmul.f32 %v3351, %v3359
    %v3361 = vsub.f32 %v3356, %v3360
    %v3362 = vlaneseq
    %v3363 = vshrl.u32 %v3362, 7
    %v3364 = vsub.s32 0, %v3363
    %v3365 = vrot.slane %v3359, %v3364
    %v3366 = vmul.f32 %v3229, %v3365
    %v3367 = vmul.f32 %v3230, %v3365
    %v3368 = vlaneseq
    %v3369 = vshrl.u32 %v3368, 7
    %v3370 = vsub.s32 0, %v3369
    %v3371 = vrot.slane %v3361, %v3370
    %v3372 = vadd.f32 %v3366, %v3371
    %v3373 = vadd.f32 %v3367, %v3371
    %vm3374 = vcmp.ge.f32.partialorder %v3372, 0.0
    %vm3375 = vcmp.ge.f32.partialorder %v3373, 0.0
    %v3376 = vmul.f32 %v3372, 0.1
    %v3377 = vmul.f32 %v3373, 0.1
    %v3378 = vsel %vm3374, %v3372, %v3376
    %v3379 = vsel %vm3375, %v3373, %v3377
    %3380 = vst [vmem:[#allocation4] sm:$0xff] %v3378
    %3381 = vst [vmem:[#allocation4 + $0x8] sm:$0x1] %v3379
    %v3382 = vmul.f32 %v3310, %v3365
    %v3383 = vmul.f32 %v3311, %v3365
    %v3384 = vadd.f32 %v3382, %v3371
    %v3385 = vadd.f32 %v3383, %v3371
    %vm3386 = vcmp.ge.f32.partialorder %v3384, 0.0
    %vm3387 = vcmp.ge.f32.partialorder %v3385, 0.0
    %v3388 = vmul.f32 %v3384, 0.1
    %v3389 = vmul.f32 %v3385, 0.1
    %v3390 = vsel %vm3386, %v3384, %v3388
    %v3391 = vsel %vm3387, %v3385, %v3389
    %3392 = vst [vmem:[#allocation4 + $0x9] sm:$0xff] %v3390
    %3393 = vst [vmem:[#allocation4 + $0x11] sm:$0x1] %v3391
    %v3394 = vld [vmem:[#allocation5 + $0x780] sm:$0xff]
    %v3395 = vld [vmem:[#allocation5 + $0x788] sm:$0xff]
    %v3396 = vld [vmem:[#allocation5 + $0x790] sm:$0xff]
    %v3397 = vld [vmem:[#allocation5 + $0x798] sm:$0xff]
    %v3398 = vld [vmem:[#allocation5 + $0x7a0] sm:$0xff]
    %v3399 = vld [vmem:[#allocation5 + $0x7a8] sm:$0xff]
    %v3400 = vld [vmem:[#allocation5 + $0x7b0] sm:$0xff]
    %v3401 = vld [vmem:[#allocation5 + $0x7b8] sm:$0xff]
    %v3402 = vld [vmem:[#allocation5 + $0x7c0] sm:$0xff]
    %v3403 = vld [vmem:[#allocation5 + $0x7c8] sm:$0xff]
    %v3404 = vld [vmem:[#allocation5 + $0x7d0] sm:$0xff]
    %v3405 = vld [vmem:[#allocation5 + $0x7d8] sm:$0xff]
    %v3406 = vld [vmem:[#allocation5 + $0x7e0] sm:$0xff]
    %v3407 = vld [vmem:[#allocation5 + $0x7e8] sm:$0xff]
    %v3408 = vld [vmem:[#allocation5 + $0x7f0] sm:$0xff]
    %v3409 = vld [vmem:[#allocation5 + $0x7f8] sm:$0xff]
    %v3410 = vld [vmem:[#allocation4] ss:$2 sm:$0x7]
    %s3411 = scalar_lea.vmem [#allocation4], 9
    %v3412 = vld [vmem:[%s3411] ss:$2 sm:$0x7]
    %v3413 = vld [vmem:[#allocation5 + $0x800] sm:$0xff]
    %v3414 = vld [vmem:[#allocation5 + $0x808] sm:$0xff]
    %v3415 = vld [vmem:[#allocation5 + $0x810] sm:$0xff]
    %v3416 = vld [vmem:[#allocation5 + $0x818] sm:$0xff]
    %v3417 = vld [vmem:[#allocation5 + $0x820] sm:$0xff]
    %v3418 = vld [vmem:[#allocation5 + $0x828] sm:$0xff]
    %v3419 = vld [vmem:[#allocation5 + $0x830] sm:$0xff]
    %v3420 = vld [vmem:[#allocation5 + $0x838] sm:$0xff]
    %v3421 = vld [vmem:[#allocation5 + $0x840] sm:$0xff]
    %v3422 = vld [vmem:[#allocation5 + $0x848] sm:$0xff]
    %v3423 = vld [vmem:[#allocation5 + $0x850] sm:$0xff]
    %v3424 = vld [vmem:[#allocation5 + $0x858] sm:$0xff]
    %v3425 = vld [vmem:[#allocation5 + $0x860] sm:$0xff]
    %v3426 = vld [vmem:[#allocation5 + $0x868] sm:$0xff]
    %v3427 = vld [vmem:[#allocation5 + $0x870] sm:$0xff]
    %v3428 = vld [vmem:[#allocation5 + $0x878] sm:$0xff]
    %s3429 = scalar_lea.vmem [#allocation4], 1
    %v3430 = vld [vmem:[%s3429] ss:$2 sm:$0x7]
    %3431 = vmatprep.subr.mxu0 0.0
    %3432 = vmatpush1.msra.mxu0 %v3413
    %3433 = vmatprep.subr.mxu0 0.0
    %3434 = vmatpush1.msra.mxu0 %v3414
    %3435 = vmatprep.subr.mxu0 0.0
    %3436 = vmatpush1.msra.mxu0 %v3415
    %3437 = vmatprep.subr.mxu0 0.0
    %3438 = vmatpush1.msra.mxu0 %v3416
    %3439 = vmatprep.subr.mxu0 0.0
    %3440 = vmatpush1.msra.mxu0 %v3417
    %3441 = vmatprep.subr.mxu0 0.0
    %3442 = vmatpush1.msra.mxu0 %v3418
    %3443 = vmatprep.subr.mxu0 0.0
    %3444 = vmatpush1.msra.mxu0 %v3419
    %3445 = vmatprep.subr.mxu0 0.0
    %3446 = vmatpush1.msra.mxu0 %v3420
    %3447 = vmatprep.subr.mxu0 0.0
    %3448 = vmatpush1.msra.mxu0 %v3421
    %3449 = vmatprep.subr.mxu0 0.0
    %3450 = vmatpush1.msra.mxu0 %v3422
    %3451 = vmatprep.subr.mxu0 0.0
    %3452 = vmatpush1.msra.mxu0 %v3423
    %3453 = vmatprep.subr.mxu0 0.0
    %3454 = vmatpush1.msra.mxu0 %v3424
    %3455 = vmatprep.subr.mxu0 0.0
    %3456 = vmatpush1.msra.mxu0 %v3425
    %3457 = vmatprep.subr.mxu0 0.0
    %3458 = vmatpush1.msra.mxu0 %v3426
    %3459 = vmatprep.subr.mxu0 0.0
    %3460 = vmatpush1.msra.mxu0 %v3427
    %3461 = vmatprep.subr.mxu0 0.0
    %3462 = vmatpush1.msra.mxu0 %v3428
    %3463 = vmatprep.subr.mxu0 0.0
    %3464 = vmatpush1.msra.mxu0 0.0
    %3465 = vmatprep.subr.mxu0 0.0
    %3466 = vmatpush1.msra.mxu0 0.0
    %3467 = vmatprep.subr.mxu0 0.0
    %3468 = vmatpush1.msra.mxu0 0.0
    %3469 = vmatprep.subr.mxu0 0.0
    %3470 = vmatpush1.msra.mxu0 0.0
    %3471 = vmatprep.subr.mxu0 0.0
    %3472 = vmatpush1.msra.mxu0 0.0
    %3473 = vmatprep.subr.mxu0 0.0
    %3474 = vmatpush1.msra.mxu0 0.0
    %3475 = vmatprep.subr.mxu0 0.0
    %3476 = vmatpush1.msra.mxu0 0.0
    %3477 = vmatprep.subr.mxu0 0.0
    %3478 = vmatpush1.msra.mxu0 0.0
    %3479 = vmatprep.subr.mxu0 0.0
    %3480 = vmatpush1.msra.mxu0 0.0
    %3481 = vmatprep.subr.mxu0 0.0
    %3482 = vmatpush1.msra.mxu0 0.0
    %3483 = vmatprep.subr.mxu0 0.0
    %3484 = vmatpush1.msra.mxu0 0.0
    %3485 = vmatprep.subr.mxu0 0.0
    %3486 = vmatpush1.msra.mxu0 0.0
    %3487 = vmatprep.subr.mxu0 0.0
    %3488 = vmatpush1.msra.mxu0 0.0
    %3489 = vmatprep.subr.mxu0 0.0
    %3490 = vmatpush1.msra.mxu0 0.0
    %3491 = vmatprep.subr.mxu0 0.0
    %3492 = vmatpush1.msra.mxu0 0.0
    %3493 = vmatprep.subr.mxu0 0.0
    %3494 = vmatpush1.msra.mxu0 0.0
    %3495 = vmatprep.mubr.f32.mxu0 0.0
    %3496 = vmatmul.mubr.f32.gmra.mrb[0].mxu0 %v3430
    %v3497 = vpop.f32.mrb[0].mxu0
    %v3498 = vadd.f32 0.0, %v3497
    %v3499 = vpop.f32.mrb[0].mxu0
    %3500 = vdwg.mxu0
    %3501 = vmatprep.subr.mxu0 0.0
    %3502 = vmatpush1.msra.mxu0 %v3394
    %3503 = vmatprep.subr.mxu0 0.0
    %3504 = vmatpush1.msra.mxu0 %v3395
    %3505 = vmatprep.subr.mxu0 0.0
    %3506 = vmatpush1.msra.mxu0 %v3396
    %3507 = vmatprep.subr.mxu0 0.0
    %3508 = vmatpush1.msra.mxu0 %v3397
    %3509 = vmatprep.subr.mxu0 0.0
    %3510 = vmatpush1.msra.mxu0 %v3398
    %3511 = vmatprep.subr.mxu0 0.0
    %3512 = vmatpush1.msra.mxu0 %v3399
    %3513 = vmatprep.subr.mxu0 0.0
    %3514 = vmatpush1.msra.mxu0 %v3400
    %3515 = vmatprep.subr.mxu0 0.0
    %3516 = vmatpush1.msra.mxu0 %v3401
    %3517 = vmatprep.subr.mxu0 0.0
    %3518 = vmatpush1.msra.mxu0 %v3402
    %3519 = vmatprep.subr.mxu0 0.0
    %3520 = vmatpush1.msra.mxu0 %v3403
    %3521 = vmatprep.subr.mxu0 0.0
    %3522 = vmatpush1.msra.mxu0 %v3404
    %3523 = vmatprep.subr.mxu0 0.0
    %3524 = vmatpush1.msra.mxu0 %v3405
    %3525 = vmatprep.subr.mxu0 0.0
    %3526 = vmatpush1.msra.mxu0 %v3406
    %3527 = vmatprep.subr.mxu0 0.0
    %3528 = vmatpush1.msra.mxu0 %v3407
    %3529 = vmatprep.subr.mxu0 0.0
    %3530 = vmatpush1.msra.mxu0 %v3408
    %3531 = vmatprep.subr.mxu0 0.0
    %3532 = vmatpush1.msra.mxu0 %v3409
    %3533 = vmatprep.subr.mxu0 0.0
    %3534 = vmatpush1.msra.mxu0 0.0
    %3535 = vmatprep.subr.mxu0 0.0
    %3536 = vmatpush1.msra.mxu0 0.0
    %3537 = vmatprep.subr.mxu0 0.0
    %3538 = vmatpush1.msra.mxu0 0.0
    %3539 = vmatprep.subr.mxu0 0.0
    %3540 = vmatpush1.msra.mxu0 0.0
    %3541 = vmatprep.subr.mxu0 0.0
    %3542 = vmatpush1.msra.mxu0 0.0
    %3543 = vmatprep.subr.mxu0 0.0
    %3544 = vmatpush1.msra.mxu0 0.0
    %3545 = vmatprep.subr.mxu0 0.0
    %3546 = vmatpush1.msra.mxu0 0.0
    %3547 = vmatprep.subr.mxu0 0.0
    %3548 = vmatpush1.msra.mxu0 0.0
    %3549 = vmatprep.subr.mxu0 0.0
    %3550 = vmatpush1.msra.mxu0 0.0
    %3551 = vmatprep.subr.mxu0 0.0
    %3552 = vmatpush1.msra.mxu0 0.0
    %3553 = vmatprep.subr.mxu0 0.0
    %3554 = vmatpush1.msra.mxu0 0.0
    %3555 = vmatprep.subr.mxu0 0.0
    %3556 = vmatpush1.msra.mxu0 0.0
    %3557 = vmatprep.subr.mxu0 0.0
    %3558 = vmatpush1.msra.mxu0 0.0
    %3559 = vmatprep.subr.mxu0 0.0
    %3560 = vmatpush1.msra.mxu0 0.0
    %3561 = vmatprep.subr.mxu0 0.0
    %3562 = vmatpush1.msra.mxu0 0.0
    %3563 = vmatprep.subr.mxu0 0.0
    %3564 = vmatpush1.msra.mxu0 0.0
    %3565 = vmatprep.mubr.f32.mxu0 0.0
    %3566 = vmatmul.mubr.f32.gmra.mrb[0].mxu0 %v3410
    %v3567 = vpop.f32.mrb[0].mxu0
    %v3568 = vadd.f32 %v3498, %v3567
    %v3569 = vpop.f32.mrb[0].mxu0
    %3570 = vdwg.mxu0
    %s3571 = scalar_lea.vmem [#allocation4], 10
    %v3572 = vld [vmem:[%s3571] ss:$2 sm:$0x7]
    %3573 = vmatprep.subr.mxu0 0.0
    %3574 = vmatpush1.msra.mxu0 %v3413
    %3575 = vmatprep.subr.mxu0 0.0
    %3576 = vmatpush1.msra.mxu0 %v3414
    %3577 = vmatprep.subr.mxu0 0.0
    %3578 = vmatpush1.msra.mxu0 %v3415
    %3579 = vmatprep.subr.mxu0 0.0
    %3580 = vmatpush1.msra.mxu0 %v3416
    %3581 = vmatprep.subr.mxu0 0.0
    %3582 = vmatpush1.msra.mxu0 %v3417
    %3583 = vmatprep.subr.mxu0 0.0
    %3584 = vmatpush1.msra.mxu0 %v3418
    %3585 = vmatprep.subr.mxu0 0.0
    %3586 = vmatpush1.msra.mxu0 %v3419
    %3587 = vmatprep.subr.mxu0 0.0
    %3588 = vmatpush1.msra.mxu0 %v3420
    %3589 = vmatprep.subr.mxu0 0.0
    %3590 = vmatpush1.msra.mxu0 %v3421
    %3591 = vmatprep.subr.mxu0 0.0
    %3592 = vmatpush1.msra.mxu0 %v3422
    %3593 = vmatprep.subr.mxu0 0.0
    %3594 = vmatpush1.msra.mxu0 %v3423
    %3595 = vmatprep.subr.mxu0 0.0
    %3596 = vmatpush1.msra.mxu0 %v3424
    %3597 = vmatprep.subr.mxu0 0.0
    %3598 = vmatpush1.msra.mxu0 %v3425
    %3599 = vmatprep.subr.mxu0 0.0
    %3600 = vmatpush1.msra.mxu0 %v3426
    %3601 = vmatprep.subr.mxu0 0.0
    %3602 = vmatpush1.msra.mxu0 %v3427
    %3603 = vmatprep.subr.mxu0 0.0
    %3604 = vmatpush1.msra.mxu0 %v3428
    %3605 = vmatprep.subr.mxu0 0.0
    %3606 = vmatpush1.msra.mxu0 0.0
    %3607 = vmatprep.subr.mxu0 0.0
    %3608 = vmatpush1.msra.mxu0 0.0
    %3609 = vmatprep.subr.mxu0 0.0
    %3610 = vmatpush1.msra.mxu0 0.0
    %3611 = vmatprep.subr.mxu0 0.0
    %3612 = vmatpush1.msra.mxu0 0.0
    %3613 = vmatprep.subr.mxu0 0.0
    %3614 = vmatpush1.msra.mxu0 0.0
    %3615 = vmatprep.subr.mxu0 0.0
    %3616 = vmatpush1.msra.mxu0 0.0
    %3617 = vmatprep.subr.mxu0 0.0
    %3618 = vmatpush1.msra.mxu0 0.0
    %3619 = vmatprep.subr.mxu0 0.0
    %3620 = vmatpush1.msra.mxu0 0.0
    %3621 = vmatprep.subr.mxu0 0.0
    %3622 = vmatpush1.msra.mxu0 0.0
    %3623 = vmatprep.subr.mxu0 0.0
    %3624 = vmatpush1.msra.mxu0 0.0
    %3625 = vmatprep.subr.mxu0 0.0
    %3626 = vmatpush1.msra.mxu0 0.0
    %3627 = vmatprep.subr.mxu0 0.0
    %3628 = vmatpush1.msra.mxu0 0.0
    %3629 = vmatprep.subr.mxu0 0.0
    %3630 = vmatpush1.msra.mxu0 0.0
    %3631 = vmatprep.subr.mxu0 0.0
    %3632 = vmatpush1.msra.mxu0 0.0
    %3633 = vmatprep.subr.mxu0 0.0
    %3634 = vmatpush1.msra.mxu0 0.0
    %3635 = vmatprep.subr.mxu0 0.0
    %3636 = vmatpush1.msra.mxu0 0.0
    %3637 = vmatprep.mubr.f32.mxu0 0.0
    %3638 = vmatmul.mubr.f32.gmra.mrb[0].mxu0 %v3572
    %v3639 = vpop.f32.mrb[0].mxu0
    %v3640 = vadd.f32 0.0, %v3639
    %v3641 = vpop.f32.mrb[0].mxu0
    %3642 = vdwg.mxu0
    %3643 = vmatprep.subr.mxu0 0.0
    %3644 = vmatpush1.msra.mxu0 %v3394
    %3645 = vmatprep.subr.mxu0 0.0
    %3646 = vmatpush1.msra.mxu0 %v3395
    %3647 = vmatprep.subr.mxu0 0.0
    %3648 = vmatpush1.msra.mxu0 %v3396
    %3649 = vmatprep.subr.mxu0 0.0
    %3650 = vmatpush1.msra.mxu0 %v3397
    %3651 = vmatprep.subr.mxu0 0.0
    %3652 = vmatpush1.msra.mxu0 %v3398
    %3653 = vmatprep.subr.mxu0 0.0
    %3654 = vmatpush1.msra.mxu0 %v3399
    %3655 = vmatprep.subr.mxu0 0.0
    %3656 = vmatpush1.msra.mxu0 %v3400
    %3657 = vmatprep.subr.mxu0 0.0
    %3658 = vmatpush1.msra.mxu0 %v3401
    %3659 = vmatprep.subr.mxu0 0.0
    %3660 = vmatpush1.msra.mxu0 %v3402
    %3661 = vmatprep.subr.mxu0 0.0
    %3662 = vmatpush1.msra.mxu0 %v3403
    %3663 = vmatprep.subr.mxu0 0.0
    %3664 = vmatpush1.msra.mxu0 %v3404
    %3665 = vmatprep.subr.mxu0 0.0
    %3666 = vmatpush1.msra.mxu0 %v3405
    %3667 = vmatprep.subr.mxu0 0.0
    %3668 = vmatpush1.msra.mxu0 %v3406
    %3669 = vmatprep.subr.mxu0 0.0
    %3670 = vmatpush1.msra.mxu0 %v3407
    %3671 = vmatprep.subr.mxu0 0.0
    %3672 = vmatpush1.msra.mxu0 %v3408
    %3673 = vmatprep.subr.mxu0 0.0
    %3674 = vmatpush1.msra.mxu0 %v3409
    %3675 = vmatprep.subr.mxu0 0.0
    %3676 = vmatpush1.msra.mxu0 0.0
    %3677 = vmatprep.subr.mxu0 0.0
    %3678 = vmatpush1.msra.mxu0 0.0
    %3679 = vmatprep.subr.mxu0 0.0
    %3680 = vmatpush1.msra.mxu0 0.0
    %3681 = vmatprep.subr.mxu0 0.0
    %3682 = vmatpush1.msra.mxu0 0.0
    %3683 = vmatprep.subr.mxu0 0.0
    %3684 = vmatpush1.msra.mxu0 0.0
    %3685 = vmatprep.subr.mxu0 0.0
    %3686 = vmatpush1.msra.mxu0 0.0
    %3687 = vmatprep.subr.mxu0 0.0
    %3688 = vmatpush1.msra.mxu0 0.0
    %3689 = vmatprep.subr.mxu0 0.0
    %3690 = vmatpush1.msra.mxu0 0.0
    %3691 = vmatprep.subr.mxu0 0.0
    %3692 = vmatpush1.msra.mxu0 0.0
    %3693 = vmatprep.subr.mxu0 0.0
    %3694 = vmatpush1.msra.mxu0 0.0
    %3695 = vmatprep.subr.mxu0 0.0
    %3696 = vmatpush1.msra.mxu0 0.0
    %3697 = vmatprep.subr.mxu0 0.0
    %3698 = vmatpush1.msra.mxu0 0.0
    %3699 = vmatprep.subr.mxu0 0.0
    %3700 = vmatpush1.msra.mxu0 0.0
    %3701 = vmatprep.subr.mxu0 0.0
    %3702 = vmatpush1.msra.mxu0 0.0
    %3703 = vmatprep.subr.mxu0 0.0
    %3704 = vmatpush1.msra.mxu0 0.0
    %3705 = vmatprep.subr.mxu0 0.0
    %3706 = vmatpush1.msra.mxu0 0.0
    %3707 = vmatprep.mubr.f32.mxu0 0.0
    %3708 = vmatmul.mubr.f32.gmra.mrb[0].mxu0 %v3412
    %v3709 = vpop.f32.mrb[0].mxu0
    %v3710 = vadd.f32 %v3640, %v3709
    %v3711 = vpop.f32.mrb[0].mxu0
    %3712 = vdwg.mxu0
    %v3713 = vld [vmem:[#allocation5 + $0x880] sm:$0xff]
    %v3714 = vld [vmem:[#allocation5 + $0x888] sm:$0xff]
    %v3715 = vld [vmem:[#allocation5 + $0x890] sm:$0xff]
    %v3716 = vld [vmem:[#allocation5 + $0x898] sm:$0xff]
    %v3717 = vld [vmem:[#allocation5 + $0x8a0] sm:$0xff]
    %v3718 = vld [vmem:[#allocation5 + $0x8a8] sm:$0xff]
    %v3719 = vld [vmem:[#allocation5 + $0x8b0] sm:$0xff]
    %v3720 = vld [vmem:[#allocation5 + $0x8b8] sm:$0xff]
    %v3721 = vld [vmem:[#allocation5 + $0x8c0] sm:$0xff]
    %v3722 = vld [vmem:[#allocation5 + $0x8c8] sm:$0xff]
    %v3723 = vld [vmem:[#allocation5 + $0x8d0] sm:$0xff]
    %v3724 = vld [vmem:[#allocation5 + $0x8d8] sm:$0xff]
    %v3725 = vld [vmem:[#allocation5 + $0x8e0] sm:$0xff]
    %v3726 = vld [vmem:[#allocation5 + $0x8e8] sm:$0xff]
    %v3727 = vld [vmem:[#allocation5 + $0x8f0] sm:$0xff]
    %v3728 = vld [vmem:[#allocation5 + $0x8f8] sm:$0xff]
    %s3729 = scalar_lea.vmem [#allocation4], 2
    %v3730 = vld [vmem:[%s3729] ss:$2 sm:$0x7]
    %3731 = vmatprep.subr.mxu0 0.0
    %3732 = vmatpush1.msra.mxu0 %v3713
    %3733 = vmatprep.subr.mxu0 0.0
    %3734 = vmatpush1.msra.mxu0 %v3714
    %3735 = vmatprep.subr.mxu0 0.0
    %3736 = vmatpush1.msra.mxu0 %v3715
    %3737 = vmatprep.subr.mxu0 0.0
    %3738 = vmatpush1.msra.mxu0 %v3716
    %3739 = vmatprep.subr.mxu0 0.0
    %3740 = vmatpush1.msra.mxu0 %v3717
    %3741 = vmatprep.subr.mxu0 0.0
    %3742 = vmatpush1.msra.mxu0 %v3718
    %3743 = vmatprep.subr.mxu0 0.0
    %3744 = vmatpush1.msra.mxu0 %v3719
    %3745 = vmatprep.subr.mxu0 0.0
    %3746 = vmatpush1.msra.mxu0 %v3720
    %3747 = vmatprep.subr.mxu0 0.0
    %3748 = vmatpush1.msra.mxu0 %v3721
    %3749 = vmatprep.subr.mxu0 0.0
    %3750 = vmatpush1.msra.mxu0 %v3722
    %3751 = vmatprep.subr.mxu0 0.0
    %3752 = vmatpush1.msra.mxu0 %v3723
    %3753 = vmatprep.subr.mxu0 0.0
    %3754 = vmatpush1.msra.mxu0 %v3724
    %3755 = vmatprep.subr.mxu0 0.0
    %3756 = vmatpush1.msra.mxu0 %v3725
    %3757 = vmatprep.subr.mxu0 0.0
    %3758 = vmatpush1.msra.mxu0 %v3726
    %3759 = vmatprep.subr.mxu0 0.0
    %3760 = vmatpush1.msra.mxu0 %v3727
    %3761 = vmatprep.subr.mxu0 0.0
    %3762 = vmatpush1.msra.mxu0 %v3728
    %3763 = vmatprep.subr.mxu0 0.0
    %3764 = vmatpush1.msra.mxu0 0.0
    %3765 = vmatprep.subr.mxu0 0.0
    %3766 = vmatpush1.msra.mxu0 0.0
    %3767 = vmatprep.subr.mxu0 0.0
    %3768 = vmatpush1.msra.mxu0 0.0
    %3769 = vmatprep.subr.mxu0 0.0
    %3770 = vmatpush1.msra.mxu0 0.0
    %3771 = vmatprep.subr.mxu0 0.0
    %3772 = vmatpush1.msra.mxu0 0.0
    %3773 = vmatprep.subr.mxu0 0.0
    %3774 = vmatpush1.msra.mxu0 0.0
    %3775 = vmatprep.subr.mxu0 0.0
    %3776 = vmatpush1.msra.mxu0 0.0
    %3777 = vmatprep.subr.mxu0 0.0
    %3778 = vmatpush1.msra.mxu0 0.0
    %3779 = vmatprep.subr.mxu0 0.0
    %3780 = vmatpush1.msra.mxu0 0.0
    %3781 = vmatprep.subr.mxu0 0.0
    %3782 = vmatpush1.msra.mxu0 0.0
    %3783 = vmatprep.subr.mxu0 0.0
    %3784 = vmatpush1.msra.mxu0 0.0
    %3785 = vmatprep.subr.mxu0 0.0
    %3786 = vmatpush1.msra.mxu0 0.0
    %3787 = vmatprep.subr.mxu0 0.0
    %3788 = vmatpush1.msra.mxu0 0.0
    %3789 = vmatprep.subr.mxu0 0.0
    %3790 = vmatpush1.msra.mxu0 0.0
    %3791 = vmatprep.subr.mxu0 0.0
    %3792 = vmatpush1.msra.mxu0 0.0
    %3793 = vmatprep.subr.mxu0 0.0
    %3794 = vmatpush1.msra.mxu0 0.0
    %3795 = vmatprep.mubr.f32.mxu0 0.0
    %3796 = vmatmul.mubr.f32.gmra.mrb[0].mxu0 %v3730
    %v3797 = vpop.f32.mrb[0].mxu0
    %v3798 = vadd.f32 0.0, %v3797
    %v3799 = vpop.f32.mrb[0].mxu0
    %3800 = vdwg.mxu0
    %v3801 = vadd.f32 %v3568, %v3798
    %s3802 = scalar_lea.vmem [#allocation4], 11
    %v3803 = vld [vmem:[%s3802] ss:$2 sm:$0x7]
    %3804 = vmatprep.subr.mxu0 0.0
    %3805 = vmatpush1.msra.mxu0 %v3713
    %3806 = vmatprep.subr.mxu0 0.0
    %3807 = vmatpush1.msra.mxu0 %v3714
    %3808 = vmatprep.subr.mxu0 0.0
    %3809 = vmatpush1.msra.mxu0 %v3715
    %3810 = vmatprep.subr.mxu0 0.0
    %3811 = vmatpush1.msra.mxu0 %v3716
    %3812 = vmatprep.subr.mxu0 0.0
    %3813 = vmatpush1.msra.mxu0 %v3717
    %3814 = vmatprep.subr.mxu0 0.0
    %3815 = vmatpush1.msra.mxu0 %v3718
    %3816 = vmatprep.subr.mxu0 0.0
    %3817 = vmatpush1.msra.mxu0 %v3719
    %3818 = vmatprep.subr.mxu0 0.0
    %3819 = vmatpush1.msra.mxu0 %v3720
    %3820 = vmatprep.subr.mxu0 0.0
    %3821 = vmatpush1.msra.mxu0 %v3721
    %3822 = vmatprep.subr.mxu0 0.0
    %3823 = vmatpush1.msra.mxu0 %v3722
    %3824 = vmatprep.subr.mxu0 0.0
    %3825 = vmatpush1.msra.mxu0 %v3723
    %3826 = vmatprep.subr.mxu0 0.0
    %3827 = vmatpush1.msra.mxu0 %v3724
    %3828 = vmatprep.subr.mxu0 0.0
    %3829 = vmatpush1.msra.mxu0 %v3725
    %3830 = vmatprep.subr.mxu0 0.0
    %3831 = vmatpush1.msra.mxu0 %v3726
    %3832 = vmatprep.subr.mxu0 0.0
    %3833 = vmatpush1.msra.mxu0 %v3727
    %3834 = vmatprep.subr.mxu0 0.0
    %3835 = vmatpush1.msra.mxu0 %v3728
    %3836 = vmatprep.subr.mxu0 0.0
    %3837 = vmatpush1.msra.mxu0 0.0
    %3838 = vmatprep.subr.mxu0 0.0
    %3839 = vmatpush1.msra.mxu0 0.0
    %3840 = vmatprep.subr.mxu0 0.0
    %3841 = vmatpush1.msra.mxu0 0.0
    %3842 = vmatprep.subr.mxu0 0.0
    %3843 = vmatpush1.msra.mxu0 0.0
    %3844 = vmatprep.subr.mxu0 0.0
    %3845 = vmatpush1.msra.mxu0 0.0
    %3846 = vmatprep.subr.mxu0 0.0
    %3847 = vmatpush1.msra.mxu0 0.0
    %3848 = vmatprep.subr.mxu0 0.0
    %3849 = vmatpush1.msra.mxu0 0.0
    %3850 = vmatprep.subr.mxu0 0.0
    %3851 = vmatpush1.msra.mxu0 0.0
    %3852 = vmatprep.subr.mxu0 0.0
    %3853 = vmatpush1.msra.mxu0 0.0
    %3854 = vmatprep.subr.mxu0 0.0
    %3855 = vmatpush1.msra.mxu0 0.0
    %3856 = vmatprep.subr.mxu0 0.0
    %3857 = vmatpush1.msra.mxu0 0.0
    %3858 = vmatprep.subr.mxu0 0.0
    %3859 = vmatpush1.msra.mxu0 0.0
    %3860 = vmatprep.subr.mxu0 0.0
    %3861 = vmatpush1.msra.mxu0 0.0
    %3862 = vmatprep.subr.mxu0 0.0
    %3863 = vmatpush1.msra.mxu0 0.0
    %3864 = vmatprep.subr.mxu0 0.0
    %3865 = vmatpush1.msra.mxu0 0.0
    %3866 = vmatprep.subr.mxu0 0.0
    %3867 = vmatpush1.msra.mxu0 0.0
    %3868 = vmatprep.mubr.f32.mxu0 0.0
    %3869 = vmatmul.mubr.f32.gmra.mrb[0].mxu0 %v3803
    %v3870 = vpop.f32.mrb[0].mxu0
    %v3871 = vadd.f32 0.0, %v3870
    %v3872 = vpop.f32.mrb[0].mxu0
    %3873 = vdwg.mxu0
    %v3874 = vadd.f32 %v3710, %v3871
    %v3875 = vld [vmem:[#allocation5 + $0x900] sm:$0xff]
    %v3876 = vld [vmem:[#allocation5 + $0x908] sm:$0xff]
    %v3877 = vld [vmem:[#allocation5 + $0x910] sm:$0xff]
    %v3878 = vld [vmem:[#allocation5 + $0x918] sm:$0xff]
    %v3879 = vld [vmem:[#allocation5 + $0x920] sm:$0xff]
    %v3880 = vld [vmem:[#allocation5 + $0x928] sm:$0xff]
    %v3881 = vld [vmem:[#allocation5 + $0x930] sm:$0xff]
    %v3882 = vld [vmem:[#allocation5 + $0x938] sm:$0xff]
    %v3883 = vld [vmem:[#allocation5 + $0x940] sm:$0xff]
    %v3884 = vld [vmem:[#allocation5 + $0x948] sm:$0xff]
    %v3885 = vld [vmem:[#allocation5 + $0x950] sm:$0xff]
    %v3886 = vld [vmem:[#allocation5 + $0x958] sm:$0xff]
    %v3887 = vld [vmem:[#allocation5 + $0x960] sm:$0xff]
    %v3888 = vld [vmem:[#allocation5 + $0x968] sm:$0xff]
    %v3889 = vld [vmem:[#allocation5 + $0x970] sm:$0xff]
    %v3890 = vld [vmem:[#allocation5 + $0x978] sm:$0xff]
    %s3891 = scalar_lea.vmem [#allocation4], 3
    %v3892 = vld [vmem:[%s3891] ss:$2 sm:$0x7]
    %3893 = vmatprep.subr.mxu0 0.0
    %3894 = vmatpush1.msra.mxu0 %v3875
    %3895 = vmatprep.subr.mxu0 0.0
    %3896 = vmatpush1.msra.mxu0 %v3876
    %3897 = vmatprep.subr.mxu0 0.0
    %3898 = vmatpush1.msra.mxu0 %v3877
    %3899 = vmatprep.subr.mxu0 0.0
    %3900 = vmatpush1.msra.mxu0 %v3878
    %3901 = vmatprep.subr.mxu0 0.0
    %3902 = vmatpush1.msra.mxu0 %v3879
    %3903 = vmatprep.subr.mxu0 0.0
    %3904 = vmatpush1.msra.mxu0 %v3880
    %3905 = vmatprep.subr.mxu0 0.0
    %3906 = vmatpush1.msra.mxu0 %v3881
    %3907 = vmatprep.subr.mxu0 0.0
    %3908 = vmatpush1.msra.mxu0 %v3882
    %3909 = vmatprep.subr.mxu0 0.0
    %3910 = vmatpush1.msra.mxu0 %v3883
    %3911 = vmatprep.subr.mxu0 0.0
    %3912 = vmatpush1.msra.mxu0 %v3884
    %3913 = vmatprep.subr.mxu0 0.0
    %3914 = vmatpush1.msra.mxu0 %v3885
    %3915 = vmatprep.subr.mxu0 0.0
    %3916 = vmatpush1.msra.mxu0 %v3886
    %3917 = vmatprep.subr.mxu0 0.0
    %3918 = vmatpush1.msra.mxu0 %v3887
    %3919 = vmatprep.subr.mxu0 0.0
    %3920 = vmatpush1.msra.mxu0 %v3888
    %3921 = vmatprep.subr.mxu0 0.0
    %3922 = vmatpush1.msra.mxu0 %v3889
    %3923 = vmatprep.subr.mxu0 0.0
    %3924 = vmatpush1.msra.mxu0 %v3890
    %3925 = vmatprep.subr.mxu0 0.0
    %3926 = vmatpush1.msra.mxu0 0.0
    %3927 = vmatprep.subr.mxu0 0.0
    %3928 = vmatpush1.msra.mxu0 0.0
    %3929 = vmatprep.subr.mxu0 0.0
    %3930 = vmatpush1.msra.mxu0 0.0
    %3931 = vmatprep.subr.mxu0 0.0
    %3932 = vmatpush1.msra.mxu0 0.0
    %3933 = vmatprep.subr.mxu0 0.0
    %3934 = vmatpush1.msra.mxu0 0.0
    %3935 = vmatprep.subr.mxu0 0.0
    %3936 = vmatpush1.msra.mxu0 0.0
    %3937 = vmatprep.subr.mxu0 0.0
    %3938 = vmatpush1.msra.mxu0 0.0
    %3939 = vmatprep.subr.mxu0 0.0
    %3940 = vmatpush1.msra.mxu0 0.0
    %3941 = vmatprep.subr.mxu0 0.0
    %3942 = vmatpush1.msra.mxu0 0.0
    %3943 = vmatprep.subr.mxu0 0.0
    %3944 = vmatpush1.msra.mxu0 0.0
    %3945 = vmatprep.subr.mxu0 0.0
    %3946 = vmatpush1.msra.mxu0 0.0
    %3947 = vmatprep.subr.mxu0 0.0
    %3948 = vmatpush1.msra.mxu0 0.0
    %3949 = vmatprep.subr.mxu0 0.0
    %3950 = vmatpush1.msra.mxu0 0.0
    %3951 = vmatprep.subr.mxu0 0.0
    %3952 = vmatpush1.msra.mxu0 0.0
    %3953 = vmatprep.subr.mxu0 0.0
    %3954 = vmatpush1.msra.mxu0 0.0
    %3955 = vmatprep.subr.mxu0 0.0
    %3956 = vmatpush1.msra.mxu0 0.0
    %3957 = vmatprep.mubr.f32.mxu0 0.0
    %3958 = vmatmul.mubr.f32.gmra.mrb[0].mxu0 %v3892
    %v3959 = vpop.f32.mrb[0].mxu0
    %v3960 = vadd.f32 0.0, %v3959
    %v3961 = vpop.f32.mrb[0].mxu0
    %3962 = vdwg.mxu0
    %v3963 = vadd.f32 %v3801, %v3960
    %s3964 = scalar_lea.vmem [#allocation4], 12
    %v3965 = vld [vmem:[%s3964] ss:$2 sm:$0x7]
    %3966 = vmatprep.subr.mxu0 0.0
    %3967 = vmatpush1.msra.mxu0 %v3875
    %3968 = vmatprep.subr.mxu0 0.0
    %3969 = vmatpush1.msra.mxu0 %v3876
    %3970 = vmatprep.subr.mxu0 0.0
    %3971 = vmatpush1.msra.mxu0 %v3877
    %3972 = vmatprep.subr.mxu0 0.0
    %3973 = vmatpush1.msra.mxu0 %v3878
    %3974 = vmatprep.subr.mxu0 0.0
    %3975 = vmatpush1.msra.mxu0 %v3879
    %3976 = vmatprep.subr.mxu0 0.0
    %3977 = vmatpush1.msra.mxu0 %v3880
    %3978 = vmatprep.subr.mxu0 0.0
    %3979 = vmatpush1.msra.mxu0 %v3881
    %3980 = vmatprep.subr.mxu0 0.0
    %3981 = vmatpush1.msra.mxu0 %v3882
    %3982 = vmatprep.subr.mxu0 0.0
    %3983 = vmatpush1.msra.mxu0 %v3883
    %3984 = vmatprep.subr.mxu0 0.0
    %3985 = vmatpush1.msra.mxu0 %v3884
    %3986 = vmatprep.subr.mxu0 0.0
    %3987 = vmatpush1.msra.mxu0 %v3885
    %3988 = vmatprep.subr.mxu0 0.0
    %3989 = vmatpush1.msra.mxu0 %v3886
    %3990 = vmatprep.subr.mxu0 0.0
    %3991 = vmatpush1.msra.mxu0 %v3887
    %3992 = vmatprep.subr.mxu0 0.0
    %3993 = vmatpush1.msra.mxu0 %v3888
    %3994 = vmatprep.subr.mxu0 0.0
    %3995 = vmatpush1.msra.mxu0 %v3889
    %3996 = vmatprep.subr.mxu0 0.0
    %3997 = vmatpush1.msra.mxu0 %v3890
    %3998 = vmatprep.subr.mxu0 0.0
    %3999 = vmatpush1.msra.mxu0 0.0
    %4000 = vmatprep.subr.mxu0 0.0
    %4001 = vmatpush1.msra.mxu0 0.0
    %4002 = vmatprep.subr.mxu0 0.0
    %4003 = vmatpush1.msra.mxu0 0.0
    %4004 = vmatprep.subr.mxu0 0.0
    %4005 = vmatpush1.msra.mxu0 0.0
    %4006 = vmatprep.subr.mxu0 0.0
    %4007 = vmatpush1.msra.mxu0 0.0
    %4008 = vmatprep.subr.mxu0 0.0
    %4009 = vmatpush1.msra.mxu0 0.0
    %4010 = vmatprep.subr.mxu0 0.0
    %4011 = vmatpush1.msra.mxu0 0.0
    %4012 = vmatprep.subr.mxu0 0.0
    %4013 = vmatpush1.msra.mxu0 0.0
    %4014 = vmatprep.subr.mxu0 0.0
    %4015 = vmatpush1.msra.mxu0 0.0
    %4016 = vmatprep.subr.mxu0 0.0
    %4017 = vmatpush1.msra.mxu0 0.0
    %4018 = vmatprep.subr.mxu0 0.0
    %4019 = vmatpush1.msra.mxu0 0.0
    %4020 = vmatprep.subr.mxu0 0.0
    %4021 = vmatpush1.msra.mxu0 0.0
    %4022 = vmatprep.subr.mxu0 0.0
    %4023 = vmatpush1.msra.mxu0 0.0
    %4024 = vmatprep.subr.mxu0 0.0
    %4025 = vmatpush1.msra.mxu0 0.0
    %4026 = vmatprep.subr.mxu0 0.0
    %4027 = vmatpush1.msra.mxu0 0.0
    %4028 = vmatprep.subr.mxu0 0.0
    %4029 = vmatpush1.msra.mxu0 0.0
    %4030 = vmatprep.mubr.f32.mxu0 0.0
    %4031 = vmatmul.mubr.f32.gmra.mrb[0].mxu0 %v3965
    %v4032 = vpop.f32.mrb[0].mxu0
    %v4033 = vadd.f32 0.0, %v4032
    %v4034 = vpop.f32.mrb[0].mxu0
    %4035 = vdwg.mxu0
    %v4036 = vadd.f32 %v3874, %v4033
    %v4037 = vld [vmem:[#allocation5 + $0x980] sm:$0xff]
    %v4038 = vld [vmem:[#allocation5 + $0x988] sm:$0xff]
    %v4039 = vld [vmem:[#allocation5 + $0x990] sm:$0xff]
    %v4040 = vld [vmem:[#allocation5 + $0x998] sm:$0xff]
    %v4041 = vld [vmem:[#allocation5 + $0x9a0] sm:$0xff]
    %v4042 = vld [vmem:[#allocation5 + $0x9a8] sm:$0xff]
    %v4043 = vld [vmem:[#allocation5 + $0x9b0] sm:$0xff]
    %v4044 = vld [vmem:[#allocation5 + $0x9b8] sm:$0xff]
    %v4045 = vld [vmem:[#allocation5 + $0x9c0] sm:$0xff]
    %v4046 = vld [vmem:[#allocation5 + $0x9c8] sm:$0xff]
    %v4047 = vld [vmem:[#allocation5 + $0x9d0] sm:$0xff]
    %v4048 = vld [vmem:[#allocation5 + $0x9d8] sm:$0xff]
    %v4049 = vld [vmem:[#allocation5 + $0x9e0] sm:$0xff]
    %v4050 = vld [vmem:[#allocation5 + $0x9e8] sm:$0xff]
    %v4051 = vld [vmem:[#allocation5 + $0x9f0] sm:$0xff]
    %v4052 = vld [vmem:[#allocation5 + $0x9f8] sm:$0xff]
    %s4053 = scalar_lea.vmem [#allocation4], 4
    %v4054 = vld [vmem:[%s4053] ss:$2 sm:$0x7]
    %4055 = vmatprep.subr.mxu0 0.0
    %4056 = vmatpush1.msra.mxu0 %v4037
    %4057 = vmatprep.subr.mxu0 0.0
    %4058 = vmatpush1.msra.mxu0 %v4038
    %4059 = vmatprep.subr.mxu0 0.0
    %4060 = vmatpush1.msra.mxu0 %v4039
    %4061 = vmatprep.subr.mxu0 0.0
    %4062 = vmatpush1.msra.mxu0 %v4040
    %4063 = vmatprep.subr.mxu0 0.0
    %4064 = vmatpush1.msra.mxu0 %v4041
    %4065 = vmatprep.subr.mxu0 0.0
    %4066 = vmatpush1.msra.mxu0 %v4042
    %4067 = vmatprep.subr.mxu0 0.0
    %4068 = vmatpush1.msra.mxu0 %v4043
    %4069 = vmatprep.subr.mxu0 0.0
    %4070 = vmatpush1.msra.mxu0 %v4044
    %4071 = vmatprep.subr.mxu0 0.0
    %4072 = vmatpush1.msra.mxu0 %v4045
    %4073 = vmatprep.subr.mxu0 0.0
    %4074 = vmatpush1.msra.mxu0 %v4046
    %4075 = vmatprep.subr.mxu0 0.0
    %4076 = vmatpush1.msra.mxu0 %v4047
    %4077 = vmatprep.subr.mxu0 0.0
    %4078 = vmatpush1.msra.mxu0 %v4048
    %4079 = vmatprep.subr.mxu0 0.0
    %4080 = vmatpush1.msra.mxu0 %v4049
    %4081 = vmatprep.subr.mxu0 0.0
    %4082 = vmatpush1.msra.mxu0 %v4050
    %4083 = vmatprep.subr.mxu0 0.0
    %4084 = vmatpush1.msra.mxu0 %v4051
    %4085 = vmatprep.subr.mxu0 0.0
    %4086 = vmatpush1.msra.mxu0 %v4052
    %4087 = vmatprep.subr.mxu0 0.0
    %4088 = vmatpush1.msra.mxu0 0.0
    %4089 = vmatprep.subr.mxu0 0.0
    %4090 = vmatpush1.msra.mxu0 0.0
    %4091 = vmatprep.subr.mxu0 0.0
    %4092 = vmatpush1.msra.mxu0 0.0
    %4093 = vmatprep.subr.mxu0 0.0
    %4094 = vmatpush1.msra.mxu0 0.0
    %4095 = vmatprep.subr.mxu0 0.0
    %4096 = vmatpush1.msra.mxu0 0.0
    %4097 = vmatprep.subr.mxu0 0.0
    %4098 = vmatpush1.msra.mxu0 0.0
    %4099 = vmatprep.subr.mxu0 0.0
    %4100 = vmatpush1.msra.mxu0 0.0
    %4101 = vmatprep.subr.mxu0 0.0
    %4102 = vmatpush1.msra.mxu0 0.0
    %4103 = vmatprep.subr.mxu0 0.0
    %4104 = vmatpush1.msra.mxu0 0.0
    %4105 = vmatprep.subr.mxu0 0.0
    %4106 = vmatpush1.msra.mxu0 0.0
    %4107 = vmatprep.subr.mxu0 0.0
    %4108 = vmatpush1.msra.mxu0 0.0
    %4109 = vmatprep.subr.mxu0 0.0
    %4110 = vmatpush1.msra.mxu0 0.0
    %4111 = vmatprep.subr.mxu0 0.0
    %4112 = vmatpush1.msra.mxu0 0.0
    %4113 = vmatprep.subr.mxu0 0.0
    %4114 = vmatpush1.msra.mxu0 0.0
    %4115 = vmatprep.subr.mxu0 0.0
    %4116 = vmatpush1.msra.mxu0 0.0
    %4117 = vmatprep.subr.mxu0 0.0
    %4118 = vmatpush1.msra.mxu0 0.0
    %4119 = vmatprep.mubr.f32.mxu0 0.0
    %4120 = vmatmul.mubr.f32.gmra.mrb[0].mxu0 %v4054
    %v4121 = vpop.f32.mrb[0].mxu0
    %v4122 = vadd.f32 0.0, %v4121
    %v4123 = vpop.f32.mrb[0].mxu0
    %4124 = vdwg.mxu0
    %v4125 = vadd.f32 %v3963, %v4122
    %s4126 = scalar_lea.vmem [#allocation4], 13
    %v4127 = vld [vmem:[%s4126] ss:$2 sm:$0x7]
    %4128 = vmatprep.subr.mxu0 0.0
    %4129 = vmatpush1.msra.mxu0 %v4037
    %4130 = vmatprep.subr.mxu0 0.0
    %4131 = vmatpush1.msra.mxu0 %v4038
    %4132 = vmatprep.subr.mxu0 0.0
    %4133 = vmatpush1.msra.mxu0 %v4039
    %4134 = vmatprep.subr.mxu0 0.0
    %4135 = vmatpush1.msra.mxu0 %v4040
    %4136 = vmatprep.subr.mxu0 0.0
    %4137 = vmatpush1.msra.mxu0 %v4041
    %4138 = vmatprep.subr.mxu0 0.0
    %4139 = vmatpush1.msra.mxu0 %v4042
    %4140 = vmatprep.subr.mxu0 0.0
    %4141 = vmatpush1.msra.mxu0 %v4043
    %4142 = vmatprep.subr.mxu0 0.0
    %4143 = vmatpush1.msra.mxu0 %v4044
    %4144 = vmatprep.subr.mxu0 0.0
    %4145 = vmatpush1.msra.mxu0 %v4045
    %4146 = vmatprep.subr.mxu0 0.0
    %4147 = vmatpush1.msra.mxu0 %v4046
    %4148 = vmatprep.subr.mxu0 0.0
    %4149 = vmatpush1.msra.mxu0 %v4047
    %4150 = vmatprep.subr.mxu0 0.0
    %4151 = vmatpush1.msra.mxu0 %v4048
    %4152 = vmatprep.subr.mxu0 0.0
    %4153 = vmatpush1.msra.mxu0 %v4049
    %4154 = vmatprep.subr.mxu0 0.0
    %4155 = vmatpush1.msra.mxu0 %v4050
    %4156 = vmatprep.subr.mxu0 0.0
    %4157 = vmatpush1.msra.mxu0 %v4051
    %4158 = vmatprep.subr.mxu0 0.0
    %4159 = vmatpush1.msra.mxu0 %v4052
    %4160 = vmatprep.subr.mxu0 0.0
    %4161 = vmatpush1.msra.mxu0 0.0
    %4162 = vmatprep.subr.mxu0 0.0
    %4163 = vmatpush1.msra.mxu0 0.0
    %4164 = vmatprep.subr.mxu0 0.0
    %4165 = vmatpush1.msra.mxu0 0.0
    %4166 = vmatprep.subr.mxu0 0.0
    %4167 = vmatpush1.msra.mxu0 0.0
    %4168 = vmatprep.subr.mxu0 0.0
    %4169 = vmatpush1.msra.mxu0 0.0
    %4170 = vmatprep.subr.mxu0 0.0
    %4171 = vmatpush1.msra.mxu0 0.0
    %4172 = vmatprep.subr.mxu0 0.0
    %4173 = vmatpush1.msra.mxu0 0.0
    %4174 = vmatprep.subr.mxu0 0.0
    %4175 = vmatpush1.msra.mxu0 0.0
    %4176 = vmatprep.subr.mxu0 0.0
    %4177 = vmatpush1.msra.mxu0 0.0
    %4178 = vmatprep.subr.mxu0 0.0
    %4179 = vmatpush1.msra.mxu0 0.0
    %4180 = vmatprep.subr.mxu0 0.0
    %4181 = vmatpush1.msra.mxu0 0.0
    %4182 = vmatprep.subr.mxu0 0.0
    %4183 = vmatpush1.msra.mxu0 0.0
    %4184 = vmatprep.subr.mxu0 0.0
    %4185 = vmatpush1.msra.mxu0 0.0
    %4186 = vmatprep.subr.mxu0 0.0
    %4187 = vmatpush1.msra.mxu0 0.0
    %4188 = vmatprep.subr.mxu0 0.0
    %4189 = vmatpush1.msra.mxu0 0.0
    %4190 = vmatprep.subr.mxu0 0.0
    %4191 = vmatpush1.msra.mxu0 0.0
    %4192 = vmatprep.mubr.f32.mxu0 0.0
    %4193 = vmatmul.mubr.f32.gmra.mrb[0].mxu0 %v4127
    %v4194 = vpop.f32.mrb[0].mxu0
    %v4195 = vadd.f32 0.0, %v4194
    %v4196 = vpop.f32.mrb[0].mxu0
    %4197 = vdwg.mxu0
    %v4198 = vadd.f32 %v4036, %v4195
    %vm4199 = vcmask 1042432
    %v4200 = vsel %vm4199, %v4125, 0.0
    %v4201 = vrot.slane %v4200, 4
    %v4202 = vadd.f32 %v4200, %v4201
    %v4203 = vrot.slane %v4202, 2
    %v4204 = vadd.f32 %v4202, %v4203
    %v4205 = vrot.slane %v4204, 1
    %v4206 = vadd.f32 %v4204, %v4205
    %v4207 = vmul.f32 %v4125, %v4125
    %v4208 = vsel %vm4199, %v4207, 0.0
    %v4209 = vrot.slane %v4208, 4
    %v4210 = vadd.f32 %v4208, %v4209
    %v4211 = vrot.slane %v4210, 2
    %v4212 = vadd.f32 %v4210, %v4211
    %v4213 = vrot.slane %v4212, 1
    %v4214 = vadd.f32 %v4212, %v4213
    %v4215 = vsel %vm4199, %v4198, 0.0
    %v4216 = vrot.slane %v4215, 4
    %v4217 = vadd.f32 %v4215, %v4216
    %v4218 = vrot.slane %v4217, 2
    %v4219 = vadd.f32 %v4217, %v4218
    %v4220 = vrot.slane %v4219, 1
    %v4221 = vadd.f32 %v4219, %v4220
    %v4222 = vadd.f32 %v4206, %v4221
    %v4223 = vmul.f32 %v4198, %v4198
    %v4224 = vsel %vm4199, %v4223, 0.0
    %v4225 = vrot.slane %v4224, 4
    %v4226 = vadd.f32 %v4224, %v4225
    %v4227 = vrot.slane %v4226, 2
    %v4228 = vadd.f32 %v4226, %v4227
    %v4229 = vrot.slane %v4228, 1
    %v4230 = vadd.f32 %v4228, %v4229
    %v4231 = vadd.f32 %v4214, %v4230
    %v4232 = vmul.f32 %v4222, 0.16666667
    %v4233 = vmul.f32 %v4231, 0.16666667
    %v4234 = vmul.f32 %v4232, %v4232
    %v4235 = vsub.f32 %v4233, %v4234
    %v4236 = vld [vmem:[#allocation7 + $0x6] sm:$0x1]
    %v4237 = vld [vmem:[#allocation7 + $0x7] sm:$0x1]
    %v4238 = vadd.f32 %v4235, 1e-05
    %v4239 = vrsqrt.pop %v4238
    %v4240 = vmul.f32 %v4236, %v4239
    %v4241 = vmul.f32 %v4232, %v4240
    %v4242 = vsub.f32 %v4237, %v4241
    %v4243 = vlaneseq
    %v4244 = vshrl.u32 %v4243, 7
    %v4245 = vsub.s32 0, %v4244
    %v4246 = vrot.slane %v4240, %v4245
    %v4247 = vmul.f32 %v4125, %v4246
    %v4248 = vlaneseq
    %v4249 = vshrl.u32 %v4248, 7
    %v4250 = vsub.s32 0, %v4249
    %v4251 = vrot.slane %v4242, %v4250
    %v4252 = vadd.f32 %v4247, %v4251
    %vm4253 = vcmp.ge.f32.partialorder %v4252, 0.0
    %v4254 = vmul.f32 %v4252, 0.1
    %v4255 = vsel %vm4253, %v4252, %v4254
    %4256 = vst [vmem:[%s3] sm:$0x7] %v4255
    %v4257 = vmul.f32 %v4198, %v4246
    %v4258 = vadd.f32 %v4257, %v4251
    %vm4259 = vcmp.ge.f32.partialorder %v4258, 0.0
    %v4260 = vmul.f32 %v4258, 0.1
    %v4261 = vsel %vm4259, %v4258, %v4260
    %4262 = vst [vmem:[%s3 + $0x3] sm:$0x7] %v4261
    // Predicated region
    $region22: #{encoder_forward.1} parent=1 // pred_check
      _
    $region23: #{encoder_forward.1} parent=1 // pred_check_branch
      %4264 = sbr.rel (0) target = $region25
    $region24: #{encoder_forward.1} parent=1 // pred_region
      _
    $region25: #{encoder_forward.1} parent=1 // pred_fallthru
      _
    // Predicated region
    $region26: #{encoder_forward.1} parent=1 // pred_check
      _
    $region27: #{encoder_forward.1} parent=1 // pred_check_branch
      %4266 = sbr.rel (0) target = $region29
    $region28: #{encoder_forward.1} parent=1 // pred_region
      _
    $region29: #{encoder_forward.1} parent=1 // pred_fallthru
      _
    %4267 = vsyncpa [#allocation6], 1
    %4268 = vsyncpa [#allocation8], 1

</llo_original>
